<compile_context>
chip_gen: v7x
topology: tpu7x:2x2x1
jax: 0.10.0
libtpu: 0.0.40
codegen_flags: <defaults>
</compile_context>

<pallas_src>
import functools

import jax
import jax.numpy as jnp
import numpy as np
from jax.experimental import pallas as pl
from jax.experimental.pallas import tpu as pltpu

_TAPS = tuple((dy, dx) for dy in range(3) for dx in range(3))


def _mblock1_kernel(x_ref, w1_ref, s1_ref, b1_ref, w2_ref, s2_ref, b2_ref,
                    o_ref, hid_ref, t1_ref, t2_ref, *, h, w, c1, c2):
    """Fused MBLOCK1 forward for one image.

    x_ref  : [H+2, W+2, C1]   zero-padded input tile (f32)
    w1_ref : [9*C1, C2]       conv1 weight, taps packed into K (bf16)
    s1_ref : [1, C2] / b1_ref : [1, C2]   folded BN1 scale / shift (f32)
    w2_ref : [9*C2, C1]       conv2 weight, taps packed into K (bf16)
    s2_ref : [1, C1] / b2_ref : [1, C1]   folded BN2 scale / shift (f32)
    o_ref  : [H*W, C1]        output (f32)
    hid_ref: [H+2, W+16, C2]  f32 scratch: hidden activation with zero halo
                              (interior lives at rows [1:H+1], cols [8:8+W])
    t1_ref : [H*W, 9*C1]      bf16 scratch: packed conv1 taps (in-kernel im2col)
    t2_ref : [H*W, 9*C2]      bf16 scratch: packed conv2 taps (in-kernel im2col)
    """
    p = h * w

    # Zero the hidden scratch so its halo ring provides "SAME" padding for conv2.
    hid_ref[...] = jnp.zeros(hid_ref.shape, hid_ref.dtype)

    # ---------------- conv1 + BN1 + ReLU ----------------
    # In-kernel im2col from the halo tile: pack the 9 taps along the K axis.
    for t, (dy, dx) in enumerate(_TAPS):
        patch = x_ref[dy:dy + h, dx:dx + w, :]                     # (h, w, c1) f32
        t1_ref[:, t * c1:(t + 1) * c1] = (
            patch.reshape(p, c1).astype(jnp.bfloat16))
    acc1 = jnp.dot(t1_ref[...], w1_ref[...],                       # [p,9c1]@[9c1,c2]
                   preferred_element_type=jnp.float32)
    hid = jnp.maximum(acc1 * s1_ref[...] + b1_ref[...], 0.0)       # f32 epilogue
    hid_ref[1:1 + h, 8:8 + w, :] = hid.reshape(h, w, c2)           # aligned store

    # ---------------- conv2 + BN2 + residual + ReLU ----------------
    for t, (dy, dx) in enumerate(_TAPS):
        patch = hid_ref[dy:dy + h, 7 + dx:7 + dx + w, :]           # (h, w, c2) f32
        t2_ref[:, t * c2:(t + 1) * c2] = (
            patch.reshape(p, c2).astype(jnp.bfloat16))
    acc2 = jnp.dot(t2_ref[...], w2_ref[...],                       # [p,9c2]@[9c2,c1]
                   preferred_element_type=jnp.float32)
    res = x_ref[1:1 + h, 1:1 + w, :].reshape(p, c1)                # exact f32 residual
    o_ref[...] = jnp.maximum(acc2 * s2_ref[...] + b2_ref[...] + res, 0.0)


def mblock1_pallas(x_nhwc, w1p, scale1, shift1, w2p, scale2, shift2):
    n, h, w, c1 = x_nhwc.shape
    c2 = w1p.shape[-1]
    p = h * w
    # Keep in-kernel reshapes tile-aligned (f32 sublane tile = 8).
    assert w % 8 == 0 and p % 8 == 0

    xpad = jnp.pad(x_nhwc, ((0, 0), (1, 1), (1, 1), (0, 0)))       # SAME halo

    kernel = functools.partial(_mblock1_kernel, h=h, w=w, c1=c1, c2=c2)
    out = pl.pallas_call(
        kernel,
        out_shape=jax.ShapeDtypeStruct((n, p, c1), jnp.float32),
        grid_spec=pltpu.PrefetchScalarGridSpec(
            num_scalar_prefetch=0,
            grid=(n,),
            in_specs=[
                pl.BlockSpec((None, h + 2, w + 2, c1), lambda i: (i, 0, 0, 0)),
                pl.BlockSpec((9 * c1, c2), lambda i: (0, 0)),
                pl.BlockSpec((1, c2), lambda i: (0, 0)),
                pl.BlockSpec((1, c2), lambda i: (0, 0)),
                pl.BlockSpec((9 * c2, c1), lambda i: (0, 0)),
                pl.BlockSpec((1, c1), lambda i: (0, 0)),
                pl.BlockSpec((1, c1), lambda i: (0, 0)),
            ],
            out_specs=pl.BlockSpec((None, p, c1), lambda i: (i, 0, 0)),
            scratch_shapes=[
                pltpu.VMEM((h + 2, w + 16, c2), jnp.float32),      # hid + zero halo
                pltpu.VMEM((p, 9 * c1), jnp.bfloat16),             # packed taps conv1
                pltpu.VMEM((p, 9 * c2), jnp.bfloat16),             # packed taps conv2
            ]),
        compiler_params=pltpu.CompilerParams(
            dimension_semantics=("parallel",)),
    )(xpad, w1p, scale1.reshape(1, c2), shift1.reshape(1, c2),
      w2p, scale2.reshape(1, c1), shift2.reshape(1, c1))
    return out


@jax.jit
def mblock1_forward(x_nchw, params):
    x = jnp.transpose(x_nchw, (0, 2, 3, 1)).astype(jnp.float32)    # NCHW -> NHWC
    n, h, w, c1 = x.shape
    out = mblock1_pallas(x, params["w1p"], params["scale1"], params["shift1"],
                         params["w2p"], params["scale2"], params["shift2"])
    return jnp.transpose(out.reshape(n, h, w, c1), (0, 3, 1, 2))   # NHWC -> NCHW


def init_params(key, c1, c2, eps=1e-5):
    ks = jax.random.split(key, 10)
    # Conv weights in HWIO: [3, 3, Cin, Cout]
    w1 = jax.random.normal(ks[0], (3, 3, c1, c2), jnp.float32) / np.sqrt(9 * c1)
    b1 = 0.1 * jax.random.normal(ks[1], (c2,), jnp.float32)
    w2 = jax.random.normal(ks[2], (3, 3, c2, c1), jnp.float32) / np.sqrt(9 * c2)
    b2 = 0.1 * jax.random.normal(ks[3], (c1,), jnp.float32)
    # BatchNorm affine + running stats (eval mode)
    g1 = 1.0 + 0.1 * jax.random.normal(ks[4], (c2,), jnp.float32)
    be1 = 0.1 * jax.random.normal(ks[5], (c2,), jnp.float32)
    mu1 = 0.1 * jax.random.normal(ks[6], (c2,), jnp.float32)
    var1 = 1.0 + 0.1 * jax.random.uniform(ks[7], (c2,), jnp.float32)
    g2 = 1.0 + 0.1 * jax.random.normal(ks[8], (c1,), jnp.float32)
    be2 = 0.1 * jax.random.normal(ks[9], (c1,), jnp.float32)
    mu2 = jnp.zeros((c1,), jnp.float32)
    var2 = jnp.ones((c1,), jnp.float32)

    # Kernel uses bf16 weights; the reference uses the same bf16-rounded values in f32.
    w1b = w1.astype(jnp.bfloat16)
    w2b = w2.astype(jnp.bfloat16)

    # Fold conv bias + eval-mode BN into per-channel scale/shift:
    #   BN(conv(x)+b) = s*conv(x) + (s*(b - mu) + beta),  s = gamma/sqrt(var+eps)
    s1 = g1 / jnp.sqrt(var1 + eps)
    s2 = g2 / jnp.sqrt(var2 + eps)
    return dict(
        w1p=w1b.reshape(9 * c1, c2), w2p=w2b.reshape(9 * c2, c1),
        w1hwio=w1b.astype(jnp.float32), w2hwio=w2b.astype(jnp.float32),
        scale1=s1, shift1=s1 * (b1 - mu1) + be1,
        scale2=s2, shift2=s2 * (b2 - mu2) + be2,
    )


def ref_forward(x_nchw, params):
    """Plain-JAX reference for sanity checking."""
    x = jnp.transpose(x_nchw, (0, 2, 3, 1)).astype(jnp.float32)

    def conv(inp, k):
        return jax.lax.conv_general_dilated(
            inp, k, (1, 1), "SAME",
            dimension_numbers=("NHWC", "HWIO", "NHWC"))

    h = jnp.maximum(conv(x, params["w1hwio"]) * params["scale1"]
                    + params["shift1"], 0.0)
    y = conv(h, params["w2hwio"]) * params["scale2"] + params["shift2"] + x
    return jnp.transpose(jnp.maximum(y, 0.0), (0, 3, 1, 2))


if __name__ == "__main__":
    # Small shapes consistent with MBLOCK1(channel1=4, channel2=32)
    N, C1, H, W = 2, 4, 16, 16
    C2 = 32

    key = jax.random.PRNGKey(0)
    kx, kp = jax.random.split(key)
    x = jax.random.normal(kx, (N, C1, H, W), jnp.float32)   # NCHW like PyTorch
    params = init_params(kp, C1, C2)

    out = jax.block_until_ready(mblock1_forward(x, params))
    ref = ref_forward(x, params)

    assert out.shape == (N, C1, H, W)
    np.testing.assert_allclose(np.asarray(out), np.asarray(ref),
                               rtol=2e-2, atol=2e-2)
    print("KERNEL_OK")
</pallas_src>

<mosaic_0001>
module attributes {stable_mosaic.version = 11 : i64} {
  func.func @_mblock1_kernel(%arg0: i32, %arg1: memref<1x18x18x4xf32, #tpu.memory_space<vmem>>, %arg2: memref<36x32xbf16, #tpu.memory_space<vmem>>, %arg3: memref<1x32xf32, #tpu.memory_space<vmem>>, %arg4: memref<1x32xf32, #tpu.memory_space<vmem>>, %arg5: memref<288x4xbf16, #tpu.memory_space<vmem>>, %arg6: memref<1x4xf32, #tpu.memory_space<vmem>>, %arg7: memref<1x4xf32, #tpu.memory_space<vmem>>, %arg8: memref<1x256x4xf32, #tpu.memory_space<vmem>>, %arg9: memref<18x32x32xf32, #tpu.memory_space<vmem>>, %arg10: memref<256x36xbf16, #tpu.memory_space<vmem>>, %arg11: memref<256x288xbf16, #tpu.memory_space<vmem>>) attributes {dimension_semantics = [#tpu.dimension_semantics<parallel>], iteration_bounds = array<i64: 2>, scalar_prefetch = 0 : i64, scratch_operands = 3 : i64, tpu.core_type = #tpu.core_type<tc>, window_params = [{transform_indices = @transform_0, window_bounds = array<i64: 1, 18, 18, 4>}, {pipeline_mode = #tpu.pipeline_mode<synchronous>, transform_indices = @transform_1, window_bounds = array<i64: 36, 32>}, {pipeline_mode = #tpu.pipeline_mode<synchronous>, transform_indices = @transform_2, window_bounds = array<i64: 1, 32>}, {pipeline_mode = #tpu.pipeline_mode<synchronous>, transform_indices = @transform_3, window_bounds = array<i64: 1, 32>}, {pipeline_mode = #tpu.pipeline_mode<synchronous>, transform_indices = @transform_4, window_bounds = array<i64: 288, 4>}, {pipeline_mode = #tpu.pipeline_mode<synchronous>, transform_indices = @transform_5, window_bounds = array<i64: 1, 4>}, {pipeline_mode = #tpu.pipeline_mode<synchronous>, transform_indices = @transform_6, window_bounds = array<i64: 1, 4>}, {transform_indices = @transform_7, window_bounds = array<i64: 1, 256, 4>}]} {
    %cst = arith.constant 0.000000e+00 : f32
    %0 = vector.broadcast %cst : f32 to vector<18x32x32xf32>
    %c0 = arith.constant 0 : index
    %c0_0 = arith.constant 0 : index
    %c0_1 = arith.constant 0 : index
    %1 = vector.load %arg9[%c0, %c0_0, %c0_1] : memref<18x32x32xf32, #tpu.memory_space<vmem>>, vector<18x32x32xf32>
    tpu.vector_store %arg9[%c0, %c0_0, %c0_1], %0 {strides = array<i32>} : memref<18x32x32xf32, #tpu.memory_space<vmem>>, vector<18x32x32xf32>,
    %c0_2 = arith.constant 0 : index
    %c0_3 = arith.constant 0 : index
    %c0_4 = arith.constant 0 : index
    %c0_5 = arith.constant 0 : index
    %2 = vector.load %arg1[%c0_2, %c0_3, %c0_4, %c0_5] : memref<1x18x18x4xf32, #tpu.memory_space<vmem>>, vector<1x16x16x4xf32>
    %3 = vector.shape_cast %2 : vector<1x16x16x4xf32> to vector<16x16x4xf32>
    %4 = vector.shape_cast %3 : vector<16x16x4xf32> to vector<256x4xf32>
    %5 = arith.truncf %4 : vector<256x4xf32> to vector<256x4xbf16>
    %c0_6 = arith.constant 0 : index
    %c0_7 = arith.constant 0 : index
    %6 = vector.load %arg10[%c0_6, %c0_7] : memref<256x36xbf16, #tpu.memory_space<vmem>>, vector<256x4xbf16>
    tpu.vector_store %arg10[%c0_6, %c0_7], %5 {strides = array<i32>} : memref<256x36xbf16, #tpu.memory_space<vmem>>, vector<256x4xbf16>,
    %c0_8 = arith.constant 0 : index
    %c0_9 = arith.constant 0 : index
    %c1 = arith.constant 1 : index
    %c0_10 = arith.constant 0 : index
    %7 = vector.load %arg1[%c0_8, %c0_9, %c1, %c0_10] : memref<1x18x18x4xf32, #tpu.memory_space<vmem>>, vector<1x16x16x4xf32>
    %8 = vector.shape_cast %7 : vector<1x16x16x4xf32> to vector<16x16x4xf32>
    %9 = vector.shape_cast %8 : vector<16x16x4xf32> to vector<256x4xf32>
    %10 = arith.truncf %9 : vector<256x4xf32> to vector<256x4xbf16>
    %c0_11 = arith.constant 0 : index
    %c4 = arith.constant 4 : index
    %11 = vector.load %arg10[%c0_11, %c4] : memref<256x36xbf16, #tpu.memory_space<vmem>>, vector<256x4xbf16>
    tpu.vector_store %arg10[%c0_11, %c4], %10 {strides = array<i32>} : memref<256x36xbf16, #tpu.memory_space<vmem>>, vector<256x4xbf16>,
    %c0_12 = arith.constant 0 : index
    %c0_13 = arith.constant 0 : index
    %c2 = arith.constant 2 : index
    %c0_14 = arith.constant 0 : index
    %12 = vector.load %arg1[%c0_12, %c0_13, %c2, %c0_14] : memref<1x18x18x4xf32, #tpu.memory_space<vmem>>, vector<1x16x16x4xf32>
    %13 = vector.shape_cast %12 : vector<1x16x16x4xf32> to vector<16x16x4xf32>
    %14 = vector.shape_cast %13 : vector<16x16x4xf32> to vector<256x4xf32>
    %15 = arith.truncf %14 : vector<256x4xf32> to vector<256x4xbf16>
    %c0_15 = arith.constant 0 : index
    %c8 = arith.constant 8 : index
    %16 = vector.load %arg10[%c0_15, %c8] : memref<256x36xbf16, #tpu.memory_space<vmem>>, vector<256x4xbf16>
    tpu.vector_store %arg10[%c0_15, %c8], %15 {strides = array<i32>} : memref<256x36xbf16, #tpu.memory_space<vmem>>, vector<256x4xbf16>,
    %c0_16 = arith.constant 0 : index
    %c1_17 = arith.constant 1 : index
    %c0_18 = arith.constant 0 : index
    %c0_19 = arith.constant 0 : index
    %17 = vector.load %arg1[%c0_16, %c1_17, %c0_18, %c0_19] : memref<1x18x18x4xf32, #tpu.memory_space<vmem>>, vector<1x16x16x4xf32>
    %18 = vector.shape_cast %17 : vector<1x16x16x4xf32> to vector<16x16x4xf32>
    %19 = vector.shape_cast %18 : vector<16x16x4xf32> to vector<256x4xf32>
    %20 = arith.truncf %19 : vector<256x4xf32> to vector<256x4xbf16>
    %c0_20 = arith.constant 0 : index
    %c12 = arith.constant 12 : index
    %21 = vector.load %arg10[%c0_20, %c12] : memref<256x36xbf16, #tpu.memory_space<vmem>>, vector<256x4xbf16>
    tpu.vector_store %arg10[%c0_20, %c12], %20 {strides = array<i32>} : memref<256x36xbf16, #tpu.memory_space<vmem>>, vector<256x4xbf16>,
    %c0_21 = arith.constant 0 : index
    %c1_22 = arith.constant 1 : index
    %c1_23 = arith.constant 1 : index
    %c0_24 = arith.constant 0 : index
    %22 = vector.load %arg1[%c0_21, %c1_22, %c1_23, %c0_24] : memref<1x18x18x4xf32, #tpu.memory_space<vmem>>, vector<1x16x16x4xf32>
    %23 = vector.shape_cast %22 : vector<1x16x16x4xf32> to vector<16x16x4xf32>
    %24 = vector.shape_cast %23 : vector<16x16x4xf32> to vector<256x4xf32>
    %25 = arith.truncf %24 : vector<256x4xf32> to vector<256x4xbf16>
    %c0_25 = arith.constant 0 : index
    %c16 = arith.constant 16 : index
    %26 = vector.load %arg10[%c0_25, %c16] : memref<256x36xbf16, #tpu.memory_space<vmem>>, vector<256x4xbf16>
    tpu.vector_store %arg10[%c0_25, %c16], %25 {strides = array<i32>} : memref<256x36xbf16, #tpu.memory_space<vmem>>, vector<256x4xbf16>,
    %c0_26 = arith.constant 0 : index
    %c1_27 = arith.constant 1 : index
    %c2_28 = arith.constant 2 : index
    %c0_29 = arith.constant 0 : index
    %27 = vector.load %arg1[%c0_26, %c1_27, %c2_28, %c0_29] : memref<1x18x18x4xf32, #tpu.memory_space<vmem>>, vector<1x16x16x4xf32>
    %28 = vector.shape_cast %27 : vector<1x16x16x4xf32> to vector<16x16x4xf32>
    %29 = vector.shape_cast %28 : vector<16x16x4xf32> to vector<256x4xf32>
    %30 = arith.truncf %29 : vector<256x4xf32> to vector<256x4xbf16>
    %c0_30 = arith.constant 0 : index
    %c20 = arith.constant 20 : index
    %31 = vector.load %arg10[%c0_30, %c20] : memref<256x36xbf16, #tpu.memory_space<vmem>>, vector<256x4xbf16>
    tpu.vector_store %arg10[%c0_30, %c20], %30 {strides = array<i32>} : memref<256x36xbf16, #tpu.memory_space<vmem>>, vector<256x4xbf16>,
    %c0_31 = arith.constant 0 : index
    %c2_32 = arith.constant 2 : index
    %c0_33 = arith.constant 0 : index
    %c0_34 = arith.constant 0 : index
    %32 = vector.load %arg1[%c0_31, %c2_32, %c0_33, %c0_34] : memref<1x18x18x4xf32, #tpu.memory_space<vmem>>, vector<1x16x16x4xf32>
    %33 = vector.shape_cast %32 : vector<1x16x16x4xf32> to vector<16x16x4xf32>
    %34 = vector.shape_cast %33 : vector<16x16x4xf32> to vector<256x4xf32>
    %35 = arith.truncf %34 : vector<256x4xf32> to vector<256x4xbf16>
    %c0_35 = arith.constant 0 : index
    %c24 = arith.constant 24 : index
    %36 = vector.load %arg10[%c0_35, %c24] : memref<256x36xbf16, #tpu.memory_space<vmem>>, vector<256x4xbf16>
    tpu.vector_store %arg10[%c0_35, %c24], %35 {strides = array<i32>} : memref<256x36xbf16, #tpu.memory_space<vmem>>, vector<256x4xbf16>,
    %c0_36 = arith.constant 0 : index
    %c2_37 = arith.constant 2 : index
    %c1_38 = arith.constant 1 : index
    %c0_39 = arith.constant 0 : index
    %37 = vector.load %arg1[%c0_36, %c2_37, %c1_38, %c0_39] : memref<1x18x18x4xf32, #tpu.memory_space<vmem>>, vector<1x16x16x4xf32>
    %38 = vector.shape_cast %37 : vector<1x16x16x4xf32> to vector<16x16x4xf32>
    %39 = vector.shape_cast %38 : vector<16x16x4xf32> to vector<256x4xf32>
    %40 = arith.truncf %39 : vector<256x4xf32> to vector<256x4xbf16>
    %c0_40 = arith.constant 0 : index
    %c28 = arith.constant 28 : index
    %41 = vector.load %arg10[%c0_40, %c28] : memref<256x36xbf16, #tpu.memory_space<vmem>>, vector<256x4xbf16>
    tpu.vector_store %arg10[%c0_40, %c28], %40 {strides = array<i32>} : memref<256x36xbf16, #tpu.memory_space<vmem>>, vector<256x4xbf16>,
    %c0_41 = arith.constant 0 : index
    %c2_42 = arith.constant 2 : index
    %c2_43 = arith.constant 2 : index
    %c0_44 = arith.constant 0 : index
    %42 = vector.load %arg1[%c0_41, %c2_42, %c2_43, %c0_44] : memref<1x18x18x4xf32, #tpu.memory_space<vmem>>, vector<1x16x16x4xf32>
    %43 = vector.shape_cast %42 : vector<1x16x16x4xf32> to vector<16x16x4xf32>
    %44 = vector.shape_cast %43 : vector<16x16x4xf32> to vector<256x4xf32>
    %45 = arith.truncf %44 : vector<256x4xf32> to vector<256x4xbf16>
    %c0_45 = arith.constant 0 : index
    %c32 = arith.constant 32 : index
    %46 = vector.load %arg10[%c0_45, %c32] : memref<256x36xbf16, #tpu.memory_space<vmem>>, vector<256x4xbf16>
    tpu.vector_store %arg10[%c0_45, %c32], %45 {strides = array<i32>} : memref<256x36xbf16, #tpu.memory_space<vmem>>, vector<256x4xbf16>,
    %c0_46 = arith.constant 0 : index
    %c0_47 = arith.constant 0 : index
    %47 = vector.load %arg10[%c0_46, %c0_47] : memref<256x36xbf16, #tpu.memory_space<vmem>>, vector<256x36xbf16>
    %c0_48 = arith.constant 0 : index
    %c0_49 = arith.constant 0 : index
    %48 = vector.load %arg2[%c0_48, %c0_49] : memref<36x32xbf16, #tpu.memory_space<vmem>>, vector<36x32xbf16>
    %cst_50 = arith.constant dense<0.000000e+00> : vector<256x32xf32>
    %49 = tpu.matmul %47, %48, %cst_50 {dimension_numbers = #tpu.dot_dimension_numbers<[1], [0], [0], [1], [0, 0, 1, 1], [], []>} : vector<256x36xbf16>, vector<36x32xbf16>, vector<256x32xf32> -> vector<256x32xf32>
    %c0_51 = arith.constant 0 : index
    %c0_52 = arith.constant 0 : index
    %50 = vector.load %arg3[%c0_51, %c0_52] : memref<1x32xf32, #tpu.memory_space<vmem>>, vector<1x32xf32>
    %51 = vector.broadcast %50 : vector<1x32xf32> to vector<256x32xf32>
    %52 = arith.mulf %49, %51 : vector<256x32xf32>
    %c0_53 = arith.constant 0 : index
    %c0_54 = arith.constant 0 : index
    %53 = vector.load %arg4[%c0_53, %c0_54] : memref<1x32xf32, #tpu.memory_space<vmem>>, vector<1x32xf32>
    %54 = vector.broadcast %53 : vector<1x32xf32> to vector<256x32xf32>
    %55 = arith.addf %52, %54 : vector<256x32xf32>
    %cst_55 = arith.constant 0.000000e+00 : f32
    %56 = vector.broadcast %cst_55 : f32 to vector<256x32xf32>
    %57 = arith.maximumf %55, %56 : vector<256x32xf32>
    %58 = vector.shape_cast %57 : vector<256x32xf32> to vector<16x16x32xf32>
    %c1_56 = arith.constant 1 : index
    %c8_57 = arith.constant 8 : index
    %c0_58 = arith.constant 0 : index
    %59 = vector.load %arg9[%c1_56, %c8_57, %c0_58] : memref<18x32x32xf32, #tpu.memory_space<vmem>>, vector<16x16x32xf32>
    tpu.vector_store %arg9[%c1_56, %c8_57, %c0_58], %58 {strides = array<i32>} : memref<18x32x32xf32, #tpu.memory_space<vmem>>, vector<16x16x32xf32>,
    %c0_59 = arith.constant 0 : index
    %c7 = arith.constant 7 : index
    %c0_60 = arith.constant 0 : index
    %60 = vector.load %arg9[%c0_59, %c7, %c0_60] : memref<18x32x32xf32, #tpu.memory_space<vmem>>, vector<16x16x32xf32>
    %61 = vector.shape_cast %60 : vector<16x16x32xf32> to vector<256x32xf32>
    %62 = arith.truncf %61 : vector<256x32xf32> to vector<256x32xbf16>
    %c0_61 = arith.constant 0 : index
    %c0_62 = arith.constant 0 : index
    %63 = vector.load %arg11[%c0_61, %c0_62] : memref<256x288xbf16, #tpu.memory_space<vmem>>, vector<256x32xbf16>
    tpu.vector_store %arg11[%c0_61, %c0_62], %62 {strides = array<i32>} : memref<256x288xbf16, #tpu.memory_space<vmem>>, vector<256x32xbf16>,
    %c0_63 = arith.constant 0 : index
    %c8_64 = arith.constant 8 : index
    %c0_65 = arith.constant 0 : index
    %64 = vector.load %arg9[%c0_63, %c8_64, %c0_65] : memref<18x32x32xf32, #tpu.memory_space<vmem>>, vector<16x16x32xf32>
    %65 = vector.shape_cast %64 : vector<16x16x32xf32> to vector<256x32xf32>
    %66 = arith.truncf %65 : vector<256x32xf32> to vector<256x32xbf16>
    %c0_66 = arith.constant 0 : index
    %c32_67 = arith.constant 32 : index
    %67 = vector.load %arg11[%c0_66, %c32_67] : memref<256x288xbf16, #tpu.memory_space<vmem>>, vector<256x32xbf16>
    tpu.vector_store %arg11[%c0_66, %c32_67], %66 {strides = array<i32>} : memref<256x288xbf16, #tpu.memory_space<vmem>>, vector<256x32xbf16>,
    %c0_68 = arith.constant 0 : index
    %c9 = arith.constant 9 : index
    %c0_69 = arith.constant 0 : index
    %68 = vector.load %arg9[%c0_68, %c9, %c0_69] : memref<18x32x32xf32, #tpu.memory_space<vmem>>, vector<16x16x32xf32>
    %69 = vector.shape_cast %68 : vector<16x16x32xf32> to vector<256x32xf32>
    %70 = arith.truncf %69 : vector<256x32xf32> to vector<256x32xbf16>
    %c0_70 = arith.constant 0 : index
    %c64 = arith.constant 64 : index
    %71 = vector.load %arg11[%c0_70, %c64] : memref<256x288xbf16, #tpu.memory_space<vmem>>, vector<256x32xbf16>
    tpu.vector_store %arg11[%c0_70, %c64], %70 {strides = array<i32>} : memref<256x288xbf16, #tpu.memory_space<vmem>>, vector<256x32xbf16>,
    %c1_71 = arith.constant 1 : index
    %c7_72 = arith.constant 7 : index
    %c0_73 = arith.constant 0 : index
    %72 = vector.load %arg9[%c1_71, %c7_72, %c0_73] : memref<18x32x32xf32, #tpu.memory_space<vmem>>, vector<16x16x32xf32>
    %73 = vector.shape_cast %72 : vector<16x16x32xf32> to vector<256x32xf32>
    %74 = arith.truncf %73 : vector<256x32xf32> to vector<256x32xbf16>
    %c0_74 = arith.constant 0 : index
    %c96 = arith.constant 96 : index
    %75 = vector.load %arg11[%c0_74, %c96] : memref<256x288xbf16, #tpu.memory_space<vmem>>, vector<256x32xbf16>
    tpu.vector_store %arg11[%c0_74, %c96], %74 {strides = array<i32>} : memref<256x288xbf16, #tpu.memory_space<vmem>>, vector<256x32xbf16>,
    %c1_75 = arith.constant 1 : index
    %c8_76 = arith.constant 8 : index
    %c0_77 = arith.constant 0 : index
    %76 = vector.load %arg9[%c1_75, %c8_76, %c0_77] : memref<18x32x32xf32, #tpu.memory_space<vmem>>, vector<16x16x32xf32>
    %77 = vector.shape_cast %76 : vector<16x16x32xf32> to vector<256x32xf32>
    %78 = arith.truncf %77 : vector<256x32xf32> to vector<256x32xbf16>
    %c0_78 = arith.constant 0 : index
    %c128 = arith.constant 128 : index
    %79 = vector.load %arg11[%c0_78, %c128] : memref<256x288xbf16, #tpu.memory_space<vmem>>, vector<256x32xbf16>
    tpu.vector_store %arg11[%c0_78, %c128], %78 {strides = array<i32>} : memref<256x288xbf16, #tpu.memory_space<vmem>>, vector<256x32xbf16>,
    %c1_79 = arith.constant 1 : index
    %c9_80 = arith.constant 9 : index
    %c0_81 = arith.constant 0 : index
    %80 = vector.load %arg9[%c1_79, %c9_80, %c0_81] : memref<18x32x32xf32, #tpu.memory_space<vmem>>, vector<16x16x32xf32>
    %81 = vector.shape_cast %80 : vector<16x16x32xf32> to vector<256x32xf32>
    %82 = arith.truncf %81 : vector<256x32xf32> to vector<256x32xbf16>
    %c0_82 = arith.constant 0 : index
    %c160 = arith.constant 160 : index
    %83 = vector.load %arg11[%c0_82, %c160] : memref<256x288xbf16, #tpu.memory_space<vmem>>, vector<256x32xbf16>
    tpu.vector_store %arg11[%c0_82, %c160], %82 {strides = array<i32>} : memref<256x288xbf16, #tpu.memory_space<vmem>>, vector<256x32xbf16>,
    %c2_83 = arith.constant 2 : index
    %c7_84 = arith.constant 7 : index
    %c0_85 = arith.constant 0 : index
    %84 = vector.load %arg9[%c2_83, %c7_84, %c0_85] : memref<18x32x32xf32, #tpu.memory_space<vmem>>, vector<16x16x32xf32>
    %85 = vector.shape_cast %84 : vector<16x16x32xf32> to vector<256x32xf32>
    %86 = arith.truncf %85 : vector<256x32xf32> to vector<256x32xbf16>
    %c0_86 = arith.constant 0 : index
    %c192 = arith.constant 192 : index
    %87 = vector.load %arg11[%c0_86, %c192] : memref<256x288xbf16, #tpu.memory_space<vmem>>, vector<256x32xbf16>
    tpu.vector_store %arg11[%c0_86, %c192], %86 {strides = array<i32>} : memref<256x288xbf16, #tpu.memory_space<vmem>>, vector<256x32xbf16>,
    %c2_87 = arith.constant 2 : index
    %c8_88 = arith.constant 8 : index
    %c0_89 = arith.constant 0 : index
    %88 = vector.load %arg9[%c2_87, %c8_88, %c0_89] : memref<18x32x32xf32, #tpu.memory_space<vmem>>, vector<16x16x32xf32>
    %89 = vector.shape_cast %88 : vector<16x16x32xf32> to vector<256x32xf32>
    %90 = arith.truncf %89 : vector<256x32xf32> to vector<256x32xbf16>
    %c0_90 = arith.constant 0 : index
    %c224 = arith.constant 224 : index
    %91 = vector.load %arg11[%c0_90, %c224] : memref<256x288xbf16, #tpu.memory_space<vmem>>, vector<256x32xbf16>
    tpu.vector_store %arg11[%c0_90, %c224], %90 {strides = array<i32>} : memref<256x288xbf16, #tpu.memory_space<vmem>>, vector<256x32xbf16>,
    %c2_91 = arith.constant 2 : index
    %c9_92 = arith.constant 9 : index
    %c0_93 = arith.constant 0 : index
    %92 = vector.load %arg9[%c2_91, %c9_92, %c0_93] : memref<18x32x32xf32, #tpu.memory_space<vmem>>, vector<16x16x32xf32>
    %93 = vector.shape_cast %92 : vector<16x16x32xf32> to vector<256x32xf32>
    %94 = arith.truncf %93 : vector<256x32xf32> to vector<256x32xbf16>
    %c0_94 = arith.constant 0 : index
    %c256 = arith.constant 256 : index
    %95 = vector.load %arg11[%c0_94, %c256] : memref<256x288xbf16, #tpu.memory_space<vmem>>, vector<256x32xbf16>
    tpu.vector_store %arg11[%c0_94, %c256], %94 {strides = array<i32>} : memref<256x288xbf16, #tpu.memory_space<vmem>>, vector<256x32xbf16>,
    %c0_95 = arith.constant 0 : index
    %c0_96 = arith.constant 0 : index
    %96 = vector.load %arg11[%c0_95, %c0_96] : memref<256x288xbf16, #tpu.memory_space<vmem>>, vector<256x288xbf16>
    %c0_97 = arith.constant 0 : index
    %c0_98 = arith.constant 0 : index
    %97 = vector.load %arg5[%c0_97, %c0_98] : memref<288x4xbf16, #tpu.memory_space<vmem>>, vector<288x4xbf16>
    %cst_99 = arith.constant dense<0.000000e+00> : vector<256x4xf32>
    %98 = tpu.matmul %96, %97, %cst_99 {dimension_numbers = #tpu.dot_dimension_numbers<[1], [0], [0], [1], [0, 0, 1, 1], [], []>} : vector<256x288xbf16>, vector<288x4xbf16>, vector<256x4xf32> -> vector<256x4xf32>
    %c0_100 = arith.constant 0 : index
    %c1_101 = arith.constant 1 : index
    %c1_102 = arith.constant 1 : index
    %c0_103 = arith.constant 0 : index
    %99 = vector.load %arg1[%c0_100, %c1_101, %c1_102, %c0_103] : memref<1x18x18x4xf32, #tpu.memory_space<vmem>>, vector<1x16x16x4xf32>
    %100 = vector.shape_cast %99 : vector<1x16x16x4xf32> to vector<16x16x4xf32>
    %101 = vector.shape_cast %100 : vector<16x16x4xf32> to vector<256x4xf32>
    %c0_104 = arith.constant 0 : index
    %c0_105 = arith.constant 0 : index
    %102 = vector.load %arg6[%c0_104, %c0_105] : memref<1x4xf32, #tpu.memory_space<vmem>>, vector<1x4xf32>
    %103 = vector.broadcast %102 : vector<1x4xf32> to vector<256x4xf32>
    %104 = arith.mulf %98, %103 : vector<256x4xf32>
    %c0_106 = arith.constant 0 : index
    %c0_107 = arith.constant 0 : index
    %105 = vector.load %arg7[%c0_106, %c0_107] : memref<1x4xf32, #tpu.memory_space<vmem>>, vector<1x4xf32>
    %106 = vector.broadcast %105 : vector<1x4xf32> to vector<256x4xf32>
    %107 = arith.addf %104, %106 : vector<256x4xf32>
    %108 = arith.addf %107, %101 : vector<256x4xf32>
    %cst_108 = arith.constant 0.000000e+00 : f32
    %109 = vector.broadcast %cst_108 : f32 to vector<256x4xf32>
    %110 = arith.maximumf %108, %109 : vector<256x4xf32>
    %c0_109 = arith.constant 0 : index
    %c0_110 = arith.constant 0 : index
    %c0_111 = arith.constant 0 : index
    %111 = vector.load %arg8[%c0_109, %c0_110, %c0_111] : memref<1x256x4xf32, #tpu.memory_space<vmem>>, vector<1x256x4xf32>
    %112 = vector.shape_cast %111 : vector<1x256x4xf32> to vector<256x4xf32>
    %113 = vector.shape_cast %110 : vector<256x4xf32> to vector<1x256x4xf32>
    tpu.vector_store %arg8[%c0_109, %c0_110, %c0_111], %113 {strides = array<i32>} : memref<1x256x4xf32, #tpu.memory_space<vmem>>, vector<1x256x4xf32>,
    return
  }
  func.func @transform_0(%arg0: i32) -> (i32, i32, i32, i32) {
    %c0_i32 = arith.constant 0 : i32
    %c0_i32_0 = arith.constant 0 : i32
    %c0_i32_1 = arith.constant 0 : i32
    %c0_i32_2 = arith.constant 0 : i32
    return %arg0, %c0_i32, %c0_i32_0, %c0_i32_1 : i32, i32, i32, i32
  }
  func.func @transform_1(%arg0: i32) -> (i32, i32) {
    %c0_i32 = arith.constant 0 : i32
    %c0_i32_0 = arith.constant 0 : i32
    %c0_i32_1 = arith.constant 0 : i32
    return %c0_i32, %c0_i32_0 : i32, i32
  }
  func.func @transform_2(%arg0: i32) -> (i32, i32) {
    %c0_i32 = arith.constant 0 : i32
    %c0_i32_0 = arith.constant 0 : i32
    %c0_i32_1 = arith.constant 0 : i32
    return %c0_i32, %c0_i32_0 : i32, i32
  }
  func.func @transform_3(%arg0: i32) -> (i32, i32) {
    %c0_i32 = arith.constant 0 : i32
    %c0_i32_0 = arith.constant 0 : i32
    %c0_i32_1 = arith.constant 0 : i32
    return %c0_i32, %c0_i32_0 : i32, i32
  }
  func.func @transform_4(%arg0: i32) -> (i32, i32) {
    %c0_i32 = arith.constant 0 : i32
    %c0_i32_0 = arith.constant 0 : i32
    %c0_i32_1 = arith.constant 0 : i32
    return %c0_i32, %c0_i32_0 : i32, i32
  }
  func.func @transform_5(%arg0: i32) -> (i32, i32) {
    %c0_i32 = arith.constant 0 : i32
    %c0_i32_0 = arith.constant 0 : i32
    %c0_i32_1 = arith.constant 0 : i32
    return %c0_i32, %c0_i32_0 : i32, i32
  }
  func.func @transform_6(%arg0: i32) -> (i32, i32) {
    %c0_i32 = arith.constant 0 : i32
    %c0_i32_0 = arith.constant 0 : i32
    %c0_i32_1 = arith.constant 0 : i32
    return %c0_i32, %c0_i32_0 : i32, i32
  }
  func.func @transform_7(%arg0: i32) -> (i32, i32, i32) {
    %c0_i32 = arith.constant 0 : i32
    %c0_i32_0 = arith.constant 0 : i32
    %c0_i32_1 = arith.constant 0 : i32
    return %arg0, %c0_i32, %c0_i32_0 : i32, i32, i32
  }
}

</mosaic_0001>

<llo_original>
// kernel: mblock1_forward.1
$region0: #{mblock1_forward.1}
  #allocation0 [shape = 'u32[]', space=smem, size = 0x4, offset = 0x4, fixed_abs, tag = 'smem constant byte address 0x4 - core index']
  #allocation1 [shape = 'u32[144,128]{1,0:T(1,128)}', space=vmem, size = 0x12000, scoped, tag = 'internal scratch']
  #allocation2 [shape = 'f32[18,32,32]{2,1,0:T(8,128)}', space=vmem, size = 0x48000, scoped, tag = 'scratch operand']
  #allocation3 [shape = 'bf16[256,36]{1,0:T(16,128)(2,1)}', space=vmem, size = 0x10000, scoped, tag = 'scratch operand']
  #allocation4 [shape = 'bf16[256,288]{1,0:T(16,128)(2,1)}', space=vmem, size = 0x30000, scoped, tag = 'scratch operand']
  %s0 = inlined_call_operand.vmem [shape: f32[2,18,18,4], index: 0, kind: input, shape index: {}]
  %s1 = inlined_call_operand.vmem [shape: bf16[36,32], index: 1, kind: input, shape index: {}]
  %s2 = inlined_call_operand.vmem [shape: f32[1,32], index: 2, kind: input, shape index: {}]
  %s3 = inlined_call_operand.vmem [shape: f32[1,32], index: 3, kind: input, shape index: {}]
  %s4 = inlined_call_operand.vmem [shape: bf16[288,4], index: 4, kind: input, shape index: {}]
  %s5 = inlined_call_operand.vmem [shape: f32[1,4], index: 5, kind: input, shape index: {}]
  %s6 = inlined_call_operand.vmem [shape: f32[1,4], index: 6, kind: input, shape index: {}]
  %s7 = inlined_call_operand.vmem [shape: f32[2,256,4], index: 7, kind: output, shape index: {}]
  %s8 = sld [smem:[#allocation0]]
  $region61: #{mblock1_forward.1} parent=0
    _
  %s10 = ssub.s32 1, %s8
  %s11 = scalar_select 0, %s10, %s8
  loop: start=0, step=1, limit=4
  $region2: #{mblock1_forward.1} parent=0 // loop_pre_header
    _
  $region3: #{mblock1_forward.1} parent=0 // loop_header
    %s13 = sphi 0, %s17
    %p14 = scmp.ge.s32.totalorder %s13, 4
    %s23 = sphi 0, %s25
    %s26 = sphi 0, %s23
    %s27 = sphi 0, %s26
    %s43 = sphi 0, %s27
    %s47 = sphi 0, %s47
    %s49 = sphi 0, %s47
    %s50 = sphi 0, %s49
    %s64 = sphi 0, %s50
    %s68 = sphi 0, %s68
    %s70 = sphi 0, %s68
    %s71 = sphi 0, %s70
    %s85 = sphi 0, %s71
    %s89 = sphi 0, %s89
    %s91 = sphi 0, %s89
    %s92 = sphi 0, %s91
    %s106 = sphi 0, %s92
    %s110 = sphi 0, %s110
    %s112 = sphi 0, %s110
    %s113 = sphi 0, %s112
    %s127 = sphi 0, %s113
    %s131 = sphi 0, %s131
    %s133 = sphi 0, %s131
    %s134 = sphi 0, %s133
    %s148 = sphi 0, %s134
    %s152 = sphi 0, %s152
    %s154 = sphi 0, %s152
    %s155 = sphi 0, %s154
    %s169 = sphi 0, %s155
    %s175 = sphi 0, %s177
    %s178 = sphi 0, %s175
    %s179 = sphi 0, %s178
    %s195 = sphi 0, %s179
  $region4: #{mblock1_forward.1} parent=0 // loop_header_branch
    %16 = sbr.rel (%p14) target = $region8
  $region5: #{mblock1_forward.1} parent=0 // loop_body
    %s18 = ssub.s32 %s13, 1
    %s19 = ssub.s32 %s13, 2
    %s20 = sadd.s32 %s13, 1
    %s21 = ssub.s32 %s13, %s20
    %p22 = scmp.eq.s32.totalorder %s21, 0
    %s24 = sadd.s32 %s23, 1
    %s25 = scalar_select %p22, %s23, %s24
    %p28 = pneg %p22
    %p29 = scmp.eq.s32.totalorder %s13, 1
    %p30 = por %p28, %p29
    %p31 = scmp.ne.s32.totalorder %s23, %s26
    %p32 = scmp.eq.s32.totalorder %s13, 0
    %p33 = por %p31, %p32
    %p34 = scmp.ne.s32.totalorder %s23, %s26
    %p35 = scmp.eq.s32.totalorder %s18, 1
    %p36 = por %p34, %p35
    %p37 = scmp.ne.s32.totalorder %s26, %s27
    %p38 = scmp.eq.s32.totalorder %s18, 0
    %p39 = por %p37, %p38
    %p40 = scmp.ne.s32.totalorder %s26, %s27
    %p41 = scmp.eq.s32.totalorder %s19, 1
    %p42 = por %p40, %p41
    %p44 = scmp.ne.s32.totalorder %s27, %s43
    %p45 = scmp.eq.s32.totalorder %s19, 0
    %p46 = por %p44, %p45
    %s48 = sadd.s32 %s47, 1
    %p51 = scmp.eq.s32.totalorder %s13, 1
    %p52 = scmp.ne.s32.totalorder %s47, %s49
    %p53 = scmp.eq.s32.totalorder %s13, 0
    %p54 = por %p52, %p53
    %p55 = scmp.ne.s32.totalorder %s47, %s49
    %p56 = scmp.eq.s32.totalorder %s18, 1
    %p57 = por %p55, %p56
    %p58 = scmp.ne.s32.totalorder %s49, %s50
    %p59 = scmp.eq.s32.totalorder %s18, 0
    %p60 = por %p58, %p59
    %p61 = scmp.ne.s32.totalorder %s49, %s50
    %p62 = scmp.eq.s32.totalorder %s19, 1
    %p63 = por %p61, %p62
    %p65 = scmp.ne.s32.totalorder %s50, %s64
    %p66 = scmp.eq.s32.totalorder %s19, 0
    %p67 = por %p65, %p66
    %s69 = sadd.s32 %s68, 1
    %p72 = scmp.eq.s32.totalorder %s13, 1
    %p73 = scmp.ne.s32.totalorder %s68, %s70
    %p74 = scmp.eq.s32.totalorder %s13, 0
    %p75 = por %p73, %p74
    %p76 = scmp.ne.s32.totalorder %s68, %s70
    %p77 = scmp.eq.s32.totalorder %s18, 1
    %p78 = por %p76, %p77
    %p79 = scmp.ne.s32.totalorder %s70, %s71
    %p80 = scmp.eq.s32.totalorder %s18, 0
    %p81 = por %p79, %p80
    %p82 = scmp.ne.s32.totalorder %s70, %s71
    %p83 = scmp.eq.s32.totalorder %s19, 1
    %p84 = por %p82, %p83
    %p86 = scmp.ne.s32.totalorder %s71, %s85
    %p87 = scmp.eq.s32.totalorder %s19, 0
    %p88 = por %p86, %p87
    %s90 = sadd.s32 %s89, 1
    %p93 = scmp.eq.s32.totalorder %s13, 1
    %p94 = scmp.ne.s32.totalorder %s89, %s91
    %p95 = scmp.eq.s32.totalorder %s13, 0
    %p96 = por %p94, %p95
    %p97 = scmp.ne.s32.totalorder %s89, %s91
    %p98 = scmp.eq.s32.totalorder %s18, 1
    %p99 = por %p97, %p98
    %p100 = scmp.ne.s32.totalorder %s91, %s92
    %p101 = scmp.eq.s32.totalorder %s18, 0
    %p102 = por %p100, %p101
    %p103 = scmp.ne.s32.totalorder %s91, %s92
    %p104 = scmp.eq.s32.totalorder %s19, 1
    %p105 = por %p103, %p104
    %p107 = scmp.ne.s32.totalorder %s92, %s106
    %p108 = scmp.eq.s32.totalorder %s19, 0
    %p109 = por %p107, %p108
    %s111 = sadd.s32 %s110, 1
    %p114 = scmp.eq.s32.totalorder %s13, 1
    %p115 = scmp.ne.s32.totalorder %s110, %s112
    %p116 = scmp.eq.s32.totalorder %s13, 0
    %p117 = por %p115, %p116
    %p118 = scmp.ne.s32.totalorder %s110, %s112
    %p119 = scmp.eq.s32.totalorder %s18, 1
    %p120 = por %p118, %p119
    %p121 = scmp.ne.s32.totalorder %s112, %s113
    %p122 = scmp.eq.s32.totalorder %s18, 0
    %p123 = por %p121, %p122
    %p124 = scmp.ne.s32.totalorder %s112, %s113
    %p125 = scmp.eq.s32.totalorder %s19, 1
    %p126 = por %p124, %p125
    %p128 = scmp.ne.s32.totalorder %s113, %s127
    %p129 = scmp.eq.s32.totalorder %s19, 0
    %p130 = por %p128, %p129
    %s132 = sadd.s32 %s131, 1
    %p135 = scmp.eq.s32.totalorder %s13, 1
    %p136 = scmp.ne.s32.totalorder %s131, %s133
    %p137 = scmp.eq.s32.totalorder %s13, 0
    %p138 = por %p136, %p137
    %p139 = scmp.ne.s32.totalorder %s131, %s133
    %p140 = scmp.eq.s32.totalorder %s18, 1
    %p141 = por %p139, %p140
    %p142 = scmp.ne.s32.totalorder %s133, %s134
    %p143 = scmp.eq.s32.totalorder %s18, 0
    %p144 = por %p142, %p143
    %p145 = scmp.ne.s32.totalorder %s133, %s134
    %p146 = scmp.eq.s32.totalorder %s19, 1
    %p147 = por %p145, %p146
    %p149 = scmp.ne.s32.totalorder %s134, %s148
    %p150 = scmp.eq.s32.totalorder %s19, 0
    %p151 = por %p149, %p150
    %s153 = sadd.s32 %s152, 1
    %p156 = scmp.eq.s32.totalorder %s13, 1
    %p157 = scmp.ne.s32.totalorder %s152, %s154
    %p158 = scmp.eq.s32.totalorder %s13, 0
    %p159 = por %p157, %p158
    %p160 = scmp.ne.s32.totalorder %s152, %s154
    %p161 = scmp.eq.s32.totalorder %s18, 1
    %p162 = por %p160, %p161
    %p163 = scmp.ne.s32.totalorder %s154, %s155
    %p164 = scmp.eq.s32.totalorder %s18, 0
    %p165 = por %p163, %p164
    %p166 = scmp.ne.s32.totalorder %s154, %s155
    %p167 = scmp.eq.s32.totalorder %s19, 1
    %p168 = por %p166, %p167
    %p170 = scmp.ne.s32.totalorder %s155, %s169
    %p171 = scmp.eq.s32.totalorder %s19, 0
    %p172 = por %p170, %p171
    %s173 = ssub.s32 %s13, %s20
    %p174 = scmp.eq.s32.totalorder %s173, 0
    %s176 = sadd.s32 %s175, 1
    %s177 = scalar_select %p174, %s175, %s176
    %p180 = pneg %p174
    %p181 = scmp.eq.s32.totalorder %s13, 1
    %p182 = por %p180, %p181
    %p183 = scmp.ne.s32.totalorder %s175, %s178
    %p184 = scmp.eq.s32.totalorder %s13, 0
    %p185 = por %p183, %p184
    %p186 = scmp.ne.s32.totalorder %s175, %s178
    %p187 = scmp.eq.s32.totalorder %s18, 1
    %p188 = por %p186, %p187
    %p189 = scmp.ne.s32.totalorder %s178, %s179
    %p190 = scmp.eq.s32.totalorder %s18, 0
    %p191 = por %p189, %p190
    %p192 = scmp.ne.s32.totalorder %s178, %s179
    %p193 = scmp.eq.s32.totalorder %s19, 1
    %p194 = por %p192, %p193
    %p196 = scmp.ne.s32.totalorder %s179, %s195
    %p197 = scmp.eq.s32.totalorder %s19, 0
    %p198 = por %p196, %p197
    %p199 = scmp.le.s32.totalorder 1, %s13
    %p200 = scmp.lt.s32.totalorder %s13, 3
    %p201 = pnand %p199, %p200
    %p202 = pneg %p201
    // Predicated region
    $region9: #{mblock1_forward.1} parent=5 // pred_check
      _
    $region10: #{mblock1_forward.1} parent=5 // pred_check_branch
      %204 = sbr.rel (%p201) target = $region12
    $region11: #{mblock1_forward.1} parent=5 // pred_region
      %s205 = ssub.s32 %s13, 1
      // Predicated region
      $region13: #{mblock1_forward.1} parent=11 // pred_check
        %p206 = pneg %p60
      $region14: #{mblock1_forward.1} parent=11 // pred_check_branch
        %208 = sbr.rel (%p206) target = $region16
      $region15: #{mblock1_forward.1} parent=11 // pred_region
        _
      $region16: #{mblock1_forward.1} parent=11 // pred_fallthru
        _
      // Predicated region
      $region17: #{mblock1_forward.1} parent=11 // pred_check
        %p209 = pneg %p81
      $region18: #{mblock1_forward.1} parent=11 // pred_check_branch
        %211 = sbr.rel (%p209) target = $region20
      $region19: #{mblock1_forward.1} parent=11 // pred_region
        _
      $region20: #{mblock1_forward.1} parent=11 // pred_fallthru
        _
      // Predicated region
      $region21: #{mblock1_forward.1} parent=11 // pred_check
        %p212 = pneg %p102
      $region22: #{mblock1_forward.1} parent=11 // pred_check_branch
        %214 = sbr.rel (%p212) target = $region24
      $region23: #{mblock1_forward.1} parent=11 // pred_region
        _
      $region24: #{mblock1_forward.1} parent=11 // pred_fallthru
        _
      // Predicated region
      $region25: #{mblock1_forward.1} parent=11 // pred_check
        %p215 = pneg %p123
      $region26: #{mblock1_forward.1} parent=11 // pred_check_branch
        %217 = sbr.rel (%p215) target = $region28
      $region27: #{mblock1_forward.1} parent=11 // pred_region
        _
      $region28: #{mblock1_forward.1} parent=11 // pred_fallthru
        _
      // Predicated region
      $region29: #{mblock1_forward.1} parent=11 // pred_check
        %p218 = pneg %p144
      $region30: #{mblock1_forward.1} parent=11 // pred_check_branch
        %220 = sbr.rel (%p218) target = $region32
      $region31: #{mblock1_forward.1} parent=11 // pred_region
        _
      $region32: #{mblock1_forward.1} parent=11 // pred_fallthru
        _
      // Predicated region
      $region33: #{mblock1_forward.1} parent=11 // pred_check
        %p221 = pneg %p165
      $region34: #{mblock1_forward.1} parent=11 // pred_check_branch
        %223 = sbr.rel (%p221) target = $region36
      $region35: #{mblock1_forward.1} parent=11 // pred_region
        _
      $region36: #{mblock1_forward.1} parent=11 // pred_fallthru
        _
    $region12: #{mblock1_forward.1} parent=5 // pred_fallthru
      _
    %p224 = scmp.lt.s32.totalorder %s13, 2
    // Predicated region
    $region37: #{mblock1_forward.1} parent=5 // pred_check
      %p225 = pneg %p224
    $region38: #{mblock1_forward.1} parent=5 // pred_check_branch
      %227 = sbr.rel (%p225) target = $region40
    $region39: #{mblock1_forward.1} parent=5 // pred_region
      // Predicated region
      $region41: #{mblock1_forward.1} parent=39 // pred_check
        %p228 = pneg %p33
      $region42: #{mblock1_forward.1} parent=39 // pred_check_branch
        %230 = sbr.rel (%p228) target = $region44
      $region43: #{mblock1_forward.1} parent=39 // pred_region
        %p231 = scmp.lt.s32.totalorder %s13, 1
        %s232 = scalar_select %p231, %s13, 1
        %s233 = smul.addr %s232, 54
        %s234 = smul.addr %s233, 8
        %s235 = scalar_lea.vmem %s0, %s234
      $region44: #{mblock1_forward.1} parent=39 // pred_fallthru
        _
    $region40: #{mblock1_forward.1} parent=5 // pred_fallthru
      _
    %p236 = scmp.le.s32.totalorder 1, %s13
    %p237 = scmp.lt.s32.totalorder %s13, 3
    %p238 = pnand %p236, %p237
    %p239 = pneg %p238
    // Predicated region
    $region45: #{mblock1_forward.1} parent=5 // pred_check
      _
    $region46: #{mblock1_forward.1} parent=5 // pred_check_branch
      %241 = sbr.rel (%p238) target = $region48
    $region47: #{mblock1_forward.1} parent=5 // pred_region
      %s242 = ssub.s32 %s13, 1
      %p243 = scmp.lt.s32.totalorder %s18, 1
      %s244 = scalar_select %p243, %s18, 1
      %s245 = smul.addr %s244, 54
      %s246 = smul.addr %s245, 8
      %s247 = scalar_lea.vmem %s0, %s246
      %p248 = pneg %p39
      %p249 = pneg %p36
      %p250 = pneg %p60
      %p251 = pneg %p57
      %p252 = pneg %p81
      %p253 = pneg %p78
      %p254 = pneg %p102
      %p255 = pneg %p99
      %p256 = pneg %p123
      %p257 = pneg %p120
      %p258 = pneg %p144
      %p259 = pneg %p141
      %p260 = pneg %p165
      %p261 = pneg %p162
      %p262 = pneg %p191
      %p263 = pneg %p188
      %p264 = scmp.lt.s32.totalorder %s18, 1
      %s265 = scalar_select %p264, %s18, 1
      %s266 = smul.addr %s265, 32
      %s267 = smul.addr %s266, 8
      %s268 = scalar_lea.vmem %s7, %s267
      %p269 = scmp.lt.s32.totalorder %s18, 1
      %s270 = scalar_select %p269, %s18, 1
      %s271 = smul.addr %s270, 54
      %s272 = smul.addr %s271, 8
      %s273 = scalar_lea.vmem %s0, %s272
      %p274 = scmp.lt.s32.totalorder %s18, 1
      %s275 = scalar_select %p274, %s18, 1
      %s276 = smul.addr %s275, 32
      %s277 = smul.addr %s276, 8
      %s278 = scalar_lea.vmem %s7, %s277
      %vm280 = vcmask 261120
      %281 = vst.msk [vmem:[#allocation2] sm:$0xff] %vm280, 0.0
      %282 = vst.msk [vmem:[#allocation2 + $0x8] sm:$0xff] %vm280, 0.0
      %283 = vst.msk [vmem:[#allocation2 + $0x10] sm:$0xff] %vm280, 0.0
      %284 = vst.msk [vmem:[#allocation2 + $0x18] sm:$0xff] %vm280, 0.0
      %285 = vst.msk [vmem:[#allocation2 + $0x20] sm:$0xff] %vm280, 0.0
      %286 = vst.msk [vmem:[#allocation2 + $0x28] sm:$0xff] %vm280, 0.0
      %287 = vst.msk [vmem:[#allocation2 + $0x30] sm:$0xff] %vm280, 0.0
      %288 = vst.msk [vmem:[#allocation2 + $0x38] sm:$0xff] %vm280, 0.0
      %289 = vst.msk [vmem:[#allocation2 + $0x40] sm:$0xff] %vm280, 0.0
      %290 = vst.msk [vmem:[#allocation2 + $0x48] sm:$0xff] %vm280, 0.0
      %291 = vst.msk [vmem:[#allocation2 + $0x50] sm:$0xff] %vm280, 0.0
      %292 = vst.msk [vmem:[#allocation2 + $0x58] sm:$0xff] %vm280, 0.0
      %293 = vst.msk [vmem:[#allocation2 + $0x60] sm:$0xff] %vm280, 0.0
      %294 = vst.msk [vmem:[#allocation2 + $0x68] sm:$0xff] %vm280, 0.0
      %295 = vst.msk [vmem:[#allocation2 + $0x70] sm:$0xff] %vm280, 0.0
      %296 = vst.msk [vmem:[#allocation2 + $0x78] sm:$0xff] %vm280, 0.0
      %297 = vst.msk [vmem:[#allocation2 + $0x80] sm:$0xff] %vm280, 0.0
      %298 = vst.msk [vmem:[#allocation2 + $0x88] sm:$0xff] %vm280, 0.0
      %299 = vst.msk [vmem:[#allocation2 + $0x90] sm:$0xff] %vm280, 0.0
      %300 = vst.msk [vmem:[#allocation2 + $0x98] sm:$0xff] %vm280, 0.0
      %301 = vst.msk [vmem:[#allocation2 + $0xa0] sm:$0xff] %vm280, 0.0
      %302 = vst.msk [vmem:[#allocation2 + $0xa8] sm:$0xff] %vm280, 0.0
      %303 = vst.msk [vmem:[#allocation2 + $0xb0] sm:$0xff] %vm280, 0.0
      %304 = vst.msk [vmem:[#allocation2 + $0xb8] sm:$0xff] %vm280, 0.0
      %305 = vst.msk [vmem:[#allocation2 + $0xc0] sm:$0xff] %vm280, 0.0
      %306 = vst.msk [vmem:[#allocation2 + $0xc8] sm:$0xff] %vm280, 0.0
      %307 = vst.msk [vmem:[#allocation2 + $0xd0] sm:$0xff] %vm280, 0.0
      %308 = vst.msk [vmem:[#allocation2 + $0xd8] sm:$0xff] %vm280, 0.0
      %309 = vst.msk [vmem:[#allocation2 + $0xe0] sm:$0xff] %vm280, 0.0
      %310 = vst.msk [vmem:[#allocation2 + $0xe8] sm:$0xff] %vm280, 0.0
      %311 = vst.msk [vmem:[#allocation2 + $0xf0] sm:$0xff] %vm280, 0.0
      %312 = vst.msk [vmem:[#allocation2 + $0xf8] sm:$0xff] %vm280, 0.0
      %313 = vst.msk [vmem:[#allocation2 + $0x100] sm:$0xff] %vm280, 0.0
      %314 = vst.msk [vmem:[#allocation2 + $0x108] sm:$0xff] %vm280, 0.0
      %315 = vst.msk [vmem:[#allocation2 + $0x110] sm:$0xff] %vm280, 0.0
      %316 = vst.msk [vmem:[#allocation2 + $0x118] sm:$0xff] %vm280, 0.0
      %317 = vst.msk [vmem:[#allocation2 + $0x120] sm:$0xff] %vm280, 0.0
      %318 = vst.msk [vmem:[#allocation2 + $0x128] sm:$0xff] %vm280, 0.0
      %319 = vst.msk [vmem:[#allocation2 + $0x130] sm:$0xff] %vm280, 0.0
      %320 = vst.msk [vmem:[#allocation2 + $0x138] sm:$0xff] %vm280, 0.0
      %321 = vst.msk [vmem:[#allocation2 + $0x140] sm:$0xff] %vm280, 0.0
      %322 = vst.msk [vmem:[#allocation2 + $0x148] sm:$0xff] %vm280, 0.0
      %323 = vst.msk [vmem:[#allocation2 + $0x150] sm:$0xff] %vm280, 0.0
      %324 = vst.msk [vmem:[#allocation2 + $0x158] sm:$0xff] %vm280, 0.0
      %325 = vst.msk [vmem:[#allocation2 + $0x160] sm:$0xff] %vm280, 0.0
      %326 = vst.msk [vmem:[#allocation2 + $0x168] sm:$0xff] %vm280, 0.0
      %327 = vst.msk [vmem:[#allocation2 + $0x170] sm:$0xff] %vm280, 0.0
      %328 = vst.msk [vmem:[#allocation2 + $0x178] sm:$0xff] %vm280, 0.0
      %329 = vst.msk [vmem:[#allocation2 + $0x180] sm:$0xff] %vm280, 0.0
      %330 = vst.msk [vmem:[#allocation2 + $0x188] sm:$0xff] %vm280, 0.0
      %331 = vst.msk [vmem:[#allocation2 + $0x190] sm:$0xff] %vm280, 0.0
      %332 = vst.msk [vmem:[#allocation2 + $0x198] sm:$0xff] %vm280, 0.0
      %333 = vst.msk [vmem:[#allocation2 + $0x1a0] sm:$0xff] %vm280, 0.0
      %334 = vst.msk [vmem:[#allocation2 + $0x1a8] sm:$0xff] %vm280, 0.0
      %335 = vst.msk [vmem:[#allocation2 + $0x1b0] sm:$0xff] %vm280, 0.0
      %336 = vst.msk [vmem:[#allocation2 + $0x1b8] sm:$0xff] %vm280, 0.0
      %337 = vst.msk [vmem:[#allocation2 + $0x1c0] sm:$0xff] %vm280, 0.0
      %338 = vst.msk [vmem:[#allocation2 + $0x1c8] sm:$0xff] %vm280, 0.0
      %339 = vst.msk [vmem:[#allocation2 + $0x1d0] sm:$0xff] %vm280, 0.0
      %340 = vst.msk [vmem:[#allocation2 + $0x1d8] sm:$0xff] %vm280, 0.0
      %341 = vst.msk [vmem:[#allocation2 + $0x1e0] sm:$0xff] %vm280, 0.0
      %342 = vst.msk [vmem:[#allocation2 + $0x1e8] sm:$0xff] %vm280, 0.0
      %343 = vst.msk [vmem:[#allocation2 + $0x1f0] sm:$0xff] %vm280, 0.0
      %344 = vst.msk [vmem:[#allocation2 + $0x1f8] sm:$0xff] %vm280, 0.0
      %345 = vst.msk [vmem:[#allocation2 + $0x200] sm:$0xff] %vm280, 0.0
      %346 = vst.msk [vmem:[#allocation2 + $0x208] sm:$0xff] %vm280, 0.0
      %347 = vst.msk [vmem:[#allocation2 + $0x210] sm:$0xff] %vm280, 0.0
      %348 = vst.msk [vmem:[#allocation2 + $0x218] sm:$0xff] %vm280, 0.0
      %349 = vst.msk [vmem:[#allocation2 + $0x220] sm:$0xff] %vm280, 0.0
      %350 = vst.msk [vmem:[#allocation2 + $0x228] sm:$0xff] %vm280, 0.0
      %351 = vst.msk [vmem:[#allocation2 + $0x230] sm:$0xff] %vm280, 0.0
      %352 = vst.msk [vmem:[#allocation2 + $0x238] sm:$0xff] %vm280, 0.0
      %v353 = vld [vmem:[%s273] sm:$0xff]
      %v354 = vld [vmem:[%s273 + $0x8] sm:$0xff]
      %v355 = vld [vmem:[%s273 + $0x18] sm:$0xff]
      %v356 = vld [vmem:[%s273 + $0x20] sm:$0xff]
      %v357 = vld [vmem:[%s273 + $0x30] sm:$0xff]
      %v358 = vld [vmem:[%s273 + $0x38] sm:$0xff]
      %v359 = vld [vmem:[%s273 + $0x48] sm:$0xff]
      %v360 = vld [vmem:[%s273 + $0x50] sm:$0xff]
      %v361 = vld [vmem:[%s273 + $0x60] sm:$0xff]
      %v362 = vld [vmem:[%s273 + $0x68] sm:$0xff]
      %v363 = vld [vmem:[%s273 + $0x78] sm:$0xff]
      %v364 = vld [vmem:[%s273 + $0x80] sm:$0xff]
      %v365 = vld [vmem:[%s273 + $0x90] sm:$0xff]
      %v366 = vld [vmem:[%s273 + $0x98] sm:$0xff]
      %v367 = vld [vmem:[%s273 + $0xa8] sm:$0xff]
      %v368 = vld [vmem:[%s273 + $0xb0] sm:$0xff]
      %v369 = vld [vmem:[%s273 + $0xc0] sm:$0xff]
      %v370 = vld [vmem:[%s273 + $0xc8] sm:$0xff]
      %v371 = vld [vmem:[%s273 + $0xd8] sm:$0xff]
      %v372 = vld [vmem:[%s273 + $0xe0] sm:$0xff]
      %v373 = vld [vmem:[%s273 + $0xf0] sm:$0xff]
      %v374 = vld [vmem:[%s273 + $0xf8] sm:$0xff]
      %v375 = vld [vmem:[%s273 + $0x108] sm:$0xff]
      %v376 = vld [vmem:[%s273 + $0x110] sm:$0xff]
      %v377 = vld [vmem:[%s273 + $0x120] sm:$0xff]
      %v378 = vld [vmem:[%s273 + $0x128] sm:$0xff]
      %v379 = vld [vmem:[%s273 + $0x138] sm:$0xff]
      %v380 = vld [vmem:[%s273 + $0x140] sm:$0xff]
      %v381 = vld [vmem:[%s273 + $0x150] sm:$0xff]
      %v382 = vld [vmem:[%s273 + $0x158] sm:$0xff]
      %v383 = vld [vmem:[%s273 + $0x168] sm:$0xff]
      %v384 = vld [vmem:[%s273 + $0x170] sm:$0xff]
      %v385 = vpack.c.bf16 %v354, %v353
      %v386 = vpack.c.bf16 %v356, %v355
      %v387 = vpack.c.bf16 %v358, %v357
      %v388 = vpack.c.bf16 %v360, %v359
      %v389 = vpack.c.bf16 %v362, %v361
      %v390 = vpack.c.bf16 %v364, %v363
      %v391 = vpack.c.bf16 %v366, %v365
      %v392 = vpack.c.bf16 %v368, %v367
      %v393 = vpack.c.bf16 %v370, %v369
      %v394 = vpack.c.bf16 %v372, %v371
      %v395 = vpack.c.bf16 %v374, %v373
      %v396 = vpack.c.bf16 %v376, %v375
      %v397 = vpack.c.bf16 %v378, %v377
      %v398 = vpack.c.bf16 %v380, %v379
      %v399 = vpack.c.bf16 %v382, %v381
      %v400 = vpack.c.bf16 %v384, %v383
      %vm401 = vcmask 31744
      %402 = vst.msk [vmem:[#allocation3] sm:$0xff] %vm401, %v385
      %403 = vst.msk [vmem:[#allocation3 + $0x8] sm:$0xff] %vm401, %v386
      %404 = vst.msk [vmem:[#allocation3 + $0x10] sm:$0xff] %vm401, %v387
      %405 = vst.msk [vmem:[#allocation3 + $0x18] sm:$0xff] %vm401, %v388
      %406 = vst.msk [vmem:[#allocation3 + $0x20] sm:$0xff] %vm401, %v389
      %407 = vst.msk [vmem:[#allocation3 + $0x28] sm:$0xff] %vm401, %v390
      %408 = vst.msk [vmem:[#allocation3 + $0x30] sm:$0xff] %vm401, %v391
      %409 = vst.msk [vmem:[#allocation3 + $0x38] sm:$0xff] %vm401, %v392
      %410 = vst.msk [vmem:[#allocation3 + $0x40] sm:$0xff] %vm401, %v393
      %411 = vst.msk [vmem:[#allocation3 + $0x48] sm:$0xff] %vm401, %v394
      %412 = vst.msk [vmem:[#allocation3 + $0x50] sm:$0xff] %vm401, %v395
      %413 = vst.msk [vmem:[#allocation3 + $0x58] sm:$0xff] %vm401, %v396
      %414 = vst.msk [vmem:[#allocation3 + $0x60] sm:$0xff] %vm401, %v397
      %415 = vst.msk [vmem:[#allocation3 + $0x68] sm:$0xff] %vm401, %v398
      %416 = vst.msk [vmem:[#allocation3 + $0x70] sm:$0xff] %vm401, %v399
      %417 = vst.msk [vmem:[#allocation3 + $0x78] sm:$0xff] %vm401, %v400
      %v418 = vld [vmem:[%s273 + $0x1] sm:$0xff]
      %v419 = vld [vmem:[%s273 + $0x9] sm:$0xff]
      %v420 = vld [vmem:[%s273 + $0x19] sm:$0xff]
      %v421 = vld [vmem:[%s273 + $0x21] sm:$0xff]
      %v422 = vld [vmem:[%s273 + $0x31] sm:$0xff]
      %v423 = vld [vmem:[%s273 + $0x39] sm:$0xff]
      %v424 = vld [vmem:[%s273 + $0x49] sm:$0xff]
      %v425 = vld [vmem:[%s273 + $0x51] sm:$0xff]
      %v426 = vld [vmem:[%s273 + $0x61] sm:$0xff]
      %v427 = vld [vmem:[%s273 + $0x69] sm:$0xff]
      %v428 = vld [vmem:[%s273 + $0x79] sm:$0xff]
      %v429 = vld [vmem:[%s273 + $0x81] sm:$0xff]
      %v430 = vld [vmem:[%s273 + $0x91] sm:$0xff]
      %v431 = vld [vmem:[%s273 + $0x99] sm:$0xff]
      %v432 = vld [vmem:[%s273 + $0xa9] sm:$0xff]
      %v433 = vld [vmem:[%s273 + $0xb1] sm:$0xff]
      %v434 = vld [vmem:[%s273 + $0xc1] sm:$0xff]
      %v435 = vld [vmem:[%s273 + $0xc9] sm:$0xff]
      %v436 = vld [vmem:[%s273 + $0xd9] sm:$0xff]
      %v437 = vld [vmem:[%s273 + $0xe1] sm:$0xff]
      %v438 = vld [vmem:[%s273 + $0xf1] sm:$0xff]
      %v439 = vld [vmem:[%s273 + $0xf9] sm:$0xff]
      %v440 = vld [vmem:[%s273 + $0x109] sm:$0xff]
      %v441 = vld [vmem:[%s273 + $0x111] sm:$0xff]
      %v442 = vld [vmem:[%s273 + $0x121] sm:$0xff]
      %v443 = vld [vmem:[%s273 + $0x129] sm:$0xff]
      %v444 = vld [vmem:[%s273 + $0x139] sm:$0xff]
      %v445 = vld [vmem:[%s273 + $0x141] sm:$0xff]
      %v446 = vld [vmem:[%s273 + $0x151] sm:$0xff]
      %v447 = vld [vmem:[%s273 + $0x159] sm:$0xff]
      %v448 = vld [vmem:[%s273 + $0x169] sm:$0xff]
      %v449 = vld [vmem:[%s273 + $0x171] sm:$0xff]
      %v450 = vpack.c.bf16 %v419, %v418
      %v451 = vpack.c.bf16 %v421, %v420
      %v452 = vpack.c.bf16 %v423, %v422
      %v453 = vpack.c.bf16 %v425, %v424
      %v454 = vpack.c.bf16 %v427, %v426
      %v455 = vpack.c.bf16 %v429, %v428
      %v456 = vpack.c.bf16 %v431, %v430
      %v457 = vpack.c.bf16 %v433, %v432
      %v458 = vpack.c.bf16 %v435, %v434
      %v459 = vpack.c.bf16 %v437, %v436
      %v460 = vpack.c.bf16 %v439, %v438
      %v461 = vpack.c.bf16 %v441, %v440
      %v462 = vpack.c.bf16 %v443, %v442
      %v463 = vpack.c.bf16 %v445, %v444
      %v464 = vpack.c.bf16 %v447, %v446
      %v465 = vpack.c.bf16 %v449, %v448
      %482 = vrot.lane.b32.xlu0 %v450, 4
      %v483 = vpop.permute.xlu0 %482
      %484 = vrot.lane.b32.xlu0 %v451, 4
      %v485 = vpop.permute.xlu0 %484
      %486 = vrot.lane.b32.xlu0 %v452, 4
      %v487 = vpop.permute.xlu0 %486
      %488 = vrot.lane.b32.xlu0 %v453, 4
      %v489 = vpop.permute.xlu0 %488
      %490 = vrot.lane.b32.xlu0 %v454, 4
      %v491 = vpop.permute.xlu0 %490
      %492 = vrot.lane.b32.xlu0 %v455, 4
      %v493 = vpop.permute.xlu0 %492
      %494 = vrot.lane.b32.xlu0 %v456, 4
      %v495 = vpop.permute.xlu0 %494
      %496 = vrot.lane.b32.xlu0 %v457, 4
      %v497 = vpop.permute.xlu0 %496
      %498 = vrot.lane.b32.xlu0 %v458, 4
      %v499 = vpop.permute.xlu0 %498
      %500 = vrot.lane.b32.xlu0 %v459, 4
      %v501 = vpop.permute.xlu0 %500
      %502 = vrot.lane.b32.xlu0 %v460, 4
      %v503 = vpop.permute.xlu0 %502
      %504 = vrot.lane.b32.xlu0 %v461, 4
      %v505 = vpop.permute.xlu0 %504
      %506 = vrot.lane.b32.xlu0 %v462, 4
      %v507 = vpop.permute.xlu0 %506
      %508 = vrot.lane.b32.xlu0 %v463, 4
      %v509 = vpop.permute.xlu0 %508
      %510 = vrot.lane.b32.xlu0 %v464, 4
      %v511 = vpop.permute.xlu0 %510
      %512 = vrot.lane.b32.xlu0 %v465, 4
      %v513 = vpop.permute.xlu0 %512
      %vm530 = vcmask 64544
      %531 = vst.msk [vmem:[#allocation3] sm:$0xff] %vm530, %v483
      %532 = vst.msk [vmem:[#allocation3 + $0x8] sm:$0xff] %vm530, %v485
      %533 = vst.msk [vmem:[#allocation3 + $0x10] sm:$0xff] %vm530, %v487
      %534 = vst.msk [vmem:[#allocation3 + $0x18] sm:$0xff] %vm530, %v489
      %535 = vst.msk [vmem:[#allocation3 + $0x20] sm:$0xff] %vm530, %v491
      %536 = vst.msk [vmem:[#allocation3 + $0x28] sm:$0xff] %vm530, %v493
      %537 = vst.msk [vmem:[#allocation3 + $0x30] sm:$0xff] %vm530, %v495
      %538 = vst.msk [vmem:[#allocation3 + $0x38] sm:$0xff] %vm530, %v497
      %539 = vst.msk [vmem:[#allocation3 + $0x40] sm:$0xff] %vm530, %v499
      %540 = vst.msk [vmem:[#allocation3 + $0x48] sm:$0xff] %vm530, %v501
      %541 = vst.msk [vmem:[#allocation3 + $0x50] sm:$0xff] %vm530, %v503
      %542 = vst.msk [vmem:[#allocation3 + $0x58] sm:$0xff] %vm530, %v505
      %543 = vst.msk [vmem:[#allocation3 + $0x60] sm:$0xff] %vm530, %v507
      %544 = vst.msk [vmem:[#allocation3 + $0x68] sm:$0xff] %vm530, %v509
      %545 = vst.msk [vmem:[#allocation3 + $0x70] sm:$0xff] %vm530, %v511
      %546 = vst.msk [vmem:[#allocation3 + $0x78] sm:$0xff] %vm530, %v513
      %v547 = vld [vmem:[%s273 + $0x2] sm:$0xff]
      %v548 = vld [vmem:[%s273 + $0xa] sm:$0xff]
      %v549 = vld [vmem:[%s273 + $0x1a] sm:$0xff]
      %v550 = vld [vmem:[%s273 + $0x22] sm:$0xff]
      %v551 = vld [vmem:[%s273 + $0x32] sm:$0xff]
      %v552 = vld [vmem:[%s273 + $0x3a] sm:$0xff]
      %v553 = vld [vmem:[%s273 + $0x4a] sm:$0xff]
      %v554 = vld [vmem:[%s273 + $0x52] sm:$0xff]
      %v555 = vld [vmem:[%s273 + $0x62] sm:$0xff]
      %v556 = vld [vmem:[%s273 + $0x6a] sm:$0xff]
      %v557 = vld [vmem:[%s273 + $0x7a] sm:$0xff]
      %v558 = vld [vmem:[%s273 + $0x82] sm:$0xff]
      %v559 = vld [vmem:[%s273 + $0x92] sm:$0xff]
      %v560 = vld [vmem:[%s273 + $0x9a] sm:$0xff]
      %v561 = vld [vmem:[%s273 + $0xaa] sm:$0xff]
      %v562 = vld [vmem:[%s273 + $0xb2] sm:$0xff]
      %v563 = vld [vmem:[%s273 + $0xc2] sm:$0xff]
      %v564 = vld [vmem:[%s273 + $0xca] sm:$0xff]
      %v565 = vld [vmem:[%s273 + $0xda] sm:$0xff]
      %v566 = vld [vmem:[%s273 + $0xe2] sm:$0xff]
      %v567 = vld [vmem:[%s273 + $0xf2] sm:$0xff]
      %v568 = vld [vmem:[%s273 + $0xfa] sm:$0xff]
      %v569 = vld [vmem:[%s273 + $0x10a] sm:$0xff]
      %v570 = vld [vmem:[%s273 + $0x112] sm:$0xff]
      %v571 = vld [vmem:[%s273 + $0x122] sm:$0xff]
      %v572 = vld [vmem:[%s273 + $0x12a] sm:$0xff]
      %v573 = vld [vmem:[%s273 + $0x13a] sm:$0xff]
      %v574 = vld [vmem:[%s273 + $0x142] sm:$0xff]
      %v575 = vld [vmem:[%s273 + $0x152] sm:$0xff]
      %v576 = vld [vmem:[%s273 + $0x15a] sm:$0xff]
      %v577 = vld [vmem:[%s273 + $0x16a] sm:$0xff]
      %v578 = vld [vmem:[%s273 + $0x172] sm:$0xff]
      %v579 = vpack.c.bf16 %v548, %v547
      %v580 = vpack.c.bf16 %v550, %v549
      %v581 = vpack.c.bf16 %v552, %v551
      %v582 = vpack.c.bf16 %v554, %v553
      %v583 = vpack.c.bf16 %v556, %v555
      %v584 = vpack.c.bf16 %v558, %v557
      %v585 = vpack.c.bf16 %v560, %v559
      %v586 = vpack.c.bf16 %v562, %v561
      %v587 = vpack.c.bf16 %v564, %v563
      %v588 = vpack.c.bf16 %v566, %v565
      %v589 = vpack.c.bf16 %v568, %v567
      %v590 = vpack.c.bf16 %v570, %v569
      %v591 = vpack.c.bf16 %v572, %v571
      %v592 = vpack.c.bf16 %v574, %v573
      %v593 = vpack.c.bf16 %v576, %v575
      %v594 = vpack.c.bf16 %v578, %v577
      %611 = vrot.lane.b32.xlu0 %v579, 8
      %v612 = vpop.permute.xlu0 %611
      %613 = vrot.lane.b32.xlu0 %v580, 8
      %v614 = vpop.permute.xlu0 %613
      %615 = vrot.lane.b32.xlu0 %v581, 8
      %v616 = vpop.permute.xlu0 %615
      %617 = vrot.lane.b32.xlu0 %v582, 8
      %v618 = vpop.permute.xlu0 %617
      %619 = vrot.lane.b32.xlu0 %v583, 8
      %v620 = vpop.permute.xlu0 %619
      %621 = vrot.lane.b32.xlu0 %v584, 8
      %v622 = vpop.permute.xlu0 %621
      %623 = vrot.lane.b32.xlu0 %v585, 8
      %v624 = vpop.permute.xlu0 %623
      %625 = vrot.lane.b32.xlu0 %v586, 8
      %v626 = vpop.permute.xlu0 %625
      %627 = vrot.lane.b32.xlu0 %v587, 8
      %v628 = vpop.permute.xlu0 %627
      %629 = vrot.lane.b32.xlu0 %v588, 8
      %v630 = vpop.permute.xlu0 %629
      %631 = vrot.lane.b32.xlu0 %v589, 8
      %v632 = vpop.permute.xlu0 %631
      %633 = vrot.lane.b32.xlu0 %v590, 8
      %v634 = vpop.permute.xlu0 %633
      %635 = vrot.lane.b32.xlu0 %v591, 8
      %v636 = vpop.permute.xlu0 %635
      %637 = vrot.lane.b32.xlu0 %v592, 8
      %v638 = vpop.permute.xlu0 %637
      %639 = vrot.lane.b32.xlu0 %v593, 8
      %v640 = vpop.permute.xlu0 %639
      %641 = vrot.lane.b32.xlu0 %v594, 8
      %v642 = vpop.permute.xlu0 %641
      %vm659 = vcmask 97344
      %660 = vst.msk [vmem:[#allocation3] sm:$0xff] %vm659, %v612
      %661 = vst.msk [vmem:[#allocation3 + $0x8] sm:$0xff] %vm659, %v614
      %662 = vst.msk [vmem:[#allocation3 + $0x10] sm:$0xff] %vm659, %v616
      %663 = vst.msk [vmem:[#allocation3 + $0x18] sm:$0xff] %vm659, %v618
      %664 = vst.msk [vmem:[#allocation3 + $0x20] sm:$0xff] %vm659, %v620
      %665 = vst.msk [vmem:[#allocation3 + $0x28] sm:$0xff] %vm659, %v622
      %666 = vst.msk [vmem:[#allocation3 + $0x30] sm:$0xff] %vm659, %v624
      %667 = vst.msk [vmem:[#allocation3 + $0x38] sm:$0xff] %vm659, %v626
      %668 = vst.msk [vmem:[#allocation3 + $0x40] sm:$0xff] %vm659, %v628
      %669 = vst.msk [vmem:[#allocation3 + $0x48] sm:$0xff] %vm659, %v630
      %670 = vst.msk [vmem:[#allocation3 + $0x50] sm:$0xff] %vm659, %v632
      %671 = vst.msk [vmem:[#allocation3 + $0x58] sm:$0xff] %vm659, %v634
      %672 = vst.msk [vmem:[#allocation3 + $0x60] sm:$0xff] %vm659, %v636
      %673 = vst.msk [vmem:[#allocation3 + $0x68] sm:$0xff] %vm659, %v638
      %674 = vst.msk [vmem:[#allocation3 + $0x70] sm:$0xff] %vm659, %v640
      %675 = vst.msk [vmem:[#allocation3 + $0x78] sm:$0xff] %vm659, %v642
      %s676 = scalar_lea.vmem %s273, 24
      %v677 = vld [vmem:[%s676] sm:$0xff]
      %v678 = vld [vmem:[%s676 + $0x8] sm:$0xff]
      %v679 = vld [vmem:[%s676 + $0x18] sm:$0xff]
      %v680 = vld [vmem:[%s676 + $0x20] sm:$0xff]
      %v681 = vld [vmem:[%s676 + $0x30] sm:$0xff]
      %v682 = vld [vmem:[%s676 + $0x38] sm:$0xff]
      %v683 = vld [vmem:[%s676 + $0x48] sm:$0xff]
      %v684 = vld [vmem:[%s676 + $0x50] sm:$0xff]
      %v685 = vld [vmem:[%s676 + $0x60] sm:$0xff]
      %v686 = vld [vmem:[%s676 + $0x68] sm:$0xff]
      %v687 = vld [vmem:[%s676 + $0x78] sm:$0xff]
      %v688 = vld [vmem:[%s676 + $0x80] sm:$0xff]
      %v689 = vld [vmem:[%s676 + $0x90] sm:$0xff]
      %v690 = vld [vmem:[%s676 + $0x98] sm:$0xff]
      %v691 = vld [vmem:[%s676 + $0xa8] sm:$0xff]
      %v692 = vld [vmem:[%s676 + $0xb0] sm:$0xff]
      %v693 = vld [vmem:[%s676 + $0xc0] sm:$0xff]
      %v694 = vld [vmem:[%s676 + $0xc8] sm:$0xff]
      %v695 = vld [vmem:[%s676 + $0xd8] sm:$0xff]
      %v696 = vld [vmem:[%s676 + $0xe0] sm:$0xff]
      %v697 = vld [vmem:[%s676 + $0xf0] sm:$0xff]
      %v698 = vld [vmem:[%s676 + $0xf8] sm:$0xff]
      %v699 = vld [vmem:[%s676 + $0x108] sm:$0xff]
      %v700 = vld [vmem:[%s676 + $0x110] sm:$0xff]
      %v701 = vld [vmem:[%s676 + $0x120] sm:$0xff]
      %v702 = vld [vmem:[%s676 + $0x128] sm:$0xff]
      %v703 = vld [vmem:[%s676 + $0x138] sm:$0xff]
      %v704 = vld [vmem:[%s676 + $0x140] sm:$0xff]
      %v705 = vld [vmem:[%s676 + $0x150] sm:$0xff]
      %v706 = vld [vmem:[%s676 + $0x158] sm:$0xff]
      %v707 = vld [vmem:[%s676 + $0x168] sm:$0xff]
      %v708 = vld [vmem:[%s676 + $0x170] sm:$0xff]
      %v709 = vpack.c.bf16 %v678, %v677
      %v710 = vpack.c.bf16 %v680, %v679
      %v711 = vpack.c.bf16 %v682, %v681
      %v712 = vpack.c.bf16 %v684, %v683
      %v713 = vpack.c.bf16 %v686, %v685
      %v714 = vpack.c.bf16 %v688, %v687
      %v715 = vpack.c.bf16 %v690, %v689
      %v716 = vpack.c.bf16 %v692, %v691
      %v717 = vpack.c.bf16 %v694, %v693
      %v718 = vpack.c.bf16 %v696, %v695
      %v719 = vpack.c.bf16 %v698, %v697
      %v720 = vpack.c.bf16 %v700, %v699
      %v721 = vpack.c.bf16 %v702, %v701
      %v722 = vpack.c.bf16 %v704, %v703
      %v723 = vpack.c.bf16 %v706, %v705
      %v724 = vpack.c.bf16 %v708, %v707
      %741 = vrot.lane.b32.xlu0 %v709, 12
      %v742 = vpop.permute.xlu0 %741
      %743 = vrot.lane.b32.xlu0 %v710, 12
      %v744 = vpop.permute.xlu0 %743
      %745 = vrot.lane.b32.xlu0 %v711, 12
      %v746 = vpop.permute.xlu0 %745
      %747 = vrot.lane.b32.xlu0 %v712, 12
      %v748 = vpop.permute.xlu0 %747
      %749 = vrot.lane.b32.xlu0 %v713, 12
      %v750 = vpop.permute.xlu0 %749
      %751 = vrot.lane.b32.xlu0 %v714, 12
      %v752 = vpop.permute.xlu0 %751
      %753 = vrot.lane.b32.xlu0 %v715, 12
      %v754 = vpop.permute.xlu0 %753
      %755 = vrot.lane.b32.xlu0 %v716, 12
      %v756 = vpop.permute.xlu0 %755
      %757 = vrot.lane.b32.xlu0 %v717, 12
      %v758 = vpop.permute.xlu0 %757
      %759 = vrot.lane.b32.xlu0 %v718, 12
      %v760 = vpop.permute.xlu0 %759
      %761 = vrot.lane.b32.xlu0 %v719, 12
      %v762 = vpop.permute.xlu0 %761
      %763 = vrot.lane.b32.xlu0 %v720, 12
      %v764 = vpop.permute.xlu0 %763
      %765 = vrot.lane.b32.xlu0 %v721, 12
      %v766 = vpop.permute.xlu0 %765
      %767 = vrot.lane.b32.xlu0 %v722, 12
      %v768 = vpop.permute.xlu0 %767
      %769 = vrot.lane.b32.xlu0 %v723, 12
      %v770 = vpop.permute.xlu0 %769
      %771 = vrot.lane.b32.xlu0 %v724, 12
      %v772 = vpop.permute.xlu0 %771
      %vm789 = vcmask 130144
      %790 = vst.msk [vmem:[#allocation3] sm:$0xff] %vm789, %v742
      %791 = vst.msk [vmem:[#allocation3 + $0x8] sm:$0xff] %vm789, %v744
      %792 = vst.msk [vmem:[#allocation3 + $0x10] sm:$0xff] %vm789, %v746
      %793 = vst.msk [vmem:[#allocation3 + $0x18] sm:$0xff] %vm789, %v748
      %794 = vst.msk [vmem:[#allocation3 + $0x20] sm:$0xff] %vm789, %v750
      %795 = vst.msk [vmem:[#allocation3 + $0x28] sm:$0xff] %vm789, %v752
      %796 = vst.msk [vmem:[#allocation3 + $0x30] sm:$0xff] %vm789, %v754
      %797 = vst.msk [vmem:[#allocation3 + $0x38] sm:$0xff] %vm789, %v756
      %798 = vst.msk [vmem:[#allocation3 + $0x40] sm:$0xff] %vm789, %v758
      %799 = vst.msk [vmem:[#allocation3 + $0x48] sm:$0xff] %vm789, %v760
      %800 = vst.msk [vmem:[#allocation3 + $0x50] sm:$0xff] %vm789, %v762
      %801 = vst.msk [vmem:[#allocation3 + $0x58] sm:$0xff] %vm789, %v764
      %802 = vst.msk [vmem:[#allocation3 + $0x60] sm:$0xff] %vm789, %v766
      %803 = vst.msk [vmem:[#allocation3 + $0x68] sm:$0xff] %vm789, %v768
      %804 = vst.msk [vmem:[#allocation3 + $0x70] sm:$0xff] %vm789, %v770
      %805 = vst.msk [vmem:[#allocation3 + $0x78] sm:$0xff] %vm789, %v772
      %v806 = vld [vmem:[%s676 + $0x1] sm:$0xff]
      %v807 = vld [vmem:[%s676 + $0x9] sm:$0xff]
      %v808 = vld [vmem:[%s676 + $0x19] sm:$0xff]
      %v809 = vld [vmem:[%s676 + $0x21] sm:$0xff]
      %v810 = vld [vmem:[%s676 + $0x31] sm:$0xff]
      %v811 = vld [vmem:[%s676 + $0x39] sm:$0xff]
      %v812 = vld [vmem:[%s676 + $0x49] sm:$0xff]
      %v813 = vld [vmem:[%s676 + $0x51] sm:$0xff]
      %v814 = vld [vmem:[%s676 + $0x61] sm:$0xff]
      %v815 = vld [vmem:[%s676 + $0x69] sm:$0xff]
      %v816 = vld [vmem:[%s676 + $0x79] sm:$0xff]
      %v817 = vld [vmem:[%s676 + $0x81] sm:$0xff]
      %v818 = vld [vmem:[%s676 + $0x91] sm:$0xff]
      %v819 = vld [vmem:[%s676 + $0x99] sm:$0xff]
      %v820 = vld [vmem:[%s676 + $0xa9] sm:$0xff]
      %v821 = vld [vmem:[%s676 + $0xb1] sm:$0xff]
      %v822 = vld [vmem:[%s676 + $0xc1] sm:$0xff]
      %v823 = vld [vmem:[%s676 + $0xc9] sm:$0xff]
      %v824 = vld [vmem:[%s676 + $0xd9] sm:$0xff]
      %v825 = vld [vmem:[%s676 + $0xe1] sm:$0xff]
      %v826 = vld [vmem:[%s676 + $0xf1] sm:$0xff]
      %v827 = vld [vmem:[%s676 + $0xf9] sm:$0xff]
      %v828 = vld [vmem:[%s676 + $0x109] sm:$0xff]
      %v829 = vld [vmem:[%s676 + $0x111] sm:$0xff]
      %v830 = vld [vmem:[%s676 + $0x121] sm:$0xff]
      %v831 = vld [vmem:[%s676 + $0x129] sm:$0xff]
      %v832 = vld [vmem:[%s676 + $0x139] sm:$0xff]
      %v833 = vld [vmem:[%s676 + $0x141] sm:$0xff]
      %v834 = vld [vmem:[%s676 + $0x151] sm:$0xff]
      %v835 = vld [vmem:[%s676 + $0x159] sm:$0xff]
      %v836 = vld [vmem:[%s676 + $0x169] sm:$0xff]
      %v837 = vld [vmem:[%s676 + $0x171] sm:$0xff]
      %v838 = vpack.c.bf16 %v807, %v806
      %v839 = vpack.c.bf16 %v809, %v808
      %v840 = vpack.c.bf16 %v811, %v810
      %v841 = vpack.c.bf16 %v813, %v812
      %v842 = vpack.c.bf16 %v815, %v814
      %v843 = vpack.c.bf16 %v817, %v816
      %v844 = vpack.c.bf16 %v819, %v818
      %v845 = vpack.c.bf16 %v821, %v820
      %v846 = vpack.c.bf16 %v823, %v822
      %v847 = vpack.c.bf16 %v825, %v824
      %v848 = vpack.c.bf16 %v827, %v826
      %v849 = vpack.c.bf16 %v829, %v828
      %v850 = vpack.c.bf16 %v831, %v830
      %v851 = vpack.c.bf16 %v833, %v832
      %v852 = vpack.c.bf16 %v835, %v834
      %v853 = vpack.c.bf16 %v837, %v836
      %870 = vrot.lane.b32.xlu0 %v838, 16
      %v871 = vpop.permute.xlu0 %870
      %872 = vrot.lane.b32.xlu0 %v839, 16
      %v873 = vpop.permute.xlu0 %872
      %874 = vrot.lane.b32.xlu0 %v840, 16
      %v875 = vpop.permute.xlu0 %874
      %876 = vrot.lane.b32.xlu0 %v841, 16
      %v877 = vpop.permute.xlu0 %876
      %878 = vrot.lane.b32.xlu0 %v842, 16
      %v879 = vpop.permute.xlu0 %878
      %880 = vrot.lane.b32.xlu0 %v843, 16
      %v881 = vpop.permute.xlu0 %880
      %882 = vrot.lane.b32.xlu0 %v844, 16
      %v883 = vpop.permute.xlu0 %882
      %884 = vrot.lane.b32.xlu0 %v845, 16
      %v885 = vpop.permute.xlu0 %884
      %886 = vrot.lane.b32.xlu0 %v846, 16
      %v887 = vpop.permute.xlu0 %886
      %888 = vrot.lane.b32.xlu0 %v847, 16
      %v889 = vpop.permute.xlu0 %888
      %890 = vrot.lane.b32.xlu0 %v848, 16
      %v891 = vpop.permute.xlu0 %890
      %892 = vrot.lane.b32.xlu0 %v849, 16
      %v893 = vpop.permute.xlu0 %892
      %894 = vrot.lane.b32.xlu0 %v850, 16
      %v895 = vpop.permute.xlu0 %894
      %896 = vrot.lane.b32.xlu0 %v851, 16
      %v897 = vpop.permute.xlu0 %896
      %898 = vrot.lane.b32.xlu0 %v852, 16
      %v899 = vpop.permute.xlu0 %898
      %900 = vrot.lane.b32.xlu0 %v853, 16
      %v901 = vpop.permute.xlu0 %900
      %vm918 = vcmask 162944
      %919 = vst.msk [vmem:[#allocation3] sm:$0xff] %vm918, %v871
      %920 = vst.msk [vmem:[#allocation3 + $0x8] sm:$0xff] %vm918, %v873
      %921 = vst.msk [vmem:[#allocation3 + $0x10] sm:$0xff] %vm918, %v875
      %922 = vst.msk [vmem:[#allocation3 + $0x18] sm:$0xff] %vm918, %v877
      %923 = vst.msk [vmem:[#allocation3 + $0x20] sm:$0xff] %vm918, %v879
      %924 = vst.msk [vmem:[#allocation3 + $0x28] sm:$0xff] %vm918, %v881
      %925 = vst.msk [vmem:[#allocation3 + $0x30] sm:$0xff] %vm918, %v883
      %926 = vst.msk [vmem:[#allocation3 + $0x38] sm:$0xff] %vm918, %v885
      %927 = vst.msk [vmem:[#allocation3 + $0x40] sm:$0xff] %vm918, %v887
      %928 = vst.msk [vmem:[#allocation3 + $0x48] sm:$0xff] %vm918, %v889
      %929 = vst.msk [vmem:[#allocation3 + $0x50] sm:$0xff] %vm918, %v891
      %930 = vst.msk [vmem:[#allocation3 + $0x58] sm:$0xff] %vm918, %v893
      %931 = vst.msk [vmem:[#allocation3 + $0x60] sm:$0xff] %vm918, %v895
      %932 = vst.msk [vmem:[#allocation3 + $0x68] sm:$0xff] %vm918, %v897
      %933 = vst.msk [vmem:[#allocation3 + $0x70] sm:$0xff] %vm918, %v899
      %934 = vst.msk [vmem:[#allocation3 + $0x78] sm:$0xff] %vm918, %v901
      %v935 = vld [vmem:[%s676 + $0x2] sm:$0xff]
      %v936 = vld [vmem:[%s676 + $0xa] sm:$0xff]
      %v937 = vld [vmem:[%s676 + $0x1a] sm:$0xff]
      %v938 = vld [vmem:[%s676 + $0x22] sm:$0xff]
      %v939 = vld [vmem:[%s676 + $0x32] sm:$0xff]
      %v940 = vld [vmem:[%s676 + $0x3a] sm:$0xff]
      %v941 = vld [vmem:[%s676 + $0x4a] sm:$0xff]
      %v942 = vld [vmem:[%s676 + $0x52] sm:$0xff]
      %v943 = vld [vmem:[%s676 + $0x62] sm:$0xff]
      %v944 = vld [vmem:[%s676 + $0x6a] sm:$0xff]
      %v945 = vld [vmem:[%s676 + $0x7a] sm:$0xff]
      %v946 = vld [vmem:[%s676 + $0x82] sm:$0xff]
      %v947 = vld [vmem:[%s676 + $0x92] sm:$0xff]
      %v948 = vld [vmem:[%s676 + $0x9a] sm:$0xff]
      %v949 = vld [vmem:[%s676 + $0xaa] sm:$0xff]
      %v950 = vld [vmem:[%s676 + $0xb2] sm:$0xff]
      %v951 = vld [vmem:[%s676 + $0xc2] sm:$0xff]
      %v952 = vld [vmem:[%s676 + $0xca] sm:$0xff]
      %v953 = vld [vmem:[%s676 + $0xda] sm:$0xff]
      %v954 = vld [vmem:[%s676 + $0xe2] sm:$0xff]
      %v955 = vld [vmem:[%s676 + $0xf2] sm:$0xff]
      %v956 = vld [vmem:[%s676 + $0xfa] sm:$0xff]
      %v957 = vld [vmem:[%s676 + $0x10a] sm:$0xff]
      %v958 = vld [vmem:[%s676 + $0x112] sm:$0xff]
      %v959 = vld [vmem:[%s676 + $0x122] sm:$0xff]
      %v960 = vld [vmem:[%s676 + $0x12a] sm:$0xff]
      %v961 = vld [vmem:[%s676 + $0x13a] sm:$0xff]
      %v962 = vld [vmem:[%s676 + $0x142] sm:$0xff]
      %v963 = vld [vmem:[%s676 + $0x152] sm:$0xff]
      %v964 = vld [vmem:[%s676 + $0x15a] sm:$0xff]
      %v965 = vld [vmem:[%s676 + $0x16a] sm:$0xff]
      %v966 = vld [vmem:[%s676 + $0x172] sm:$0xff]
      %v967 = vpack.c.bf16 %v936, %v935
      %v968 = vpack.c.bf16 %v938, %v937
      %v969 = vpack.c.bf16 %v940, %v939
      %v970 = vpack.c.bf16 %v942, %v941
      %v971 = vpack.c.bf16 %v944, %v943
      %v972 = vpack.c.bf16 %v946, %v945
      %v973 = vpack.c.bf16 %v948, %v947
      %v974 = vpack.c.bf16 %v950, %v949
      %v975 = vpack.c.bf16 %v952, %v951
      %v976 = vpack.c.bf16 %v954, %v953
      %v977 = vpack.c.bf16 %v956, %v955
      %v978 = vpack.c.bf16 %v958, %v957
      %v979 = vpack.c.bf16 %v960, %v959
      %v980 = vpack.c.bf16 %v962, %v961
      %v981 = vpack.c.bf16 %v964, %v963
      %v982 = vpack.c.bf16 %v966, %v965
      %999 = vrot.lane.b32.xlu0 %v967, 20
      %v1000 = vpop.permute.xlu0 %999
      %1001 = vrot.lane.b32.xlu0 %v968, 20
      %v1002 = vpop.permute.xlu0 %1001
      %1003 = vrot.lane.b32.xlu0 %v969, 20
      %v1004 = vpop.permute.xlu0 %1003
      %1005 = vrot.lane.b32.xlu0 %v970, 20
      %v1006 = vpop.permute.xlu0 %1005
      %1007 = vrot.lane.b32.xlu0 %v971, 20
      %v1008 = vpop.permute.xlu0 %1007
      %1009 = vrot.lane.b32.xlu0 %v972, 20
      %v1010 = vpop.permute.xlu0 %1009
      %1011 = vrot.lane.b32.xlu0 %v973, 20
      %v1012 = vpop.permute.xlu0 %1011
      %1013 = vrot.lane.b32.xlu0 %v974, 20
      %v1014 = vpop.permute.xlu0 %1013
      %1015 = vrot.lane.b32.xlu0 %v975, 20
      %v1016 = vpop.permute.xlu0 %1015
      %1017 = vrot.lane.b32.xlu0 %v976, 20
      %v1018 = vpop.permute.xlu0 %1017
      %1019 = vrot.lane.b32.xlu0 %v977, 20
      %v1020 = vpop.permute.xlu0 %1019
      %1021 = vrot.lane.b32.xlu0 %v978, 20
      %v1022 = vpop.permute.xlu0 %1021
      %1023 = vrot.lane.b32.xlu0 %v979, 20
      %v1024 = vpop.permute.xlu0 %1023
      %1025 = vrot.lane.b32.xlu0 %v980, 20
      %v1026 = vpop.permute.xlu0 %1025
      %1027 = vrot.lane.b32.xlu0 %v981, 20
      %v1028 = vpop.permute.xlu0 %1027
      %1029 = vrot.lane.b32.xlu0 %v982, 20
      %v1030 = vpop.permute.xlu0 %1029
      %vm1047 = vcmask 195744
      %1048 = vst.msk [vmem:[#allocation3] sm:$0xff] %vm1047, %v1000
      %1049 = vst.msk [vmem:[#allocation3 + $0x8] sm:$0xff] %vm1047, %v1002
      %1050 = vst.msk [vmem:[#allocation3 + $0x10] sm:$0xff] %vm1047, %v1004
      %1051 = vst.msk [vmem:[#allocation3 + $0x18] sm:$0xff] %vm1047, %v1006
      %1052 = vst.msk [vmem:[#allocation3 + $0x20] sm:$0xff] %vm1047, %v1008
      %1053 = vst.msk [vmem:[#allocation3 + $0x28] sm:$0xff] %vm1047, %v1010
      %1054 = vst.msk [vmem:[#allocation3 + $0x30] sm:$0xff] %vm1047, %v1012
      %1055 = vst.msk [vmem:[#allocation3 + $0x38] sm:$0xff] %vm1047, %v1014
      %1056 = vst.msk [vmem:[#allocation3 + $0x40] sm:$0xff] %vm1047, %v1016
      %1057 = vst.msk [vmem:[#allocation3 + $0x48] sm:$0xff] %vm1047, %v1018
      %1058 = vst.msk [vmem:[#allocation3 + $0x50] sm:$0xff] %vm1047, %v1020
      %1059 = vst.msk [vmem:[#allocation3 + $0x58] sm:$0xff] %vm1047, %v1022
      %1060 = vst.msk [vmem:[#allocation3 + $0x60] sm:$0xff] %vm1047, %v1024
      %1061 = vst.msk [vmem:[#allocation3 + $0x68] sm:$0xff] %vm1047, %v1026
      %1062 = vst.msk [vmem:[#allocation3 + $0x70] sm:$0xff] %vm1047, %v1028
      %1063 = vst.msk [vmem:[#allocation3 + $0x78] sm:$0xff] %vm1047, %v1030
      %s1064 = scalar_lea.vmem %s273, 48
      %v1065 = vld [vmem:[%s1064] sm:$0xff]
      %v1066 = vld [vmem:[%s1064 + $0x8] sm:$0xff]
      %v1067 = vld [vmem:[%s1064 + $0x18] sm:$0xff]
      %v1068 = vld [vmem:[%s1064 + $0x20] sm:$0xff]
      %v1069 = vld [vmem:[%s1064 + $0x30] sm:$0xff]
      %v1070 = vld [vmem:[%s1064 + $0x38] sm:$0xff]
      %v1071 = vld [vmem:[%s1064 + $0x48] sm:$0xff]
      %v1072 = vld [vmem:[%s1064 + $0x50] sm:$0xff]
      %v1073 = vld [vmem:[%s1064 + $0x60] sm:$0xff]
      %v1074 = vld [vmem:[%s1064 + $0x68] sm:$0xff]
      %v1075 = vld [vmem:[%s1064 + $0x78] sm:$0xff]
      %v1076 = vld [vmem:[%s1064 + $0x80] sm:$0xff]
      %v1077 = vld [vmem:[%s1064 + $0x90] sm:$0xff]
      %v1078 = vld [vmem:[%s1064 + $0x98] sm:$0xff]
      %v1079 = vld [vmem:[%s1064 + $0xa8] sm:$0xff]
      %v1080 = vld [vmem:[%s1064 + $0xb0] sm:$0xff]
      %v1081 = vld [vmem:[%s1064 + $0xc0] sm:$0xff]
      %v1082 = vld [vmem:[%s1064 + $0xc8] sm:$0xff]
      %v1083 = vld [vmem:[%s1064 + $0xd8] sm:$0xff]
      %v1084 = vld [vmem:[%s1064 + $0xe0] sm:$0xff]
      %v1085 = vld [vmem:[%s1064 + $0xf0] sm:$0xff]
      %v1086 = vld [vmem:[%s1064 + $0xf8] sm:$0xff]
      %v1087 = vld [vmem:[%s1064 + $0x108] sm:$0xff]
      %v1088 = vld [vmem:[%s1064 + $0x110] sm:$0xff]
      %v1089 = vld [vmem:[%s1064 + $0x120] sm:$0xff]
      %v1090 = vld [vmem:[%s1064 + $0x128] sm:$0xff]
      %v1091 = vld [vmem:[%s1064 + $0x138] sm:$0xff]
      %v1092 = vld [vmem:[%s1064 + $0x140] sm:$0xff]
      %v1093 = vld [vmem:[%s1064 + $0x150] sm:$0xff]
      %v1094 = vld [vmem:[%s1064 + $0x158] sm:$0xff]
      %v1095 = vld [vmem:[%s1064 + $0x168] sm:$0xff]
      %v1096 = vld [vmem:[%s1064 + $0x170] sm:$0xff]
      %v1097 = vpack.c.bf16 %v1066, %v1065
      %v1098 = vpack.c.bf16 %v1068, %v1067
      %v1099 = vpack.c.bf16 %v1070, %v1069
      %v1100 = vpack.c.bf16 %v1072, %v1071
      %v1101 = vpack.c.bf16 %v1074, %v1073
      %v1102 = vpack.c.bf16 %v1076, %v1075
      %v1103 = vpack.c.bf16 %v1078, %v1077
      %v1104 = vpack.c.bf16 %v1080, %v1079
      %v1105 = vpack.c.bf16 %v1082, %v1081
      %v1106 = vpack.c.bf16 %v1084, %v1083
      %v1107 = vpack.c.bf16 %v1086, %v1085
      %v1108 = vpack.c.bf16 %v1088, %v1087
      %v1109 = vpack.c.bf16 %v1090, %v1089
      %v1110 = vpack.c.bf16 %v1092, %v1091
      %v1111 = vpack.c.bf16 %v1094, %v1093
      %v1112 = vpack.c.bf16 %v1096, %v1095
      %1129 = vrot.lane.b32.xlu0 %v1097, 24
      %v1130 = vpop.permute.xlu0 %1129
      %1131 = vrot.lane.b32.xlu0 %v1098, 24
      %v1132 = vpop.permute.xlu0 %1131
      %1133 = vrot.lane.b32.xlu0 %v1099, 24
      %v1134 = vpop.permute.xlu0 %1133
      %1135 = vrot.lane.b32.xlu0 %v1100, 24
      %v1136 = vpop.permute.xlu0 %1135
      %1137 = vrot.lane.b32.xlu0 %v1101, 24
      %v1138 = vpop.permute.xlu0 %1137
      %1139 = vrot.lane.b32.xlu0 %v1102, 24
      %v1140 = vpop.permute.xlu0 %1139
      %1141 = vrot.lane.b32.xlu0 %v1103, 24
      %v1142 = vpop.permute.xlu0 %1141
      %1143 = vrot.lane.b32.xlu0 %v1104, 24
      %v1144 = vpop.permute.xlu0 %1143
      %1145 = vrot.lane.b32.xlu0 %v1105, 24
      %v1146 = vpop.permute.xlu0 %1145
      %1147 = vrot.lane.b32.xlu0 %v1106, 24
      %v1148 = vpop.permute.xlu0 %1147
      %1149 = vrot.lane.b32.xlu0 %v1107, 24
      %v1150 = vpop.permute.xlu0 %1149
      %1151 = vrot.lane.b32.xlu0 %v1108, 24
      %v1152 = vpop.permute.xlu0 %1151
      %1153 = vrot.lane.b32.xlu0 %v1109, 24
      %v1154 = vpop.permute.xlu0 %1153
      %1155 = vrot.lane.b32.xlu0 %v1110, 24
      %v1156 = vpop.permute.xlu0 %1155
      %1157 = vrot.lane.b32.xlu0 %v1111, 24
      %v1158 = vpop.permute.xlu0 %1157
      %1159 = vrot.lane.b32.xlu0 %v1112, 24
      %v1160 = vpop.permute.xlu0 %1159
      %vm1177 = vcmask 228544
      %1178 = vst.msk [vmem:[#allocation3] sm:$0xff] %vm1177, %v1130
      %1179 = vst.msk [vmem:[#allocation3 + $0x8] sm:$0xff] %vm1177, %v1132
      %1180 = vst.msk [vmem:[#allocation3 + $0x10] sm:$0xff] %vm1177, %v1134
      %1181 = vst.msk [vmem:[#allocation3 + $0x18] sm:$0xff] %vm1177, %v1136
      %1182 = vst.msk [vmem:[#allocation3 + $0x20] sm:$0xff] %vm1177, %v1138
      %1183 = vst.msk [vmem:[#allocation3 + $0x28] sm:$0xff] %vm1177, %v1140
      %1184 = vst.msk [vmem:[#allocation3 + $0x30] sm:$0xff] %vm1177, %v1142
      %1185 = vst.msk [vmem:[#allocation3 + $0x38] sm:$0xff] %vm1177, %v1144
      %1186 = vst.msk [vmem:[#allocation3 + $0x40] sm:$0xff] %vm1177, %v1146
      %1187 = vst.msk [vmem:[#allocation3 + $0x48] sm:$0xff] %vm1177, %v1148
      %1188 = vst.msk [vmem:[#allocation3 + $0x50] sm:$0xff] %vm1177, %v1150
      %1189 = vst.msk [vmem:[#allocation3 + $0x58] sm:$0xff] %vm1177, %v1152
      %1190 = vst.msk [vmem:[#allocation3 + $0x60] sm:$0xff] %vm1177, %v1154
      %1191 = vst.msk [vmem:[#allocation3 + $0x68] sm:$0xff] %vm1177, %v1156
      %1192 = vst.msk [vmem:[#allocation3 + $0x70] sm:$0xff] %vm1177, %v1158
      %1193 = vst.msk [vmem:[#allocation3 + $0x78] sm:$0xff] %vm1177, %v1160
      %v1194 = vld [vmem:[%s1064 + $0x1] sm:$0xff]
      %v1195 = vld [vmem:[%s1064 + $0x9] sm:$0xff]
      %v1196 = vld [vmem:[%s1064 + $0x19] sm:$0xff]
      %v1197 = vld [vmem:[%s1064 + $0x21] sm:$0xff]
      %v1198 = vld [vmem:[%s1064 + $0x31] sm:$0xff]
      %v1199 = vld [vmem:[%s1064 + $0x39] sm:$0xff]
      %v1200 = vld [vmem:[%s1064 + $0x49] sm:$0xff]
      %v1201 = vld [vmem:[%s1064 + $0x51] sm:$0xff]
      %v1202 = vld [vmem:[%s1064 + $0x61] sm:$0xff]
      %v1203 = vld [vmem:[%s1064 + $0x69] sm:$0xff]
      %v1204 = vld [vmem:[%s1064 + $0x79] sm:$0xff]
      %v1205 = vld [vmem:[%s1064 + $0x81] sm:$0xff]
      %v1206 = vld [vmem:[%s1064 + $0x91] sm:$0xff]
      %v1207 = vld [vmem:[%s1064 + $0x99] sm:$0xff]
      %v1208 = vld [vmem:[%s1064 + $0xa9] sm:$0xff]
      %v1209 = vld [vmem:[%s1064 + $0xb1] sm:$0xff]
      %v1210 = vld [vmem:[%s1064 + $0xc1] sm:$0xff]
      %v1211 = vld [vmem:[%s1064 + $0xc9] sm:$0xff]
      %v1212 = vld [vmem:[%s1064 + $0xd9] sm:$0xff]
      %v1213 = vld [vmem:[%s1064 + $0xe1] sm:$0xff]
      %v1214 = vld [vmem:[%s1064 + $0xf1] sm:$0xff]
      %v1215 = vld [vmem:[%s1064 + $0xf9] sm:$0xff]
      %v1216 = vld [vmem:[%s1064 + $0x109] sm:$0xff]
      %v1217 = vld [vmem:[%s1064 + $0x111] sm:$0xff]
      %v1218 = vld [vmem:[%s1064 + $0x121] sm:$0xff]
      %v1219 = vld [vmem:[%s1064 + $0x129] sm:$0xff]
      %v1220 = vld [vmem:[%s1064 + $0x139] sm:$0xff]
      %v1221 = vld [vmem:[%s1064 + $0x141] sm:$0xff]
      %v1222 = vld [vmem:[%s1064 + $0x151] sm:$0xff]
      %v1223 = vld [vmem:[%s1064 + $0x159] sm:$0xff]
      %v1224 = vld [vmem:[%s1064 + $0x169] sm:$0xff]
      %v1225 = vld [vmem:[%s1064 + $0x171] sm:$0xff]
      %v1226 = vpack.c.bf16 %v1195, %v1194
      %v1227 = vpack.c.bf16 %v1197, %v1196
      %v1228 = vpack.c.bf16 %v1199, %v1198
      %v1229 = vpack.c.bf16 %v1201, %v1200
      %v1230 = vpack.c.bf16 %v1203, %v1202
      %v1231 = vpack.c.bf16 %v1205, %v1204
      %v1232 = vpack.c.bf16 %v1207, %v1206
      %v1233 = vpack.c.bf16 %v1209, %v1208
      %v1234 = vpack.c.bf16 %v1211, %v1210
      %v1235 = vpack.c.bf16 %v1213, %v1212
      %v1236 = vpack.c.bf16 %v1215, %v1214
      %v1237 = vpack.c.bf16 %v1217, %v1216
      %v1238 = vpack.c.bf16 %v1219, %v1218
      %v1239 = vpack.c.bf16 %v1221, %v1220
      %v1240 = vpack.c.bf16 %v1223, %v1222
      %v1241 = vpack.c.bf16 %v1225, %v1224
      %1258 = vrot.lane.b32.xlu0 %v1226, 28
      %v1259 = vpop.permute.xlu0 %1258
      %1260 = vrot.lane.b32.xlu0 %v1227, 28
      %v1261 = vpop.permute.xlu0 %1260
      %1262 = vrot.lane.b32.xlu0 %v1228, 28
      %v1263 = vpop.permute.xlu0 %1262
      %1264 = vrot.lane.b32.xlu0 %v1229, 28
      %v1265 = vpop.permute.xlu0 %1264
      %1266 = vrot.lane.b32.xlu0 %v1230, 28
      %v1267 = vpop.permute.xlu0 %1266
      %1268 = vrot.lane.b32.xlu0 %v1231, 28
      %v1269 = vpop.permute.xlu0 %1268
      %1270 = vrot.lane.b32.xlu0 %v1232, 28
      %v1271 = vpop.permute.xlu0 %1270
      %1272 = vrot.lane.b32.xlu0 %v1233, 28
      %v1273 = vpop.permute.xlu0 %1272
      %1274 = vrot.lane.b32.xlu0 %v1234, 28
      %v1275 = vpop.permute.xlu0 %1274
      %1276 = vrot.lane.b32.xlu0 %v1235, 28
      %v1277 = vpop.permute.xlu0 %1276
      %1278 = vrot.lane.b32.xlu0 %v1236, 28
      %v1279 = vpop.permute.xlu0 %1278
      %1280 = vrot.lane.b32.xlu0 %v1237, 28
      %v1281 = vpop.permute.xlu0 %1280
      %1282 = vrot.lane.b32.xlu0 %v1238, 28
      %v1283 = vpop.permute.xlu0 %1282
      %1284 = vrot.lane.b32.xlu0 %v1239, 28
      %v1285 = vpop.permute.xlu0 %1284
      %1286 = vrot.lane.b32.xlu0 %v1240, 28
      %v1287 = vpop.permute.xlu0 %1286
      %1288 = vrot.lane.b32.xlu0 %v1241, 28
      %v1289 = vpop.permute.xlu0 %1288
      %vm1306 = vcmask 261344
      %1307 = vst.msk [vmem:[#allocation3] sm:$0xff] %vm1306, %v1259
      %1308 = vst.msk [vmem:[#allocation3 + $0x8] sm:$0xff] %vm1306, %v1261
      %1309 = vst.msk [vmem:[#allocation3 + $0x10] sm:$0xff] %vm1306, %v1263
      %1310 = vst.msk [vmem:[#allocation3 + $0x18] sm:$0xff] %vm1306, %v1265
      %1311 = vst.msk [vmem:[#allocation3 + $0x20] sm:$0xff] %vm1306, %v1267
      %1312 = vst.msk [vmem:[#allocation3 + $0x28] sm:$0xff] %vm1306, %v1269
      %1313 = vst.msk [vmem:[#allocation3 + $0x30] sm:$0xff] %vm1306, %v1271
      %1314 = vst.msk [vmem:[#allocation3 + $0x38] sm:$0xff] %vm1306, %v1273
      %1315 = vst.msk [vmem:[#allocation3 + $0x40] sm:$0xff] %vm1306, %v1275
      %1316 = vst.msk [vmem:[#allocation3 + $0x48] sm:$0xff] %vm1306, %v1277
      %1317 = vst.msk [vmem:[#allocation3 + $0x50] sm:$0xff] %vm1306, %v1279
      %1318 = vst.msk [vmem:[#allocation3 + $0x58] sm:$0xff] %vm1306, %v1281
      %1319 = vst.msk [vmem:[#allocation3 + $0x60] sm:$0xff] %vm1306, %v1283
      %1320 = vst.msk [vmem:[#allocation3 + $0x68] sm:$0xff] %vm1306, %v1285
      %1321 = vst.msk [vmem:[#allocation3 + $0x70] sm:$0xff] %vm1306, %v1287
      %1322 = vst.msk [vmem:[#allocation3 + $0x78] sm:$0xff] %vm1306, %v1289
      %v1323 = vld [vmem:[%s1064 + $0x2] sm:$0xff]
      %v1324 = vld [vmem:[%s1064 + $0xa] sm:$0xff]
      %v1325 = vld [vmem:[%s1064 + $0x1a] sm:$0xff]
      %v1326 = vld [vmem:[%s1064 + $0x22] sm:$0xff]
      %v1327 = vld [vmem:[%s1064 + $0x32] sm:$0xff]
      %v1328 = vld [vmem:[%s1064 + $0x3a] sm:$0xff]
      %v1329 = vld [vmem:[%s1064 + $0x4a] sm:$0xff]
      %v1330 = vld [vmem:[%s1064 + $0x52] sm:$0xff]
      %v1331 = vld [vmem:[%s1064 + $0x62] sm:$0xff]
      %v1332 = vld [vmem:[%s1064 + $0x6a] sm:$0xff]
      %v1333 = vld [vmem:[%s1064 + $0x7a] sm:$0xff]
      %v1334 = vld [vmem:[%s1064 + $0x82] sm:$0xff]
      %v1335 = vld [vmem:[%s1064 + $0x92] sm:$0xff]
      %v1336 = vld [vmem:[%s1064 + $0x9a] sm:$0xff]
      %v1337 = vld [vmem:[%s1064 + $0xaa] sm:$0xff]
      %v1338 = vld [vmem:[%s1064 + $0xb2] sm:$0xff]
      %v1339 = vld [vmem:[%s1064 + $0xc2] sm:$0xff]
      %v1340 = vld [vmem:[%s1064 + $0xca] sm:$0xff]
      %v1341 = vld [vmem:[%s1064 + $0xda] sm:$0xff]
      %v1342 = vld [vmem:[%s1064 + $0xe2] sm:$0xff]
      %v1343 = vld [vmem:[%s1064 + $0xf2] sm:$0xff]
      %v1344 = vld [vmem:[%s1064 + $0xfa] sm:$0xff]
      %v1345 = vld [vmem:[%s1064 + $0x10a] sm:$0xff]
      %v1346 = vld [vmem:[%s1064 + $0x112] sm:$0xff]
      %v1347 = vld [vmem:[%s1064 + $0x122] sm:$0xff]
      %v1348 = vld [vmem:[%s1064 + $0x12a] sm:$0xff]
      %v1349 = vld [vmem:[%s1064 + $0x13a] sm:$0xff]
      %v1350 = vld [vmem:[%s1064 + $0x142] sm:$0xff]
      %v1351 = vld [vmem:[%s1064 + $0x152] sm:$0xff]
      %v1352 = vld [vmem:[%s1064 + $0x15a] sm:$0xff]
      %v1353 = vld [vmem:[%s1064 + $0x16a] sm:$0xff]
      %v1354 = vld [vmem:[%s1064 + $0x172] sm:$0xff]
      %v1355 = vpack.c.bf16 %v1324, %v1323
      %v1356 = vpack.c.bf16 %v1326, %v1325
      %v1357 = vpack.c.bf16 %v1328, %v1327
      %v1358 = vpack.c.bf16 %v1330, %v1329
      %v1359 = vpack.c.bf16 %v1332, %v1331
      %v1360 = vpack.c.bf16 %v1334, %v1333
      %v1361 = vpack.c.bf16 %v1336, %v1335
      %v1362 = vpack.c.bf16 %v1338, %v1337
      %v1363 = vpack.c.bf16 %v1340, %v1339
      %v1364 = vpack.c.bf16 %v1342, %v1341
      %v1365 = vpack.c.bf16 %v1344, %v1343
      %v1366 = vpack.c.bf16 %v1346, %v1345
      %v1367 = vpack.c.bf16 %v1348, %v1347
      %v1368 = vpack.c.bf16 %v1350, %v1349
      %v1369 = vpack.c.bf16 %v1352, %v1351
      %v1370 = vpack.c.bf16 %v1354, %v1353
      %1387 = vrot.lane.b32.xlu0 %v1355, 32
      %v1388 = vpop.permute.xlu0 %1387
      %1389 = vrot.lane.b32.xlu0 %v1356, 32
      %v1390 = vpop.permute.xlu0 %1389
      %1391 = vrot.lane.b32.xlu0 %v1357, 32
      %v1392 = vpop.permute.xlu0 %1391
      %1393 = vrot.lane.b32.xlu0 %v1358, 32
      %v1394 = vpop.permute.xlu0 %1393
      %1395 = vrot.lane.b32.xlu0 %v1359, 32
      %v1396 = vpop.permute.xlu0 %1395
      %1397 = vrot.lane.b32.xlu0 %v1360, 32
      %v1398 = vpop.permute.xlu0 %1397
      %1399 = vrot.lane.b32.xlu0 %v1361, 32
      %v1400 = vpop.permute.xlu0 %1399
      %1401 = vrot.lane.b32.xlu0 %v1362, 32
      %v1402 = vpop.permute.xlu0 %1401
      %1403 = vrot.lane.b32.xlu0 %v1363, 32
      %v1404 = vpop.permute.xlu0 %1403
      %1405 = vrot.lane.b32.xlu0 %v1364, 32
      %v1406 = vpop.permute.xlu0 %1405
      %1407 = vrot.lane.b32.xlu0 %v1365, 32
      %v1408 = vpop.permute.xlu0 %1407
      %1409 = vrot.lane.b32.xlu0 %v1366, 32
      %v1410 = vpop.permute.xlu0 %1409
      %1411 = vrot.lane.b32.xlu0 %v1367, 32
      %v1412 = vpop.permute.xlu0 %1411
      %1413 = vrot.lane.b32.xlu0 %v1368, 32
      %v1414 = vpop.permute.xlu0 %1413
      %1415 = vrot.lane.b32.xlu0 %v1369, 32
      %v1416 = vpop.permute.xlu0 %1415
      %1417 = vrot.lane.b32.xlu0 %v1370, 32
      %v1418 = vpop.permute.xlu0 %1417
      %vm1435 = vcmask 294144
      %1436 = vst.msk [vmem:[#allocation3] sm:$0xff] %vm1435, %v1388
      %1437 = vst.msk [vmem:[#allocation3 + $0x8] sm:$0xff] %vm1435, %v1390
      %1438 = vst.msk [vmem:[#allocation3 + $0x10] sm:$0xff] %vm1435, %v1392
      %1439 = vst.msk [vmem:[#allocation3 + $0x18] sm:$0xff] %vm1435, %v1394
      %1440 = vst.msk [vmem:[#allocation3 + $0x20] sm:$0xff] %vm1435, %v1396
      %1441 = vst.msk [vmem:[#allocation3 + $0x28] sm:$0xff] %vm1435, %v1398
      %1442 = vst.msk [vmem:[#allocation3 + $0x30] sm:$0xff] %vm1435, %v1400
      %1443 = vst.msk [vmem:[#allocation3 + $0x38] sm:$0xff] %vm1435, %v1402
      %1444 = vst.msk [vmem:[#allocation3 + $0x40] sm:$0xff] %vm1435, %v1404
      %1445 = vst.msk [vmem:[#allocation3 + $0x48] sm:$0xff] %vm1435, %v1406
      %1446 = vst.msk [vmem:[#allocation3 + $0x50] sm:$0xff] %vm1435, %v1408
      %1447 = vst.msk [vmem:[#allocation3 + $0x58] sm:$0xff] %vm1435, %v1410
      %1448 = vst.msk [vmem:[#allocation3 + $0x60] sm:$0xff] %vm1435, %v1412
      %1449 = vst.msk [vmem:[#allocation3 + $0x68] sm:$0xff] %vm1435, %v1414
      %1450 = vst.msk [vmem:[#allocation3 + $0x70] sm:$0xff] %vm1435, %v1416
      %1451 = vst.msk [vmem:[#allocation3 + $0x78] sm:$0xff] %vm1435, %v1418
      %v1452 = vld [vmem:[#allocation3] sm:$0xff]
      %v1453 = vld [vmem:[#allocation3 + $0x8] sm:$0xff]
      %v1454 = vld [vmem:[#allocation3 + $0x10] sm:$0xff]
      %v1455 = vld [vmem:[#allocation3 + $0x18] sm:$0xff]
      %v1456 = vld [vmem:[#allocation3 + $0x20] sm:$0xff]
      %v1457 = vld [vmem:[#allocation3 + $0x28] sm:$0xff]
      %v1458 = vld [vmem:[#allocation3 + $0x30] sm:$0xff]
      %v1459 = vld [vmem:[#allocation3 + $0x38] sm:$0xff]
      %v1460 = vld [vmem:[#allocation3 + $0x40] sm:$0xff]
      %v1461 = vld [vmem:[#allocation3 + $0x48] sm:$0xff]
      %v1462 = vld [vmem:[#allocation3 + $0x50] sm:$0xff]
      %v1463 = vld [vmem:[#allocation3 + $0x58] sm:$0xff]
      %v1464 = vld [vmem:[#allocation3 + $0x60] sm:$0xff]
      %v1465 = vld [vmem:[#allocation3 + $0x68] sm:$0xff]
      %v1466 = vld [vmem:[#allocation3 + $0x70] sm:$0xff]
      %v1467 = vld [vmem:[#allocation3 + $0x78] sm:$0xff]
      %v1468 = vld [vmem:[%s1] sm:$0xf]
      %v1469 = vld [vmem:[%s1 + $0x4] sm:$0xf]
      %v1470 = vld [vmem:[%s1 + $0x8] sm:$0xf]
      %v1471 = vld [vmem:[%s1 + $0xc] sm:$0xf]
      %v1472 = vld [vmem:[%s1 + $0x10] sm:$0x3]
      %v1478 = vunpack.c.l.b16 %v1468
      %v1479 = vunpack.c.l.b16 %v1469
      %v1480 = vunpack.c.l.b16 %v1470
      %v1481 = vunpack.c.l.b16 %v1471
      %v1482 = vunpack.c.l.b16 %v1472
      %v1483 = vpack.c.b16 %v1479, %v1478
      %v1484 = vpack.c.b16 %v1481, %v1480
      %v1485 = vpack.c.b16 %v1482, %v1482
      %vm1488 = vcmask 293888
      %v1490 = vsel %vm1488, %v1452, 0
      %v1493 = vsel %vm1488, %v1453, 0
      %v1496 = vsel %vm1488, %v1454, 0
      %v1499 = vsel %vm1488, %v1455, 0
      %v1502 = vsel %vm1488, %v1456, 0
      %v1505 = vsel %vm1488, %v1457, 0
      %v1508 = vsel %vm1488, %v1458, 0
      %v1511 = vsel %vm1488, %v1459, 0
      %v1514 = vsel %vm1488, %v1460, 0
      %v1517 = vsel %vm1488, %v1461, 0
      %v1520 = vsel %vm1488, %v1462, 0
      %v1523 = vsel %vm1488, %v1463, 0
      %v1526 = vsel %vm1488, %v1464, 0
      %v1529 = vsel %vm1488, %v1465, 0
      %v1532 = vsel %vm1488, %v1466, 0
      %v1535 = vsel %vm1488, %v1467, 0
      %vm1537 = vcmask 1041408
      %v1539 = vsel %vm1537, %v1485, 0
      %1541 = vmatprep.subr.bf16.mxu0 0
      %1542 = vmatpush1.bf16.msra.mxu0 %v1483
      %1543 = vmatprep.subr.bf16.mxu0 0
      %1544 = vmatpush1.bf16.msra.mxu0 %v1484
      %1545 = vmatprep.subr.bf16.mxu0 0
      %1546 = vmatpush1.bf16.msra.mxu0 %v1539
      %1547 = vmatprep.subr.bf16.mxu0 0
      %1548 = vmatpush1.bf16.msra.mxu0 0
      %1549 = vmatprep.subr.bf16.mxu0 0
      %1550 = vmatpush1.bf16.msra.mxu0 0
      %1551 = vmatprep.subr.bf16.mxu0 0
      %1552 = vmatpush1.bf16.msra.mxu0 0
      %1553 = vmatprep.subr.bf16.mxu0 0
      %1554 = vmatpush1.bf16.msra.mxu0 0
      %1555 = vmatprep.subr.bf16.mxu0 0
      %1556 = vmatpush1.bf16.msra.mxu0 0
      %1557 = vmatprep.subr.bf16.mxu0 0
      %1558 = vmatpush1.bf16.msra.mxu0 0
      %1559 = vmatprep.subr.bf16.mxu0 0
      %1560 = vmatpush1.bf16.msra.mxu0 0
      %1561 = vmatprep.subr.bf16.mxu0 0
      %1562 = vmatpush1.bf16.msra.mxu0 0
      %1563 = vmatprep.subr.bf16.mxu0 0
      %1564 = vmatpush1.bf16.msra.mxu0 0
      %1565 = vmatprep.subr.bf16.mxu0 0
      %1566 = vmatpush1.bf16.msra.mxu0 0
      %1567 = vmatprep.subr.bf16.mxu0 0
      %1568 = vmatpush1.bf16.msra.mxu0 0
      %1569 = vmatprep.subr.bf16.mxu0 0
      %1570 = vmatpush1.bf16.msra.mxu0 0
      %1571 = vmatprep.subr.bf16.mxu0 0
      %1572 = vmatpush1.bf16.msra.mxu0 0
      %1573 = vmatprep.mubr.bf16.mxu0 0
      %1574 = vmatmul.mubr.bf16.gmra.mrb[0].mxu0 %v1490
      %v1575 = vpop.f32.mrb[0].mxu0
      %v1576 = vadd.f32 0.0, %v1575
      %v1577 = vpop.f32.mrb[0].mxu0
      %v1578 = vpop.f32.mrb[0].mxu0
      %v1579 = vadd.f32 0.0, %v1578
      %v1580 = vpop.f32.mrb[0].mxu0
      %1581 = vmatprep.mubr.bf16.mxu0 0
      %1582 = vmatmul.mubr.bf16.gmra.mrb[0].mxu0 %v1493
      %v1583 = vpop.f32.mrb[0].mxu0
      %v1584 = vadd.f32 0.0, %v1583
      %v1585 = vpop.f32.mrb[0].mxu0
      %v1586 = vpop.f32.mrb[0].mxu0
      %v1587 = vadd.f32 0.0, %v1586
      %v1588 = vpop.f32.mrb[0].mxu0
      %1589 = vmatprep.mubr.bf16.mxu0 0
      %1590 = vmatmul.mubr.bf16.gmra.mrb[0].mxu0 %v1496
      %v1591 = vpop.f32.mrb[0].mxu0
      %v1592 = vadd.f32 0.0, %v1591
      %v1593 = vpop.f32.mrb[0].mxu0
      %v1594 = vpop.f32.mrb[0].mxu0
      %v1595 = vadd.f32 0.0, %v1594
      %v1596 = vpop.f32.mrb[0].mxu0
      %1597 = vmatprep.mubr.bf16.mxu0 0
      %1598 = vmatmul.mubr.bf16.gmra.mrb[0].mxu0 %v1499
      %v1599 = vpop.f32.mrb[0].mxu0
      %v1600 = vadd.f32 0.0, %v1599
      %v1601 = vpop.f32.mrb[0].mxu0
      %v1602 = vpop.f32.mrb[0].mxu0
      %v1603 = vadd.f32 0.0, %v1602
      %v1604 = vpop.f32.mrb[0].mxu0
      %1605 = vmatprep.mubr.bf16.mxu0 0
      %1606 = vmatmul.mubr.bf16.gmra.mrb[0].mxu0 %v1502
      %v1607 = vpop.f32.mrb[0].mxu0
      %v1608 = vadd.f32 0.0, %v1607
      %v1609 = vpop.f32.mrb[0].mxu0
      %v1610 = vpop.f32.mrb[0].mxu0
      %v1611 = vadd.f32 0.0, %v1610
      %v1612 = vpop.f32.mrb[0].mxu0
      %1613 = vmatprep.mubr.bf16.mxu0 0
      %1614 = vmatmul.mubr.bf16.gmra.mrb[0].mxu0 %v1505
      %v1615 = vpop.f32.mrb[0].mxu0
      %v1616 = vadd.f32 0.0, %v1615
      %v1617 = vpop.f32.mrb[0].mxu0
      %v1618 = vpop.f32.mrb[0].mxu0
      %v1619 = vadd.f32 0.0, %v1618
      %v1620 = vpop.f32.mrb[0].mxu0
      %1621 = vmatprep.mubr.bf16.mxu0 0
      %1622 = vmatmul.mubr.bf16.gmra.mrb[0].mxu0 %v1508
      %v1623 = vpop.f32.mrb[0].mxu0
      %v1624 = vadd.f32 0.0, %v1623
      %v1625 = vpop.f32.mrb[0].mxu0
      %v1626 = vpop.f32.mrb[0].mxu0
      %v1627 = vadd.f32 0.0, %v1626
      %v1628 = vpop.f32.mrb[0].mxu0
      %1629 = vmatprep.mubr.bf16.mxu0 0
      %1630 = vmatmul.mubr.bf16.gmra.mrb[0].mxu0 %v1511
      %v1631 = vpop.f32.mrb[0].mxu0
      %v1632 = vadd.f32 0.0, %v1631
      %v1633 = vpop.f32.mrb[0].mxu0
      %v1634 = vpop.f32.mrb[0].mxu0
      %v1635 = vadd.f32 0.0, %v1634
      %v1636 = vpop.f32.mrb[0].mxu0
      %1637 = vmatprep.mubr.bf16.mxu0 0
      %1638 = vmatmul.mubr.bf16.gmra.mrb[0].mxu0 %v1514
      %v1639 = vpop.f32.mrb[0].mxu0
      %v1640 = vadd.f32 0.0, %v1639
      %v1641 = vpop.f32.mrb[0].mxu0
      %v1642 = vpop.f32.mrb[0].mxu0
      %v1643 = vadd.f32 0.0, %v1642
      %v1644 = vpop.f32.mrb[0].mxu0
      %1645 = vmatprep.mubr.bf16.mxu0 0
      %1646 = vmatmul.mubr.bf16.gmra.mrb[0].mxu0 %v1517
      %v1647 = vpop.f32.mrb[0].mxu0
      %v1648 = vadd.f32 0.0, %v1647
      %v1649 = vpop.f32.mrb[0].mxu0
      %v1650 = vpop.f32.mrb[0].mxu0
      %v1651 = vadd.f32 0.0, %v1650
      %v1652 = vpop.f32.mrb[0].mxu0
      %1653 = vmatprep.mubr.bf16.mxu0 0
      %1654 = vmatmul.mubr.bf16.gmra.mrb[0].mxu0 %v1520
      %v1655 = vpop.f32.mrb[0].mxu0
      %v1656 = vadd.f32 0.0, %v1655
      %v1657 = vpop.f32.mrb[0].mxu0
      %v1658 = vpop.f32.mrb[0].mxu0
      %v1659 = vadd.f32 0.0, %v1658
      %v1660 = vpop.f32.mrb[0].mxu0
      %1661 = vmatprep.mubr.bf16.mxu0 0
      %1662 = vmatmul.mubr.bf16.gmra.mrb[0].mxu0 %v1523
      %v1663 = vpop.f32.mrb[0].mxu0
      %v1664 = vadd.f32 0.0, %v1663
      %v1665 = vpop.f32.mrb[0].mxu0
      %v1666 = vpop.f32.mrb[0].mxu0
      %v1667 = vadd.f32 0.0, %v1666
      %v1668 = vpop.f32.mrb[0].mxu0
      %1669 = vmatprep.mubr.bf16.mxu0 0
      %1670 = vmatmul.mubr.bf16.gmra.mrb[0].mxu0 %v1526
      %v1671 = vpop.f32.mrb[0].mxu0
      %v1672 = vadd.f32 0.0, %v1671
      %v1673 = vpop.f32.mrb[0].mxu0
      %v1674 = vpop.f32.mrb[0].mxu0
      %v1675 = vadd.f32 0.0, %v1674
      %v1676 = vpop.f32.mrb[0].mxu0
      %1677 = vmatprep.mubr.bf16.mxu0 0
      %1678 = vmatmul.mubr.bf16.gmra.mrb[0].mxu0 %v1529
      %v1679 = vpop.f32.mrb[0].mxu0
      %v1680 = vadd.f32 0.0, %v1679
      %v1681 = vpop.f32.mrb[0].mxu0
      %v1682 = vpop.f32.mrb[0].mxu0
      %v1683 = vadd.f32 0.0, %v1682
      %v1684 = vpop.f32.mrb[0].mxu0
      %1685 = vmatprep.mubr.bf16.mxu0 0
      %1686 = vmatmul.mubr.bf16.gmra.mrb[0].mxu0 %v1532
      %v1687 = vpop.f32.mrb[0].mxu0
      %v1688 = vadd.f32 0.0, %v1687
      %v1689 = vpop.f32.mrb[0].mxu0
      %v1690 = vpop.f32.mrb[0].mxu0
      %v1691 = vadd.f32 0.0, %v1690
      %v1692 = vpop.f32.mrb[0].mxu0
      %1693 = vmatprep.mubr.bf16.mxu0 0
      %1694 = vmatmul.mubr.bf16.gmra.mrb[0].mxu0 %v1535
      %v1695 = vpop.f32.mrb[0].mxu0
      %v1696 = vadd.f32 0.0, %v1695
      %v1697 = vpop.f32.mrb[0].mxu0
      %v1698 = vpop.f32.mrb[0].mxu0
      %v1699 = vadd.f32 0.0, %v1698
      %v1700 = vpop.f32.mrb[0].mxu0
      %1701 = vdwg.mxu0
      %v1702 = vld [vmem:[%s2] sm:$0x1]
      %v1704 = vlaneseq
      %v1705 = vshrl.u32 %v1704, 7
      %v1706 = vsub.s32 0, %v1705
      %v1707 = vrot.slane %v1702, %v1706
      %v1709 = vmul.f32 %v1576, %v1707
      %v1710 = vmul.f32 %v1579, %v1707
      %v1711 = vmul.f32 %v1584, %v1707
      %v1712 = vmul.f32 %v1587, %v1707
      %v1713 = vmul.f32 %v1592, %v1707
      %v1714 = vmul.f32 %v1595, %v1707
      %v1715 = vmul.f32 %v1600, %v1707
      %v1716 = vmul.f32 %v1603, %v1707
      %v1717 = vmul.f32 %v1608, %v1707
      %v1718 = vmul.f32 %v1611, %v1707
      %v1719 = vmul.f32 %v1616, %v1707
      %v1720 = vmul.f32 %v1619, %v1707
      %v1721 = vmul.f32 %v1624, %v1707
      %v1722 = vmul.f32 %v1627, %v1707
      %v1723 = vmul.f32 %v1632, %v1707
      %v1724 = vmul.f32 %v1635, %v1707
      %v1725 = vmul.f32 %v1640, %v1707
      %v1726 = vmul.f32 %v1643, %v1707
      %v1727 = vmul.f32 %v1648, %v1707
      %v1728 = vmul.f32 %v1651, %v1707
      %v1729 = vmul.f32 %v1656, %v1707
      %v1730 = vmul.f32 %v1659, %v1707
      %v1731 = vmul.f32 %v1664, %v1707
      %v1732 = vmul.f32 %v1667, %v1707
      %v1733 = vmul.f32 %v1672, %v1707
      %v1734 = vmul.f32 %v1675, %v1707
      %v1735 = vmul.f32 %v1680, %v1707
      %v1736 = vmul.f32 %v1683, %v1707
      %v1737 = vmul.f32 %v1688, %v1707
      %v1738 = vmul.f32 %v1691, %v1707
      %v1739 = vmul.f32 %v1696, %v1707
      %v1740 = vmul.f32 %v1699, %v1707
      %v1741 = vld [vmem:[%s3] sm:$0x1]
      %v1743 = vlaneseq
      %v1744 = vshrl.u32 %v1743, 7
      %v1745 = vsub.s32 0, %v1744
      %v1746 = vrot.slane %v1741, %v1745
      %v1748 = vadd.f32 %v1709, %v1746
      %v1749 = vadd.f32 %v1710, %v1746
      %v1750 = vadd.f32 %v1711, %v1746
      %v1751 = vadd.f32 %v1712, %v1746
      %v1752 = vadd.f32 %v1713, %v1746
      %v1753 = vadd.f32 %v1714, %v1746
      %v1754 = vadd.f32 %v1715, %v1746
      %v1755 = vadd.f32 %v1716, %v1746
      %v1756 = vadd.f32 %v1717, %v1746
      %v1757 = vadd.f32 %v1718, %v1746
      %v1758 = vadd.f32 %v1719, %v1746
      %v1759 = vadd.f32 %v1720, %v1746
      %v1760 = vadd.f32 %v1721, %v1746
      %v1761 = vadd.f32 %v1722, %v1746
      %v1762 = vadd.f32 %v1723, %v1746
      %v1763 = vadd.f32 %v1724, %v1746
      %v1764 = vadd.f32 %v1725, %v1746
      %v1765 = vadd.f32 %v1726, %v1746
      %v1766 = vadd.f32 %v1727, %v1746
      %v1767 = vadd.f32 %v1728, %v1746
      %v1768 = vadd.f32 %v1729, %v1746
      %v1769 = vadd.f32 %v1730, %v1746
      %v1770 = vadd.f32 %v1731, %v1746
      %v1771 = vadd.f32 %v1732, %v1746
      %v1772 = vadd.f32 %v1733, %v1746
      %v1773 = vadd.f32 %v1734, %v1746
      %v1774 = vadd.f32 %v1735, %v1746
      %v1775 = vadd.f32 %v1736, %v1746
      %v1776 = vadd.f32 %v1737, %v1746
      %v1777 = vadd.f32 %v1738, %v1746
      %v1778 = vadd.f32 %v1739, %v1746
      %v1779 = vadd.f32 %v1740, %v1746
      %v1780 = vmax.f32 %v1748, 0.0
      %v1781 = vmax.f32 %v1749, 0.0
      %v1782 = vmax.f32 %v1750, 0.0
      %v1783 = vmax.f32 %v1751, 0.0
      %v1784 = vmax.f32 %v1752, 0.0
      %v1785 = vmax.f32 %v1753, 0.0
      %v1786 = vmax.f32 %v1754, 0.0
      %v1787 = vmax.f32 %v1755, 0.0
      %v1788 = vmax.f32 %v1756, 0.0
      %v1789 = vmax.f32 %v1757, 0.0
      %v1790 = vmax.f32 %v1758, 0.0
      %v1791 = vmax.f32 %v1759, 0.0
      %v1792 = vmax.f32 %v1760, 0.0
      %v1793 = vmax.f32 %v1761, 0.0
      %v1794 = vmax.f32 %v1762, 0.0
      %v1795 = vmax.f32 %v1763, 0.0
      %v1796 = vmax.f32 %v1764, 0.0
      %v1797 = vmax.f32 %v1765, 0.0
      %v1798 = vmax.f32 %v1766, 0.0
      %v1799 = vmax.f32 %v1767, 0.0
      %v1800 = vmax.f32 %v1768, 0.0
      %v1801 = vmax.f32 %v1769, 0.0
      %v1802 = vmax.f32 %v1770, 0.0
      %v1803 = vmax.f32 %v1771, 0.0
      %v1804 = vmax.f32 %v1772, 0.0
      %v1805 = vmax.f32 %v1773, 0.0
      %v1806 = vmax.f32 %v1774, 0.0
      %v1807 = vmax.f32 %v1775, 0.0
      %v1808 = vmax.f32 %v1776, 0.0
      %v1809 = vmax.f32 %v1777, 0.0
      %v1810 = vmax.f32 %v1778, 0.0
      %v1811 = vmax.f32 %v1779, 0.0
      %s1812 = scalar_lea.vmem [#allocation2], 32
      %1813 = vst.msk [vmem:[%s1812 + $0x8] sm:$0xff] %vm280, %v1780
      %1814 = vst.msk [vmem:[%s1812 + $0x10] sm:$0xff] %vm280, %v1781
      %1815 = vst.msk [vmem:[%s1812 + $0x28] sm:$0xff] %vm280, %v1782
      %1816 = vst.msk [vmem:[%s1812 + $0x30] sm:$0xff] %vm280, %v1783
      %1817 = vst.msk [vmem:[%s1812 + $0x48] sm:$0xff] %vm280, %v1784
      %1818 = vst.msk [vmem:[%s1812 + $0x50] sm:$0xff] %vm280, %v1785
      %1819 = vst.msk [vmem:[%s1812 + $0x68] sm:$0xff] %vm280, %v1786
      %1820 = vst.msk [vmem:[%s1812 + $0x70] sm:$0xff] %vm280, %v1787
      %1821 = vst.msk [vmem:[%s1812 + $0x88] sm:$0xff] %vm280, %v1788
      %1822 = vst.msk [vmem:[%s1812 + $0x90] sm:$0xff] %vm280, %v1789
      %1823 = vst.msk [vmem:[%s1812 + $0xa8] sm:$0xff] %vm280, %v1790
      %1824 = vst.msk [vmem:[%s1812 + $0xb0] sm:$0xff] %vm280, %v1791
      %1825 = vst.msk [vmem:[%s1812 + $0xc8] sm:$0xff] %vm280, %v1792
      %1826 = vst.msk [vmem:[%s1812 + $0xd0] sm:$0xff] %vm280, %v1793
      %1827 = vst.msk [vmem:[%s1812 + $0xe8] sm:$0xff] %vm280, %v1794
      %1828 = vst.msk [vmem:[%s1812 + $0xf0] sm:$0xff] %vm280, %v1795
      %1829 = vst.msk [vmem:[%s1812 + $0x108] sm:$0xff] %vm280, %v1796
      %1830 = vst.msk [vmem:[%s1812 + $0x110] sm:$0xff] %vm280, %v1797
      %1831 = vst.msk [vmem:[%s1812 + $0x128] sm:$0xff] %vm280, %v1798
      %1832 = vst.msk [vmem:[%s1812 + $0x130] sm:$0xff] %vm280, %v1799
      %1833 = vst.msk [vmem:[%s1812 + $0x148] sm:$0xff] %vm280, %v1800
      %1834 = vst.msk [vmem:[%s1812 + $0x150] sm:$0xff] %vm280, %v1801
      %1835 = vst.msk [vmem:[%s1812 + $0x168] sm:$0xff] %vm280, %v1802
      %1836 = vst.msk [vmem:[%s1812 + $0x170] sm:$0xff] %vm280, %v1803
      %1837 = vst.msk [vmem:[%s1812 + $0x188] sm:$0xff] %vm280, %v1804
      %1838 = vst.msk [vmem:[%s1812 + $0x190] sm:$0xff] %vm280, %v1805
      %1839 = vst.msk [vmem:[%s1812 + $0x1a8] sm:$0xff] %vm280, %v1806
      %1840 = vst.msk [vmem:[%s1812 + $0x1b0] sm:$0xff] %vm280, %v1807
      %1841 = vst.msk [vmem:[%s1812 + $0x1c8] sm:$0xff] %vm280, %v1808
      %1842 = vst.msk [vmem:[%s1812 + $0x1d0] sm:$0xff] %vm280, %v1809
      %1843 = vst.msk [vmem:[%s1812 + $0x1e8] sm:$0xff] %vm280, %v1810
      %1844 = vst.msk [vmem:[%s1812 + $0x1f0] sm:$0xff] %vm280, %v1811
      %v1845 = vld [vmem:[#allocation2 + $0x7] sm:$0xff]
      %v1846 = vld [vmem:[#allocation2 + $0xf] sm:$0xff]
      %v1847 = vld [vmem:[#allocation2 + $0x27] sm:$0xff]
      %v1848 = vld [vmem:[#allocation2 + $0x2f] sm:$0xff]
      %v1849 = vld [vmem:[#allocation2 + $0x47] sm:$0xff]
      %v1850 = vld [vmem:[#allocation2 + $0x4f] sm:$0xff]
      %v1851 = vld [vmem:[#allocation2 + $0x67] sm:$0xff]
      %v1852 = vld [vmem:[#allocation2 + $0x6f] sm:$0xff]
      %v1853 = vld [vmem:[#allocation2 + $0x87] sm:$0xff]
      %v1854 = vld [vmem:[#allocation2 + $0x8f] sm:$0xff]
      %v1855 = vld [vmem:[#allocation2 + $0xa7] sm:$0xff]
      %v1856 = vld [vmem:[#allocation2 + $0xaf] sm:$0xff]
      %v1857 = vld [vmem:[#allocation2 + $0xc7] sm:$0xff]
      %v1858 = vld [vmem:[#allocation2 + $0xcf] sm:$0xff]
      %v1859 = vld [vmem:[#allocation2 + $0xe7] sm:$0xff]
      %v1860 = vld [vmem:[#allocation2 + $0xef] sm:$0xff]
      %v1861 = vld [vmem:[#allocation2 + $0x107] sm:$0xff]
      %v1862 = vld [vmem:[#allocation2 + $0x10f] sm:$0xff]
      %v1863 = vld [vmem:[#allocation2 + $0x127] sm:$0xff]
      %v1864 = vld [vmem:[#allocation2 + $0x12f] sm:$0xff]
      %v1865 = vld [vmem:[#allocation2 + $0x147] sm:$0xff]
      %v1866 = vld [vmem:[#allocation2 + $0x14f] sm:$0xff]
      %v1867 = vld [vmem:[#allocation2 + $0x167] sm:$0xff]
      %v1868 = vld [vmem:[#allocation2 + $0x16f] sm:$0xff]
      %v1869 = vld [vmem:[#allocation2 + $0x187] sm:$0xff]
      %v1870 = vld [vmem:[#allocation2 + $0x18f] sm:$0xff]
      %v1871 = vld [vmem:[#allocation2 + $0x1a7] sm:$0xff]
      %v1872 = vld [vmem:[#allocation2 + $0x1af] sm:$0xff]
      %v1873 = vld [vmem:[#allocation2 + $0x1c7] sm:$0xff]
      %v1874 = vld [vmem:[#allocation2 + $0x1cf] sm:$0xff]
      %v1875 = vld [vmem:[#allocation2 + $0x1e7] sm:$0xff]
      %v1876 = vld [vmem:[#allocation2 + $0x1ef] sm:$0xff]
      %v1877 = vpack.c.bf16 %v1846, %v1845
      %v1878 = vpack.c.bf16 %v1848, %v1847
      %v1879 = vpack.c.bf16 %v1850, %v1849
      %v1880 = vpack.c.bf16 %v1852, %v1851
      %v1881 = vpack.c.bf16 %v1854, %v1853
      %v1882 = vpack.c.bf16 %v1856, %v1855
      %v1883 = vpack.c.bf16 %v1858, %v1857
      %v1884 = vpack.c.bf16 %v1860, %v1859
      %v1885 = vpack.c.bf16 %v1862, %v1861
      %v1886 = vpack.c.bf16 %v1864, %v1863
      %v1887 = vpack.c.bf16 %v1866, %v1865
      %v1888 = vpack.c.bf16 %v1868, %v1867
      %v1889 = vpack.c.bf16 %v1870, %v1869
      %v1890 = vpack.c.bf16 %v1872, %v1871
      %v1891 = vpack.c.bf16 %v1874, %v1873
      %v1892 = vpack.c.bf16 %v1876, %v1875
      %1893 = vst.msk [vmem:[#allocation4] sm:$0xff] %vm280, %v1877
      %1894 = vst.msk [vmem:[#allocation4 + $0x18] sm:$0xff] %vm280, %v1878
      %1895 = vst.msk [vmem:[#allocation4 + $0x30] sm:$0xff] %vm280, %v1879
      %1896 = vst.msk [vmem:[#allocation4 + $0x48] sm:$0xff] %vm280, %v1880
      %1897 = vst.msk [vmem:[#allocation4 + $0x60] sm:$0xff] %vm280, %v1881
      %1898 = vst.msk [vmem:[#allocation4 + $0x78] sm:$0xff] %vm280, %v1882
      %1899 = vst.msk [vmem:[#allocation4 + $0x90] sm:$0xff] %vm280, %v1883
      %1900 = vst.msk [vmem:[#allocation4 + $0xa8] sm:$0xff] %vm280, %v1884
      %1901 = vst.msk [vmem:[#allocation4 + $0xc0] sm:$0xff] %vm280, %v1885
      %1902 = vst.msk [vmem:[#allocation4 + $0xd8] sm:$0xff] %vm280, %v1886
      %1903 = vst.msk [vmem:[#allocation4 + $0xf0] sm:$0xff] %vm280, %v1887
      %1904 = vst.msk [vmem:[#allocation4 + $0x108] sm:$0xff] %vm280, %v1888
      %1905 = vst.msk [vmem:[#allocation4 + $0x120] sm:$0xff] %vm280, %v1889
      %1906 = vst.msk [vmem:[#allocation4 + $0x138] sm:$0xff] %vm280, %v1890
      %1907 = vst.msk [vmem:[#allocation4 + $0x150] sm:$0xff] %vm280, %v1891
      %1908 = vst.msk [vmem:[#allocation4 + $0x168] sm:$0xff] %vm280, %v1892
      %v1909 = vld [vmem:[#allocation2 + $0x8] sm:$0xff]
      %v1910 = vld [vmem:[#allocation2 + $0x10] sm:$0xff]
      %v1911 = vld [vmem:[#allocation2 + $0x28] sm:$0xff]
      %v1912 = vld [vmem:[#allocation2 + $0x30] sm:$0xff]
      %v1913 = vld [vmem:[#allocation2 + $0x48] sm:$0xff]
      %v1914 = vld [vmem:[#allocation2 + $0x50] sm:$0xff]
      %v1915 = vld [vmem:[#allocation2 + $0x68] sm:$0xff]
      %v1916 = vld [vmem:[#allocation2 + $0x70] sm:$0xff]
      %v1917 = vld [vmem:[#allocation2 + $0x88] sm:$0xff]
      %v1918 = vld [vmem:[#allocation2 + $0x90] sm:$0xff]
      %v1919 = vld [vmem:[#allocation2 + $0xa8] sm:$0xff]
      %v1920 = vld [vmem:[#allocation2 + $0xb0] sm:$0xff]
      %v1921 = vld [vmem:[#allocation2 + $0xc8] sm:$0xff]
      %v1922 = vld [vmem:[#allocation2 + $0xd0] sm:$0xff]
      %v1923 = vld [vmem:[#allocation2 + $0xe8] sm:$0xff]
      %v1924 = vld [vmem:[#allocation2 + $0xf0] sm:$0xff]
      %v1925 = vld [vmem:[#allocation2 + $0x108] sm:$0xff]
      %v1926 = vld [vmem:[#allocation2 + $0x110] sm:$0xff]
      %v1927 = vld [vmem:[#allocation2 + $0x128] sm:$0xff]
      %v1928 = vld [vmem:[#allocation2 + $0x130] sm:$0xff]
      %v1929 = vld [vmem:[#allocation2 + $0x148] sm:$0xff]
      %v1930 = vld [vmem:[#allocation2 + $0x150] sm:$0xff]
      %v1931 = vld [vmem:[#allocation2 + $0x168] sm:$0xff]
      %v1932 = vld [vmem:[#allocation2 + $0x170] sm:$0xff]
      %v1933 = vld [vmem:[#allocation2 + $0x188] sm:$0xff]
      %v1934 = vld [vmem:[#allocation2 + $0x190] sm:$0xff]
      %v1935 = vld [vmem:[#allocation2 + $0x1a8] sm:$0xff]
      %v1936 = vld [vmem:[#allocation2 + $0x1b0] sm:$0xff]
      %v1937 = vld [vmem:[#allocation2 + $0x1c8] sm:$0xff]
      %v1938 = vld [vmem:[#allocation2 + $0x1d0] sm:$0xff]
      %v1939 = vld [vmem:[#allocation2 + $0x1e8] sm:$0xff]
      %v1940 = vld [vmem:[#allocation2 + $0x1f0] sm:$0xff]
      %v1941 = vpack.c.bf16 %v1910, %v1909
      %v1942 = vpack.c.bf16 %v1912, %v1911
      %v1943 = vpack.c.bf16 %v1914, %v1913
      %v1944 = vpack.c.bf16 %v1916, %v1915
      %v1945 = vpack.c.bf16 %v1918, %v1917
      %v1946 = vpack.c.bf16 %v1920, %v1919
      %v1947 = vpack.c.bf16 %v1922, %v1921
      %v1948 = vpack.c.bf16 %v1924, %v1923
      %v1949 = vpack.c.bf16 %v1926, %v1925
      %v1950 = vpack.c.bf16 %v1928, %v1927
      %v1951 = vpack.c.bf16 %v1930, %v1929
      %v1952 = vpack.c.bf16 %v1932, %v1931
      %v1953 = vpack.c.bf16 %v1934, %v1933
      %v1954 = vpack.c.bf16 %v1936, %v1935
      %v1955 = vpack.c.bf16 %v1938, %v1937
      %v1956 = vpack.c.bf16 %v1940, %v1939
      %1973 = vrot.lane.b32.xlu0 %v1941, 32
      %v1974 = vpop.permute.xlu0 %1973
      %1975 = vrot.lane.b32.xlu0 %v1942, 32
      %v1976 = vpop.permute.xlu0 %1975
      %1977 = vrot.lane.b32.xlu0 %v1943, 32
      %v1978 = vpop.permute.xlu0 %1977
      %1979 = vrot.lane.b32.xlu0 %v1944, 32
      %v1980 = vpop.permute.xlu0 %1979
      %1981 = vrot.lane.b32.xlu0 %v1945, 32
      %v1982 = vpop.permute.xlu0 %1981
      %1983 = vrot.lane.b32.xlu0 %v1946, 32
      %v1984 = vpop.permute.xlu0 %1983
      %1985 = vrot.lane.b32.xlu0 %v1947, 32
      %v1986 = vpop.permute.xlu0 %1985
      %1987 = vrot.lane.b32.xlu0 %v1948, 32
      %v1988 = vpop.permute.xlu0 %1987
      %1989 = vrot.lane.b32.xlu0 %v1949, 32
      %v1990 = vpop.permute.xlu0 %1989
      %1991 = vrot.lane.b32.xlu0 %v1950, 32
      %v1992 = vpop.permute.xlu0 %1991
      %1993 = vrot.lane.b32.xlu0 %v1951, 32
      %v1994 = vpop.permute.xlu0 %1993
      %1995 = vrot.lane.b32.xlu0 %v1952, 32
      %v1996 = vpop.permute.xlu0 %1995
      %1997 = vrot.lane.b32.xlu0 %v1953, 32
      %v1998 = vpop.permute.xlu0 %1997
      %1999 = vrot.lane.b32.xlu0 %v1954, 32
      %v2000 = vpop.permute.xlu0 %1999
      %2001 = vrot.lane.b32.xlu0 %v1955, 32
      %v2002 = vpop.permute.xlu0 %2001
      %2003 = vrot.lane.b32.xlu0 %v1956, 32
      %v2004 = vpop.permute.xlu0 %2003
      %vm2021 = vcmask 523520
      %2022 = vst.msk [vmem:[#allocation4] sm:$0xff] %vm2021, %v1974
      %2023 = vst.msk [vmem:[#allocation4 + $0x18] sm:$0xff] %vm2021, %v1976
      %2024 = vst.msk [vmem:[#allocation4 + $0x30] sm:$0xff] %vm2021, %v1978
      %2025 = vst.msk [vmem:[#allocation4 + $0x48] sm:$0xff] %vm2021, %v1980
      %2026 = vst.msk [vmem:[#allocation4 + $0x60] sm:$0xff] %vm2021, %v1982
      %2027 = vst.msk [vmem:[#allocation4 + $0x78] sm:$0xff] %vm2021, %v1984
      %2028 = vst.msk [vmem:[#allocation4 + $0x90] sm:$0xff] %vm2021, %v1986
      %2029 = vst.msk [vmem:[#allocation4 + $0xa8] sm:$0xff] %vm2021, %v1988
      %2030 = vst.msk [vmem:[#allocation4 + $0xc0] sm:$0xff] %vm2021, %v1990
      %2031 = vst.msk [vmem:[#allocation4 + $0xd8] sm:$0xff] %vm2021, %v1992
      %2032 = vst.msk [vmem:[#allocation4 + $0xf0] sm:$0xff] %vm2021, %v1994
      %2033 = vst.msk [vmem:[#allocation4 + $0x108] sm:$0xff] %vm2021, %v1996
      %2034 = vst.msk [vmem:[#allocation4 + $0x120] sm:$0xff] %vm2021, %v1998
      %2035 = vst.msk [vmem:[#allocation4 + $0x138] sm:$0xff] %vm2021, %v2000
      %2036 = vst.msk [vmem:[#allocation4 + $0x150] sm:$0xff] %vm2021, %v2002
      %2037 = vst.msk [vmem:[#allocation4 + $0x168] sm:$0xff] %vm2021, %v2004
      %v2038 = vld [vmem:[#allocation2 + $0x9] sm:$0xff]
      %v2039 = vld [vmem:[#allocation2 + $0x11] sm:$0xff]
      %v2040 = vld [vmem:[#allocation2 + $0x29] sm:$0xff]
      %v2041 = vld [vmem:[#allocation2 + $0x31] sm:$0xff]
      %v2042 = vld [vmem:[#allocation2 + $0x49] sm:$0xff]
      %v2043 = vld [vmem:[#allocation2 + $0x51] sm:$0xff]
      %v2044 = vld [vmem:[#allocation2 + $0x69] sm:$0xff]
      %v2045 = vld [vmem:[#allocation2 + $0x71] sm:$0xff]
      %v2046 = vld [vmem:[#allocation2 + $0x89] sm:$0xff]
      %v2047 = vld [vmem:[#allocation2 + $0x91] sm:$0xff]
      %v2048 = vld [vmem:[#allocation2 + $0xa9] sm:$0xff]
      %v2049 = vld [vmem:[#allocation2 + $0xb1] sm:$0xff]
      %v2050 = vld [vmem:[#allocation2 + $0xc9] sm:$0xff]
      %v2051 = vld [vmem:[#allocation2 + $0xd1] sm:$0xff]
      %v2052 = vld [vmem:[#allocation2 + $0xe9] sm:$0xff]
      %v2053 = vld [vmem:[#allocation2 + $0xf1] sm:$0xff]
      %v2054 = vld [vmem:[#allocation2 + $0x109] sm:$0xff]
      %v2055 = vld [vmem:[#allocation2 + $0x111] sm:$0xff]
      %v2056 = vld [vmem:[#allocation2 + $0x129] sm:$0xff]
      %v2057 = vld [vmem:[#allocation2 + $0x131] sm:$0xff]
      %v2058 = vld [vmem:[#allocation2 + $0x149] sm:$0xff]
      %v2059 = vld [vmem:[#allocation2 + $0x151] sm:$0xff]
      %v2060 = vld [vmem:[#allocation2 + $0x169] sm:$0xff]
      %v2061 = vld [vmem:[#allocation2 + $0x171] sm:$0xff]
      %v2062 = vld [vmem:[#allocation2 + $0x189] sm:$0xff]
      %v2063 = vld [vmem:[#allocation2 + $0x191] sm:$0xff]
      %v2064 = vld [vmem:[#allocation2 + $0x1a9] sm:$0xff]
      %v2065 = vld [vmem:[#allocation2 + $0x1b1] sm:$0xff]
      %v2066 = vld [vmem:[#allocation2 + $0x1c9] sm:$0xff]
      %v2067 = vld [vmem:[#allocation2 + $0x1d1] sm:$0xff]
      %v2068 = vld [vmem:[#allocation2 + $0x1e9] sm:$0xff]
      %v2069 = vld [vmem:[#allocation2 + $0x1f1] sm:$0xff]
      %v2070 = vpack.c.bf16 %v2039, %v2038
      %v2071 = vpack.c.bf16 %v2041, %v2040
      %v2072 = vpack.c.bf16 %v2043, %v2042
      %v2073 = vpack.c.bf16 %v2045, %v2044
      %v2074 = vpack.c.bf16 %v2047, %v2046
      %v2075 = vpack.c.bf16 %v2049, %v2048
      %v2076 = vpack.c.bf16 %v2051, %v2050
      %v2077 = vpack.c.bf16 %v2053, %v2052
      %v2078 = vpack.c.bf16 %v2055, %v2054
      %v2079 = vpack.c.bf16 %v2057, %v2056
      %v2080 = vpack.c.bf16 %v2059, %v2058
      %v2081 = vpack.c.bf16 %v2061, %v2060
      %v2082 = vpack.c.bf16 %v2063, %v2062
      %v2083 = vpack.c.bf16 %v2065, %v2064
      %v2084 = vpack.c.bf16 %v2067, %v2066
      %v2085 = vpack.c.bf16 %v2069, %v2068
      %2102 = vrot.lane.b32.xlu0 %v2070, 64
      %v2103 = vpop.permute.xlu0 %2102
      %2104 = vrot.lane.b32.xlu0 %v2071, 64
      %v2105 = vpop.permute.xlu0 %2104
      %2106 = vrot.lane.b32.xlu0 %v2072, 64
      %v2107 = vpop.permute.xlu0 %2106
      %2108 = vrot.lane.b32.xlu0 %v2073, 64
      %v2109 = vpop.permute.xlu0 %2108
      %2110 = vrot.lane.b32.xlu0 %v2074, 64
      %v2111 = vpop.permute.xlu0 %2110
      %2112 = vrot.lane.b32.xlu0 %v2075, 64
      %v2113 = vpop.permute.xlu0 %2112
      %2114 = vrot.lane.b32.xlu0 %v2076, 64
      %v2115 = vpop.permute.xlu0 %2114
      %2116 = vrot.lane.b32.xlu0 %v2077, 64
      %v2117 = vpop.permute.xlu0 %2116
      %2118 = vrot.lane.b32.xlu0 %v2078, 64
      %v2119 = vpop.permute.xlu0 %2118
      %2120 = vrot.lane.b32.xlu0 %v2079, 64
      %v2121 = vpop.permute.xlu0 %2120
      %2122 = vrot.lane.b32.xlu0 %v2080, 64
      %v2123 = vpop.permute.xlu0 %2122
      %2124 = vrot.lane.b32.xlu0 %v2081, 64
      %v2125 = vpop.permute.xlu0 %2124
      %2126 = vrot.lane.b32.xlu0 %v2082, 64
      %v2127 = vpop.permute.xlu0 %2126
      %2128 = vrot.lane.b32.xlu0 %v2083, 64
      %v2129 = vpop.permute.xlu0 %2128
      %2130 = vrot.lane.b32.xlu0 %v2084, 64
      %v2131 = vpop.permute.xlu0 %2130
      %2132 = vrot.lane.b32.xlu0 %v2085, 64
      %v2133 = vpop.permute.xlu0 %2132
      %vm2150 = vcmask 785920
      %2151 = vst.msk [vmem:[#allocation4] sm:$0xff] %vm2150, %v2103
      %2152 = vst.msk [vmem:[#allocation4 + $0x18] sm:$0xff] %vm2150, %v2105
      %2153 = vst.msk [vmem:[#allocation4 + $0x30] sm:$0xff] %vm2150, %v2107
      %2154 = vst.msk [vmem:[#allocation4 + $0x48] sm:$0xff] %vm2150, %v2109
      %2155 = vst.msk [vmem:[#allocation4 + $0x60] sm:$0xff] %vm2150, %v2111
      %2156 = vst.msk [vmem:[#allocation4 + $0x78] sm:$0xff] %vm2150, %v2113
      %2157 = vst.msk [vmem:[#allocation4 + $0x90] sm:$0xff] %vm2150, %v2115
      %2158 = vst.msk [vmem:[#allocation4 + $0xa8] sm:$0xff] %vm2150, %v2117
      %2159 = vst.msk [vmem:[#allocation4 + $0xc0] sm:$0xff] %vm2150, %v2119
      %2160 = vst.msk [vmem:[#allocation4 + $0xd8] sm:$0xff] %vm2150, %v2121
      %2161 = vst.msk [vmem:[#allocation4 + $0xf0] sm:$0xff] %vm2150, %v2123
      %2162 = vst.msk [vmem:[#allocation4 + $0x108] sm:$0xff] %vm2150, %v2125
      %2163 = vst.msk [vmem:[#allocation4 + $0x120] sm:$0xff] %vm2150, %v2127
      %2164 = vst.msk [vmem:[#allocation4 + $0x138] sm:$0xff] %vm2150, %v2129
      %2165 = vst.msk [vmem:[#allocation4 + $0x150] sm:$0xff] %vm2150, %v2131
      %2166 = vst.msk [vmem:[#allocation4 + $0x168] sm:$0xff] %vm2150, %v2133
      %v2167 = vld [vmem:[%s1812 + $0x7] sm:$0xff]
      %v2168 = vld [vmem:[%s1812 + $0xf] sm:$0xff]
      %v2169 = vld [vmem:[%s1812 + $0x27] sm:$0xff]
      %v2170 = vld [vmem:[%s1812 + $0x2f] sm:$0xff]
      %v2171 = vld [vmem:[%s1812 + $0x47] sm:$0xff]
      %v2172 = vld [vmem:[%s1812 + $0x4f] sm:$0xff]
      %v2173 = vld [vmem:[%s1812 + $0x67] sm:$0xff]
      %v2174 = vld [vmem:[%s1812 + $0x6f] sm:$0xff]
      %v2175 = vld [vmem:[%s1812 + $0x87] sm:$0xff]
      %v2176 = vld [vmem:[%s1812 + $0x8f] sm:$0xff]
      %v2177 = vld [vmem:[%s1812 + $0xa7] sm:$0xff]
      %v2178 = vld [vmem:[%s1812 + $0xaf] sm:$0xff]
      %v2179 = vld [vmem:[%s1812 + $0xc7] sm:$0xff]
      %v2180 = vld [vmem:[%s1812 + $0xcf] sm:$0xff]
      %v2181 = vld [vmem:[%s1812 + $0xe7] sm:$0xff]
      %v2182 = vld [vmem:[%s1812 + $0xef] sm:$0xff]
      %v2183 = vld [vmem:[%s1812 + $0x107] sm:$0xff]
      %v2184 = vld [vmem:[%s1812 + $0x10f] sm:$0xff]
      %v2185 = vld [vmem:[%s1812 + $0x127] sm:$0xff]
      %v2186 = vld [vmem:[%s1812 + $0x12f] sm:$0xff]
      %v2187 = vld [vmem:[%s1812 + $0x147] sm:$0xff]
      %v2188 = vld [vmem:[%s1812 + $0x14f] sm:$0xff]
      %v2189 = vld [vmem:[%s1812 + $0x167] sm:$0xff]
      %v2190 = vld [vmem:[%s1812 + $0x16f] sm:$0xff]
      %v2191 = vld [vmem:[%s1812 + $0x187] sm:$0xff]
      %v2192 = vld [vmem:[%s1812 + $0x18f] sm:$0xff]
      %v2193 = vld [vmem:[%s1812 + $0x1a7] sm:$0xff]
      %v2194 = vld [vmem:[%s1812 + $0x1af] sm:$0xff]
      %v2195 = vld [vmem:[%s1812 + $0x1c7] sm:$0xff]
      %v2196 = vld [vmem:[%s1812 + $0x1cf] sm:$0xff]
      %v2197 = vld [vmem:[%s1812 + $0x1e7] sm:$0xff]
      %v2198 = vld [vmem:[%s1812 + $0x1ef] sm:$0xff]
      %v2199 = vpack.c.bf16 %v2168, %v2167
      %v2200 = vpack.c.bf16 %v2170, %v2169
      %v2201 = vpack.c.bf16 %v2172, %v2171
      %v2202 = vpack.c.bf16 %v2174, %v2173
      %v2203 = vpack.c.bf16 %v2176, %v2175
      %v2204 = vpack.c.bf16 %v2178, %v2177
      %v2205 = vpack.c.bf16 %v2180, %v2179
      %v2206 = vpack.c.bf16 %v2182, %v2181
      %v2207 = vpack.c.bf16 %v2184, %v2183
      %v2208 = vpack.c.bf16 %v2186, %v2185
      %v2209 = vpack.c.bf16 %v2188, %v2187
      %v2210 = vpack.c.bf16 %v2190, %v2189
      %v2211 = vpack.c.bf16 %v2192, %v2191
      %v2212 = vpack.c.bf16 %v2194, %v2193
      %v2213 = vpack.c.bf16 %v2196, %v2195
      %v2214 = vpack.c.bf16 %v2198, %v2197
      %2231 = vrot.lane.b32.xlu0 %v2199, 96
      %v2232 = vpop.permute.xlu0 %2231
      %2233 = vrot.lane.b32.xlu0 %v2200, 96
      %v2234 = vpop.permute.xlu0 %2233
      %2235 = vrot.lane.b32.xlu0 %v2201, 96
      %v2236 = vpop.permute.xlu0 %2235
      %2237 = vrot.lane.b32.xlu0 %v2202, 96
      %v2238 = vpop.permute.xlu0 %2237
      %2239 = vrot.lane.b32.xlu0 %v2203, 96
      %v2240 = vpop.permute.xlu0 %2239
      %2241 = vrot.lane.b32.xlu0 %v2204, 96
      %v2242 = vpop.permute.xlu0 %2241
      %2243 = vrot.lane.b32.xlu0 %v2205, 96
      %v2244 = vpop.permute.xlu0 %2243
      %2245 = vrot.lane.b32.xlu0 %v2206, 96
      %v2246 = vpop.permute.xlu0 %2245
      %2247 = vrot.lane.b32.xlu0 %v2207, 96
      %v2248 = vpop.permute.xlu0 %2247
      %2249 = vrot.lane.b32.xlu0 %v2208, 96
      %v2250 = vpop.permute.xlu0 %2249
      %2251 = vrot.lane.b32.xlu0 %v2209, 96
      %v2252 = vpop.permute.xlu0 %2251
      %2253 = vrot.lane.b32.xlu0 %v2210, 96
      %v2254 = vpop.permute.xlu0 %2253
      %2255 = vrot.lane.b32.xlu0 %v2211, 96
      %v2256 = vpop.permute.xlu0 %2255
      %2257 = vrot.lane.b32.xlu0 %v2212, 96
      %v2258 = vpop.permute.xlu0 %2257
      %2259 = vrot.lane.b32.xlu0 %v2213, 96
      %v2260 = vpop.permute.xlu0 %2259
      %2261 = vrot.lane.b32.xlu0 %v2214, 96
      %v2262 = vpop.permute.xlu0 %2261
      %vm2279 = vcmask 1048320
      %2280 = vst.msk [vmem:[#allocation4] sm:$0xff] %vm2279, %v2232
      %2281 = vst.msk [vmem:[#allocation4 + $0x18] sm:$0xff] %vm2279, %v2234
      %2282 = vst.msk [vmem:[#allocation4 + $0x30] sm:$0xff] %vm2279, %v2236
      %2283 = vst.msk [vmem:[#allocation4 + $0x48] sm:$0xff] %vm2279, %v2238
      %2284 = vst.msk [vmem:[#allocation4 + $0x60] sm:$0xff] %vm2279, %v2240
      %2285 = vst.msk [vmem:[#allocation4 + $0x78] sm:$0xff] %vm2279, %v2242
      %2286 = vst.msk [vmem:[#allocation4 + $0x90] sm:$0xff] %vm2279, %v2244
      %2287 = vst.msk [vmem:[#allocation4 + $0xa8] sm:$0xff] %vm2279, %v2246
      %2288 = vst.msk [vmem:[#allocation4 + $0xc0] sm:$0xff] %vm2279, %v2248
      %2289 = vst.msk [vmem:[#allocation4 + $0xd8] sm:$0xff] %vm2279, %v2250
      %2290 = vst.msk [vmem:[#allocation4 + $0xf0] sm:$0xff] %vm2279, %v2252
      %2291 = vst.msk [vmem:[#allocation4 + $0x108] sm:$0xff] %vm2279, %v2254
      %2292 = vst.msk [vmem:[#allocation4 + $0x120] sm:$0xff] %vm2279, %v2256
      %2293 = vst.msk [vmem:[#allocation4 + $0x138] sm:$0xff] %vm2279, %v2258
      %2294 = vst.msk [vmem:[#allocation4 + $0x150] sm:$0xff] %vm2279, %v2260
      %2295 = vst.msk [vmem:[#allocation4 + $0x168] sm:$0xff] %vm2279, %v2262
      %v2296 = vld [vmem:[%s1812 + $0x8] sm:$0xff]
      %v2297 = vld [vmem:[%s1812 + $0x10] sm:$0xff]
      %v2298 = vld [vmem:[%s1812 + $0x28] sm:$0xff]
      %v2299 = vld [vmem:[%s1812 + $0x30] sm:$0xff]
      %v2300 = vld [vmem:[%s1812 + $0x48] sm:$0xff]
      %v2301 = vld [vmem:[%s1812 + $0x50] sm:$0xff]
      %v2302 = vld [vmem:[%s1812 + $0x68] sm:$0xff]
      %v2303 = vld [vmem:[%s1812 + $0x70] sm:$0xff]
      %v2304 = vld [vmem:[%s1812 + $0x88] sm:$0xff]
      %v2305 = vld [vmem:[%s1812 + $0x90] sm:$0xff]
      %v2306 = vld [vmem:[%s1812 + $0xa8] sm:$0xff]
      %v2307 = vld [vmem:[%s1812 + $0xb0] sm:$0xff]
      %v2308 = vld [vmem:[%s1812 + $0xc8] sm:$0xff]
      %v2309 = vld [vmem:[%s1812 + $0xd0] sm:$0xff]
      %v2310 = vld [vmem:[%s1812 + $0xe8] sm:$0xff]
      %v2311 = vld [vmem:[%s1812 + $0xf0] sm:$0xff]
      %v2312 = vld [vmem:[%s1812 + $0x108] sm:$0xff]
      %v2313 = vld [vmem:[%s1812 + $0x110] sm:$0xff]
      %v2314 = vld [vmem:[%s1812 + $0x128] sm:$0xff]
      %v2315 = vld [vmem:[%s1812 + $0x130] sm:$0xff]
      %v2316 = vld [vmem:[%s1812 + $0x148] sm:$0xff]
      %v2317 = vld [vmem:[%s1812 + $0x150] sm:$0xff]
      %v2318 = vld [vmem:[%s1812 + $0x168] sm:$0xff]
      %v2319 = vld [vmem:[%s1812 + $0x170] sm:$0xff]
      %v2320 = vld [vmem:[%s1812 + $0x188] sm:$0xff]
      %v2321 = vld [vmem:[%s1812 + $0x190] sm:$0xff]
      %v2322 = vld [vmem:[%s1812 + $0x1a8] sm:$0xff]
      %v2323 = vld [vmem:[%s1812 + $0x1b0] sm:$0xff]
      %v2324 = vld [vmem:[%s1812 + $0x1c8] sm:$0xff]
      %v2325 = vld [vmem:[%s1812 + $0x1d0] sm:$0xff]
      %v2326 = vld [vmem:[%s1812 + $0x1e8] sm:$0xff]
      %v2327 = vld [vmem:[%s1812 + $0x1f0] sm:$0xff]
      %v2328 = vpack.c.bf16 %v2297, %v2296
      %v2329 = vpack.c.bf16 %v2299, %v2298
      %v2330 = vpack.c.bf16 %v2301, %v2300
      %v2331 = vpack.c.bf16 %v2303, %v2302
      %v2332 = vpack.c.bf16 %v2305, %v2304
      %v2333 = vpack.c.bf16 %v2307, %v2306
      %v2334 = vpack.c.bf16 %v2309, %v2308
      %v2335 = vpack.c.bf16 %v2311, %v2310
      %v2336 = vpack.c.bf16 %v2313, %v2312
      %v2337 = vpack.c.bf16 %v2315, %v2314
      %v2338 = vpack.c.bf16 %v2317, %v2316
      %v2339 = vpack.c.bf16 %v2319, %v2318
      %v2340 = vpack.c.bf16 %v2321, %v2320
      %v2341 = vpack.c.bf16 %v2323, %v2322
      %v2342 = vpack.c.bf16 %v2325, %v2324
      %v2343 = vpack.c.bf16 %v2327, %v2326
      %2344 = vst.msk [vmem:[#allocation4 + $0x8] sm:$0xff] %vm280, %v2328
      %2345 = vst.msk [vmem:[#allocation4 + $0x20] sm:$0xff] %vm280, %v2329
      %2346 = vst.msk [vmem:[#allocation4 + $0x38] sm:$0xff] %vm280, %v2330
      %2347 = vst.msk [vmem:[#allocation4 + $0x50] sm:$0xff] %vm280, %v2331
      %2348 = vst.msk [vmem:[#allocation4 + $0x68] sm:$0xff] %vm280, %v2332
      %2349 = vst.msk [vmem:[#allocation4 + $0x80] sm:$0xff] %vm280, %v2333
      %2350 = vst.msk [vmem:[#allocation4 + $0x98] sm:$0xff] %vm280, %v2334
      %2351 = vst.msk [vmem:[#allocation4 + $0xb0] sm:$0xff] %vm280, %v2335
      %2352 = vst.msk [vmem:[#allocation4 + $0xc8] sm:$0xff] %vm280, %v2336
      %2353 = vst.msk [vmem:[#allocation4 + $0xe0] sm:$0xff] %vm280, %v2337
      %2354 = vst.msk [vmem:[#allocation4 + $0xf8] sm:$0xff] %vm280, %v2338
      %2355 = vst.msk [vmem:[#allocation4 + $0x110] sm:$0xff] %vm280, %v2339
      %2356 = vst.msk [vmem:[#allocation4 + $0x128] sm:$0xff] %vm280, %v2340
      %2357 = vst.msk [vmem:[#allocation4 + $0x140] sm:$0xff] %vm280, %v2341
      %2358 = vst.msk [vmem:[#allocation4 + $0x158] sm:$0xff] %vm280, %v2342
      %2359 = vst.msk [vmem:[#allocation4 + $0x170] sm:$0xff] %vm280, %v2343
      %v2360 = vld [vmem:[%s1812 + $0x9] sm:$0xff]
      %v2361 = vld [vmem:[%s1812 + $0x11] sm:$0xff]
      %v2362 = vld [vmem:[%s1812 + $0x29] sm:$0xff]
      %v2363 = vld [vmem:[%s1812 + $0x31] sm:$0xff]
      %v2364 = vld [vmem:[%s1812 + $0x49] sm:$0xff]
      %v2365 = vld [vmem:[%s1812 + $0x51] sm:$0xff]
      %v2366 = vld [vmem:[%s1812 + $0x69] sm:$0xff]
      %v2367 = vld [vmem:[%s1812 + $0x71] sm:$0xff]
      %v2368 = vld [vmem:[%s1812 + $0x89] sm:$0xff]
      %v2369 = vld [vmem:[%s1812 + $0x91] sm:$0xff]
      %v2370 = vld [vmem:[%s1812 + $0xa9] sm:$0xff]
      %v2371 = vld [vmem:[%s1812 + $0xb1] sm:$0xff]
      %v2372 = vld [vmem:[%s1812 + $0xc9] sm:$0xff]
      %v2373 = vld [vmem:[%s1812 + $0xd1] sm:$0xff]
      %v2374 = vld [vmem:[%s1812 + $0xe9] sm:$0xff]
      %v2375 = vld [vmem:[%s1812 + $0xf1] sm:$0xff]
      %v2376 = vld [vmem:[%s1812 + $0x109] sm:$0xff]
      %v2377 = vld [vmem:[%s1812 + $0x111] sm:$0xff]
      %v2378 = vld [vmem:[%s1812 + $0x129] sm:$0xff]
      %v2379 = vld [vmem:[%s1812 + $0x131] sm:$0xff]
      %v2380 = vld [vmem:[%s1812 + $0x149] sm:$0xff]
      %v2381 = vld [vmem:[%s1812 + $0x151] sm:$0xff]
      %v2382 = vld [vmem:[%s1812 + $0x169] sm:$0xff]
      %v2383 = vld [vmem:[%s1812 + $0x171] sm:$0xff]
      %v2384 = vld [vmem:[%s1812 + $0x189] sm:$0xff]
      %v2385 = vld [vmem:[%s1812 + $0x191] sm:$0xff]
      %v2386 = vld [vmem:[%s1812 + $0x1a9] sm:$0xff]
      %v2387 = vld [vmem:[%s1812 + $0x1b1] sm:$0xff]
      %v2388 = vld [vmem:[%s1812 + $0x1c9] sm:$0xff]
      %v2389 = vld [vmem:[%s1812 + $0x1d1] sm:$0xff]
      %v2390 = vld [vmem:[%s1812 + $0x1e9] sm:$0xff]
      %v2391 = vld [vmem:[%s1812 + $0x1f1] sm:$0xff]
      %v2392 = vpack.c.bf16 %v2361, %v2360
      %v2393 = vpack.c.bf16 %v2363, %v2362
      %v2394 = vpack.c.bf16 %v2365, %v2364
      %v2395 = vpack.c.bf16 %v2367, %v2366
      %v2396 = vpack.c.bf16 %v2369, %v2368
      %v2397 = vpack.c.bf16 %v2371, %v2370
      %v2398 = vpack.c.bf16 %v2373, %v2372
      %v2399 = vpack.c.bf16 %v2375, %v2374
      %v2400 = vpack.c.bf16 %v2377, %v2376
      %v2401 = vpack.c.bf16 %v2379, %v2378
      %v2402 = vpack.c.bf16 %v2381, %v2380
      %v2403 = vpack.c.bf16 %v2383, %v2382
      %v2404 = vpack.c.bf16 %v2385, %v2384
      %v2405 = vpack.c.bf16 %v2387, %v2386
      %v2406 = vpack.c.bf16 %v2389, %v2388
      %v2407 = vpack.c.bf16 %v2391, %v2390
      %2424 = vrot.lane.b32.xlu0 %v2392, 32
      %v2425 = vpop.permute.xlu0 %2424
      %2426 = vrot.lane.b32.xlu0 %v2393, 32
      %v2427 = vpop.permute.xlu0 %2426
      %2428 = vrot.lane.b32.xlu0 %v2394, 32
      %v2429 = vpop.permute.xlu0 %2428
      %2430 = vrot.lane.b32.xlu0 %v2395, 32
      %v2431 = vpop.permute.xlu0 %2430
      %2432 = vrot.lane.b32.xlu0 %v2396, 32
      %v2433 = vpop.permute.xlu0 %2432
      %2434 = vrot.lane.b32.xlu0 %v2397, 32
      %v2435 = vpop.permute.xlu0 %2434
      %2436 = vrot.lane.b32.xlu0 %v2398, 32
      %v2437 = vpop.permute.xlu0 %2436
      %2438 = vrot.lane.b32.xlu0 %v2399, 32
      %v2439 = vpop.permute.xlu0 %2438
      %2440 = vrot.lane.b32.xlu0 %v2400, 32
      %v2441 = vpop.permute.xlu0 %2440
      %2442 = vrot.lane.b32.xlu0 %v2401, 32
      %v2443 = vpop.permute.xlu0 %2442
      %2444 = vrot.lane.b32.xlu0 %v2402, 32
      %v2445 = vpop.permute.xlu0 %2444
      %2446 = vrot.lane.b32.xlu0 %v2403, 32
      %v2447 = vpop.permute.xlu0 %2446
      %2448 = vrot.lane.b32.xlu0 %v2404, 32
      %v2449 = vpop.permute.xlu0 %2448
      %2450 = vrot.lane.b32.xlu0 %v2405, 32
      %v2451 = vpop.permute.xlu0 %2450
      %2452 = vrot.lane.b32.xlu0 %v2406, 32
      %v2453 = vpop.permute.xlu0 %2452
      %2454 = vrot.lane.b32.xlu0 %v2407, 32
      %v2455 = vpop.permute.xlu0 %2454
      %2472 = vst.msk [vmem:[#allocation4 + $0x8] sm:$0xff] %vm2021, %v2425
      %2473 = vst.msk [vmem:[#allocation4 + $0x20] sm:$0xff] %vm2021, %v2427
      %2474 = vst.msk [vmem:[#allocation4 + $0x38] sm:$0xff] %vm2021, %v2429
      %2475 = vst.msk [vmem:[#allocation4 + $0x50] sm:$0xff] %vm2021, %v2431
      %2476 = vst.msk [vmem:[#allocation4 + $0x68] sm:$0xff] %vm2021, %v2433
      %2477 = vst.msk [vmem:[#allocation4 + $0x80] sm:$0xff] %vm2021, %v2435
      %2478 = vst.msk [vmem:[#allocation4 + $0x98] sm:$0xff] %vm2021, %v2437
      %2479 = vst.msk [vmem:[#allocation4 + $0xb0] sm:$0xff] %vm2021, %v2439
      %2480 = vst.msk [vmem:[#allocation4 + $0xc8] sm:$0xff] %vm2021, %v2441
      %2481 = vst.msk [vmem:[#allocation4 + $0xe0] sm:$0xff] %vm2021, %v2443
      %2482 = vst.msk [vmem:[#allocation4 + $0xf8] sm:$0xff] %vm2021, %v2445
      %2483 = vst.msk [vmem:[#allocation4 + $0x110] sm:$0xff] %vm2021, %v2447
      %2484 = vst.msk [vmem:[#allocation4 + $0x128] sm:$0xff] %vm2021, %v2449
      %2485 = vst.msk [vmem:[#allocation4 + $0x140] sm:$0xff] %vm2021, %v2451
      %2486 = vst.msk [vmem:[#allocation4 + $0x158] sm:$0xff] %vm2021, %v2453
      %2487 = vst.msk [vmem:[#allocation4 + $0x170] sm:$0xff] %vm2021, %v2455
      %s2488 = scalar_lea.vmem [#allocation2], 64
      %v2489 = vld [vmem:[%s2488 + $0x7] sm:$0xff]
      %v2490 = vld [vmem:[%s2488 + $0xf] sm:$0xff]
      %v2491 = vld [vmem:[%s2488 + $0x27] sm:$0xff]
      %v2492 = vld [vmem:[%s2488 + $0x2f] sm:$0xff]
      %v2493 = vld [vmem:[%s2488 + $0x47] sm:$0xff]
      %v2494 = vld [vmem:[%s2488 + $0x4f] sm:$0xff]
      %v2495 = vld [vmem:[%s2488 + $0x67] sm:$0xff]
      %v2496 = vld [vmem:[%s2488 + $0x6f] sm:$0xff]
      %v2497 = vld [vmem:[%s2488 + $0x87] sm:$0xff]
      %v2498 = vld [vmem:[%s2488 + $0x8f] sm:$0xff]
      %v2499 = vld [vmem:[%s2488 + $0xa7] sm:$0xff]
      %v2500 = vld [vmem:[%s2488 + $0xaf] sm:$0xff]
      %v2501 = vld [vmem:[%s2488 + $0xc7] sm:$0xff]
      %v2502 = vld [vmem:[%s2488 + $0xcf] sm:$0xff]
      %v2503 = vld [vmem:[%s2488 + $0xe7] sm:$0xff]
      %v2504 = vld [vmem:[%s2488 + $0xef] sm:$0xff]
      %v2505 = vld [vmem:[%s2488 + $0x107] sm:$0xff]
      %v2506 = vld [vmem:[%s2488 + $0x10f] sm:$0xff]
      %v2507 = vld [vmem:[%s2488 + $0x127] sm:$0xff]
      %v2508 = vld [vmem:[%s2488 + $0x12f] sm:$0xff]
      %v2509 = vld [vmem:[%s2488 + $0x147] sm:$0xff]
      %v2510 = vld [vmem:[%s2488 + $0x14f] sm:$0xff]
      %v2511 = vld [vmem:[%s2488 + $0x167] sm:$0xff]
      %v2512 = vld [vmem:[%s2488 + $0x16f] sm:$0xff]
      %v2513 = vld [vmem:[%s2488 + $0x187] sm:$0xff]
      %v2514 = vld [vmem:[%s2488 + $0x18f] sm:$0xff]
      %v2515 = vld [vmem:[%s2488 + $0x1a7] sm:$0xff]
      %v2516 = vld [vmem:[%s2488 + $0x1af] sm:$0xff]
      %v2517 = vld [vmem:[%s2488 + $0x1c7] sm:$0xff]
      %v2518 = vld [vmem:[%s2488 + $0x1cf] sm:$0xff]
      %v2519 = vld [vmem:[%s2488 + $0x1e7] sm:$0xff]
      %v2520 = vld [vmem:[%s2488 + $0x1ef] sm:$0xff]
      %v2521 = vpack.c.bf16 %v2490, %v2489
      %v2522 = vpack.c.bf16 %v2492, %v2491
      %v2523 = vpack.c.bf16 %v2494, %v2493
      %v2524 = vpack.c.bf16 %v2496, %v2495
      %v2525 = vpack.c.bf16 %v2498, %v2497
      %v2526 = vpack.c.bf16 %v2500, %v2499
      %v2527 = vpack.c.bf16 %v2502, %v2501
      %v2528 = vpack.c.bf16 %v2504, %v2503
      %v2529 = vpack.c.bf16 %v2506, %v2505
      %v2530 = vpack.c.bf16 %v2508, %v2507
      %v2531 = vpack.c.bf16 %v2510, %v2509
      %v2532 = vpack.c.bf16 %v2512, %v2511
      %v2533 = vpack.c.bf16 %v2514, %v2513
      %v2534 = vpack.c.bf16 %v2516, %v2515
      %v2535 = vpack.c.bf16 %v2518, %v2517
      %v2536 = vpack.c.bf16 %v2520, %v2519
      %2553 = vrot.lane.b32.xlu0 %v2521, 64
      %v2554 = vpop.permute.xlu0 %2553
      %2555 = vrot.lane.b32.xlu0 %v2522, 64
      %v2556 = vpop.permute.xlu0 %2555
      %2557 = vrot.lane.b32.xlu0 %v2523, 64
      %v2558 = vpop.permute.xlu0 %2557
      %2559 = vrot.lane.b32.xlu0 %v2524, 64
      %v2560 = vpop.permute.xlu0 %2559
      %2561 = vrot.lane.b32.xlu0 %v2525, 64
      %v2562 = vpop.permute.xlu0 %2561
      %2563 = vrot.lane.b32.xlu0 %v2526, 64
      %v2564 = vpop.permute.xlu0 %2563
      %2565 = vrot.lane.b32.xlu0 %v2527, 64
      %v2566 = vpop.permute.xlu0 %2565
      %2567 = vrot.lane.b32.xlu0 %v2528, 64
      %v2568 = vpop.permute.xlu0 %2567
      %2569 = vrot.lane.b32.xlu0 %v2529, 64
      %v2570 = vpop.permute.xlu0 %2569
      %2571 = vrot.lane.b32.xlu0 %v2530, 64
      %v2572 = vpop.permute.xlu0 %2571
      %2573 = vrot.lane.b32.xlu0 %v2531, 64
      %v2574 = vpop.permute.xlu0 %2573
      %2575 = vrot.lane.b32.xlu0 %v2532, 64
      %v2576 = vpop.permute.xlu0 %2575
      %2577 = vrot.lane.b32.xlu0 %v2533, 64
      %v2578 = vpop.permute.xlu0 %2577
      %2579 = vrot.lane.b32.xlu0 %v2534, 64
      %v2580 = vpop.permute.xlu0 %2579
      %2581 = vrot.lane.b32.xlu0 %v2535, 64
      %v2582 = vpop.permute.xlu0 %2581
      %2583 = vrot.lane.b32.xlu0 %v2536, 64
      %v2584 = vpop.permute.xlu0 %2583
      %2601 = vst.msk [vmem:[#allocation4 + $0x8] sm:$0xff] %vm2150, %v2554
      %2602 = vst.msk [vmem:[#allocation4 + $0x20] sm:$0xff] %vm2150, %v2556
      %2603 = vst.msk [vmem:[#allocation4 + $0x38] sm:$0xff] %vm2150, %v2558
      %2604 = vst.msk [vmem:[#allocation4 + $0x50] sm:$0xff] %vm2150, %v2560
      %2605 = vst.msk [vmem:[#allocation4 + $0x68] sm:$0xff] %vm2150, %v2562
      %2606 = vst.msk [vmem:[#allocation4 + $0x80] sm:$0xff] %vm2150, %v2564
      %2607 = vst.msk [vmem:[#allocation4 + $0x98] sm:$0xff] %vm2150, %v2566
      %2608 = vst.msk [vmem:[#allocation4 + $0xb0] sm:$0xff] %vm2150, %v2568
      %2609 = vst.msk [vmem:[#allocation4 + $0xc8] sm:$0xff] %vm2150, %v2570
      %2610 = vst.msk [vmem:[#allocation4 + $0xe0] sm:$0xff] %vm2150, %v2572
      %2611 = vst.msk [vmem:[#allocation4 + $0xf8] sm:$0xff] %vm2150, %v2574
      %2612 = vst.msk [vmem:[#allocation4 + $0x110] sm:$0xff] %vm2150, %v2576
      %2613 = vst.msk [vmem:[#allocation4 + $0x128] sm:$0xff] %vm2150, %v2578
      %2614 = vst.msk [vmem:[#allocation4 + $0x140] sm:$0xff] %vm2150, %v2580
      %2615 = vst.msk [vmem:[#allocation4 + $0x158] sm:$0xff] %vm2150, %v2582
      %2616 = vst.msk [vmem:[#allocation4 + $0x170] sm:$0xff] %vm2150, %v2584
      %v2617 = vld [vmem:[%s2488 + $0x8] sm:$0xff]
      %v2618 = vld [vmem:[%s2488 + $0x10] sm:$0xff]
      %v2619 = vld [vmem:[%s2488 + $0x28] sm:$0xff]
      %v2620 = vld [vmem:[%s2488 + $0x30] sm:$0xff]
      %v2621 = vld [vmem:[%s2488 + $0x48] sm:$0xff]
      %v2622 = vld [vmem:[%s2488 + $0x50] sm:$0xff]
      %v2623 = vld [vmem:[%s2488 + $0x68] sm:$0xff]
      %v2624 = vld [vmem:[%s2488 + $0x70] sm:$0xff]
      %v2625 = vld [vmem:[%s2488 + $0x88] sm:$0xff]
      %v2626 = vld [vmem:[%s2488 + $0x90] sm:$0xff]
      %v2627 = vld [vmem:[%s2488 + $0xa8] sm:$0xff]
      %v2628 = vld [vmem:[%s2488 + $0xb0] sm:$0xff]
      %v2629 = vld [vmem:[%s2488 + $0xc8] sm:$0xff]
      %v2630 = vld [vmem:[%s2488 + $0xd0] sm:$0xff]
      %v2631 = vld [vmem:[%s2488 + $0xe8] sm:$0xff]
      %v2632 = vld [vmem:[%s2488 + $0xf0] sm:$0xff]
      %v2633 = vld [vmem:[%s2488 + $0x108] sm:$0xff]
      %v2634 = vld [vmem:[%s2488 + $0x110] sm:$0xff]
      %v2635 = vld [vmem:[%s2488 + $0x128] sm:$0xff]
      %v2636 = vld [vmem:[%s2488 + $0x130] sm:$0xff]
      %v2637 = vld [vmem:[%s2488 + $0x148] sm:$0xff]
      %v2638 = vld [vmem:[%s2488 + $0x150] sm:$0xff]
      %v2639 = vld [vmem:[%s2488 + $0x168] sm:$0xff]
      %v2640 = vld [vmem:[%s2488 + $0x170] sm:$0xff]
      %v2641 = vld [vmem:[%s2488 + $0x188] sm:$0xff]
      %v2642 = vld [vmem:[%s2488 + $0x190] sm:$0xff]
      %v2643 = vld [vmem:[%s2488 + $0x1a8] sm:$0xff]
      %v2644 = vld [vmem:[%s2488 + $0x1b0] sm:$0xff]
      %v2645 = vld [vmem:[%s2488 + $0x1c8] sm:$0xff]
      %v2646 = vld [vmem:[%s2488 + $0x1d0] sm:$0xff]
      %v2647 = vld [vmem:[%s2488 + $0x1e8] sm:$0xff]
      %v2648 = vld [vmem:[%s2488 + $0x1f0] sm:$0xff]
      %v2649 = vpack.c.bf16 %v2618, %v2617
      %v2650 = vpack.c.bf16 %v2620, %v2619
      %v2651 = vpack.c.bf16 %v2622, %v2621
      %v2652 = vpack.c.bf16 %v2624, %v2623
      %v2653 = vpack.c.bf16 %v2626, %v2625
      %v2654 = vpack.c.bf16 %v2628, %v2627
      %v2655 = vpack.c.bf16 %v2630, %v2629
      %v2656 = vpack.c.bf16 %v2632, %v2631
      %v2657 = vpack.c.bf16 %v2634, %v2633
      %v2658 = vpack.c.bf16 %v2636, %v2635
      %v2659 = vpack.c.bf16 %v2638, %v2637
      %v2660 = vpack.c.bf16 %v2640, %v2639
      %v2661 = vpack.c.bf16 %v2642, %v2641
      %v2662 = vpack.c.bf16 %v2644, %v2643
      %v2663 = vpack.c.bf16 %v2646, %v2645
      %v2664 = vpack.c.bf16 %v2648, %v2647
      %2681 = vrot.lane.b32.xlu0 %v2649, 96
      %v2682 = vpop.permute.xlu0 %2681
      %2683 = vrot.lane.b32.xlu0 %v2650, 96
      %v2684 = vpop.permute.xlu0 %2683
      %2685 = vrot.lane.b32.xlu0 %v2651, 96
      %v2686 = vpop.permute.xlu0 %2685
      %2687 = vrot.lane.b32.xlu0 %v2652, 96
      %v2688 = vpop.permute.xlu0 %2687
      %2689 = vrot.lane.b32.xlu0 %v2653, 96
      %v2690 = vpop.permute.xlu0 %2689
      %2691 = vrot.lane.b32.xlu0 %v2654, 96
      %v2692 = vpop.permute.xlu0 %2691
      %2693 = vrot.lane.b32.xlu0 %v2655, 96
      %v2694 = vpop.permute.xlu0 %2693
      %2695 = vrot.lane.b32.xlu0 %v2656, 96
      %v2696 = vpop.permute.xlu0 %2695
      %2697 = vrot.lane.b32.xlu0 %v2657, 96
      %v2698 = vpop.permute.xlu0 %2697
      %2699 = vrot.lane.b32.xlu0 %v2658, 96
      %v2700 = vpop.permute.xlu0 %2699
      %2701 = vrot.lane.b32.xlu0 %v2659, 96
      %v2702 = vpop.permute.xlu0 %2701
      %2703 = vrot.lane.b32.xlu0 %v2660, 96
      %v2704 = vpop.permute.xlu0 %2703
      %2705 = vrot.lane.b32.xlu0 %v2661, 96
      %v2706 = vpop.permute.xlu0 %2705
      %2707 = vrot.lane.b32.xlu0 %v2662, 96
      %v2708 = vpop.permute.xlu0 %2707
      %2709 = vrot.lane.b32.xlu0 %v2663, 96
      %v2710 = vpop.permute.xlu0 %2709
      %2711 = vrot.lane.b32.xlu0 %v2664, 96
      %v2712 = vpop.permute.xlu0 %2711
      %2729 = vst.msk [vmem:[#allocation4 + $0x8] sm:$0xff] %vm2279, %v2682
      %2730 = vst.msk [vmem:[#allocation4 + $0x20] sm:$0xff] %vm2279, %v2684
      %2731 = vst.msk [vmem:[#allocation4 + $0x38] sm:$0xff] %vm2279, %v2686
      %2732 = vst.msk [vmem:[#allocation4 + $0x50] sm:$0xff] %vm2279, %v2688
      %2733 = vst.msk [vmem:[#allocation4 + $0x68] sm:$0xff] %vm2279, %v2690
      %2734 = vst.msk [vmem:[#allocation4 + $0x80] sm:$0xff] %vm2279, %v2692
      %2735 = vst.msk [vmem:[#allocation4 + $0x98] sm:$0xff] %vm2279, %v2694
      %2736 = vst.msk [vmem:[#allocation4 + $0xb0] sm:$0xff] %vm2279, %v2696
      %2737 = vst.msk [vmem:[#allocation4 + $0xc8] sm:$0xff] %vm2279, %v2698
      %2738 = vst.msk [vmem:[#allocation4 + $0xe0] sm:$0xff] %vm2279, %v2700
      %2739 = vst.msk [vmem:[#allocation4 + $0xf8] sm:$0xff] %vm2279, %v2702
      %2740 = vst.msk [vmem:[#allocation4 + $0x110] sm:$0xff] %vm2279, %v2704
      %2741 = vst.msk [vmem:[#allocation4 + $0x128] sm:$0xff] %vm2279, %v2706
      %2742 = vst.msk [vmem:[#allocation4 + $0x140] sm:$0xff] %vm2279, %v2708
      %2743 = vst.msk [vmem:[#allocation4 + $0x158] sm:$0xff] %vm2279, %v2710
      %2744 = vst.msk [vmem:[#allocation4 + $0x170] sm:$0xff] %vm2279, %v2712
      %v2745 = vld [vmem:[%s2488 + $0x9] sm:$0xff]
      %v2746 = vld [vmem:[%s2488 + $0x11] sm:$0xff]
      %v2747 = vld [vmem:[%s2488 + $0x29] sm:$0xff]
      %v2748 = vld [vmem:[%s2488 + $0x31] sm:$0xff]
      %v2749 = vld [vmem:[%s2488 + $0x49] sm:$0xff]
      %v2750 = vld [vmem:[%s2488 + $0x51] sm:$0xff]
      %v2751 = vld [vmem:[%s2488 + $0x69] sm:$0xff]
      %v2752 = vld [vmem:[%s2488 + $0x71] sm:$0xff]
      %v2753 = vld [vmem:[%s2488 + $0x89] sm:$0xff]
      %v2754 = vld [vmem:[%s2488 + $0x91] sm:$0xff]
      %v2755 = vld [vmem:[%s2488 + $0xa9] sm:$0xff]
      %v2756 = vld [vmem:[%s2488 + $0xb1] sm:$0xff]
      %v2757 = vld [vmem:[%s2488 + $0xc9] sm:$0xff]
      %v2758 = vld [vmem:[%s2488 + $0xd1] sm:$0xff]
      %v2759 = vld [vmem:[%s2488 + $0xe9] sm:$0xff]
      %v2760 = vld [vmem:[%s2488 + $0xf1] sm:$0xff]
      %v2761 = vld [vmem:[%s2488 + $0x109] sm:$0xff]
      %v2762 = vld [vmem:[%s2488 + $0x111] sm:$0xff]
      %v2763 = vld [vmem:[%s2488 + $0x129] sm:$0xff]
      %v2764 = vld [vmem:[%s2488 + $0x131] sm:$0xff]
      %v2765 = vld [vmem:[%s2488 + $0x149] sm:$0xff]
      %v2766 = vld [vmem:[%s2488 + $0x151] sm:$0xff]
      %v2767 = vld [vmem:[%s2488 + $0x169] sm:$0xff]
      %v2768 = vld [vmem:[%s2488 + $0x171] sm:$0xff]
      %v2769 = vld [vmem:[%s2488 + $0x189] sm:$0xff]
      %v2770 = vld [vmem:[%s2488 + $0x191] sm:$0xff]
      %v2771 = vld [vmem:[%s2488 + $0x1a9] sm:$0xff]
      %v2772 = vld [vmem:[%s2488 + $0x1b1] sm:$0xff]
      %v2773 = vld [vmem:[%s2488 + $0x1c9] sm:$0xff]
      %v2774 = vld [vmem:[%s2488 + $0x1d1] sm:$0xff]
      %v2775 = vld [vmem:[%s2488 + $0x1e9] sm:$0xff]
      %v2776 = vld [vmem:[%s2488 + $0x1f1] sm:$0xff]
      %v2777 = vpack.c.bf16 %v2746, %v2745
      %v2778 = vpack.c.bf16 %v2748, %v2747
      %v2779 = vpack.c.bf16 %v2750, %v2749
      %v2780 = vpack.c.bf16 %v2752, %v2751
      %v2781 = vpack.c.bf16 %v2754, %v2753
      %v2782 = vpack.c.bf16 %v2756, %v2755
      %v2783 = vpack.c.bf16 %v2758, %v2757
      %v2784 = vpack.c.bf16 %v2760, %v2759
      %v2785 = vpack.c.bf16 %v2762, %v2761
      %v2786 = vpack.c.bf16 %v2764, %v2763
      %v2787 = vpack.c.bf16 %v2766, %v2765
      %v2788 = vpack.c.bf16 %v2768, %v2767
      %v2789 = vpack.c.bf16 %v2770, %v2769
      %v2790 = vpack.c.bf16 %v2772, %v2771
      %v2791 = vpack.c.bf16 %v2774, %v2773
      %v2792 = vpack.c.bf16 %v2776, %v2775
      %2793 = vst.msk [vmem:[#allocation4 + $0x10] sm:$0xff] %vm280, %v2777
      %2794 = vst.msk [vmem:[#allocation4 + $0x28] sm:$0xff] %vm280, %v2778
      %2795 = vst.msk [vmem:[#allocation4 + $0x40] sm:$0xff] %vm280, %v2779
      %2796 = vst.msk [vmem:[#allocation4 + $0x58] sm:$0xff] %vm280, %v2780
      %2797 = vst.msk [vmem:[#allocation4 + $0x70] sm:$0xff] %vm280, %v2781
      %2798 = vst.msk [vmem:[#allocation4 + $0x88] sm:$0xff] %vm280, %v2782
      %2799 = vst.msk [vmem:[#allocation4 + $0xa0] sm:$0xff] %vm280, %v2783
      %2800 = vst.msk [vmem:[#allocation4 + $0xb8] sm:$0xff] %vm280, %v2784
      %2801 = vst.msk [vmem:[#allocation4 + $0xd0] sm:$0xff] %vm280, %v2785
      %2802 = vst.msk [vmem:[#allocation4 + $0xe8] sm:$0xff] %vm280, %v2786
      %2803 = vst.msk [vmem:[#allocation4 + $0x100] sm:$0xff] %vm280, %v2787
      %2804 = vst.msk [vmem:[#allocation4 + $0x118] sm:$0xff] %vm280, %v2788
      %2805 = vst.msk [vmem:[#allocation4 + $0x130] sm:$0xff] %vm280, %v2789
      %2806 = vst.msk [vmem:[#allocation4 + $0x148] sm:$0xff] %vm280, %v2790
      %2807 = vst.msk [vmem:[#allocation4 + $0x160] sm:$0xff] %vm280, %v2791
      %2808 = vst.msk [vmem:[#allocation4 + $0x178] sm:$0xff] %vm280, %v2792
      %v2809 = vld [vmem:[#allocation4] sm:$0xff]
      %v2810 = vld [vmem:[#allocation4 + $0x8] sm:$0xff]
      %v2811 = vld [vmem:[#allocation4 + $0x10] sm:$0xff]
      %v2812 = vld [vmem:[#allocation4 + $0x18] sm:$0xff]
      %v2813 = vld [vmem:[#allocation4 + $0x20] sm:$0xff]
      %v2814 = vld [vmem:[#allocation4 + $0x28] sm:$0xff]
      %v2815 = vld [vmem:[#allocation4 + $0x30] sm:$0xff]
      %v2816 = vld [vmem:[#allocation4 + $0x38] sm:$0xff]
      %v2817 = vld [vmem:[#allocation4 + $0x40] sm:$0xff]
      %v2818 = vld [vmem:[#allocation4 + $0x48] sm:$0xff]
      %v2819 = vld [vmem:[#allocation4 + $0x50] sm:$0xff]
      %v2820 = vld [vmem:[#allocation4 + $0x58] sm:$0xff]
      %v2821 = vld [vmem:[#allocation4 + $0x60] sm:$0xff]
      %v2822 = vld [vmem:[#allocation4 + $0x68] sm:$0xff]
      %v2823 = vld [vmem:[#allocation4 + $0x70] sm:$0xff]
      %v2824 = vld [vmem:[#allocation4 + $0x78] sm:$0xff]
      %v2825 = vld [vmem:[#allocation4 + $0x80] sm:$0xff]
      %v2826 = vld [vmem:[#allocation4 + $0x88] sm:$0xff]
      %v2827 = vld [vmem:[#allocation4 + $0x90] sm:$0xff]
      %v2828 = vld [vmem:[#allocation4 + $0x98] sm:$0xff]
      %v2829 = vld [vmem:[#allocation4 + $0xa0] sm:$0xff]
      %v2830 = vld [vmem:[#allocation4 + $0xa8] sm:$0xff]
      %v2831 = vld [vmem:[#allocation4 + $0xb0] sm:$0xff]
      %v2832 = vld [vmem:[#allocation4 + $0xb8] sm:$0xff]
      %v2833 = vld [vmem:[#allocation4 + $0xc0] sm:$0xff]
      %v2834 = vld [vmem:[#allocation4 + $0xc8] sm:$0xff]
      %v2835 = vld [vmem:[#allocation4 + $0xd0] sm:$0xff]
      %v2836 = vld [vmem:[#allocation4 + $0xd8] sm:$0xff]
      %v2837 = vld [vmem:[#allocation4 + $0xe0] sm:$0xff]
      %v2838 = vld [vmem:[#allocation4 + $0xe8] sm:$0xff]
      %v2839 = vld [vmem:[#allocation4 + $0xf0] sm:$0xff]
      %v2840 = vld [vmem:[#allocation4 + $0xf8] sm:$0xff]
      %v2841 = vld [vmem:[#allocation4 + $0x100] sm:$0xff]
      %v2842 = vld [vmem:[#allocation4 + $0x108] sm:$0xff]
      %v2843 = vld [vmem:[#allocation4 + $0x110] sm:$0xff]
      %v2844 = vld [vmem:[#allocation4 + $0x118] sm:$0xff]
      %v2845 = vld [vmem:[#allocation4 + $0x120] sm:$0xff]
      %v2846 = vld [vmem:[#allocation4 + $0x128] sm:$0xff]
      %v2847 = vld [vmem:[#allocation4 + $0x130] sm:$0xff]
      %v2848 = vld [vmem:[#allocation4 + $0x138] sm:$0xff]
      %v2849 = vld [vmem:[#allocation4 + $0x140] sm:$0xff]
      %v2850 = vld [vmem:[#allocation4 + $0x148] sm:$0xff]
      %v2851 = vld [vmem:[#allocation4 + $0x150] sm:$0xff]
      %v2852 = vld [vmem:[#allocation4 + $0x158] sm:$0xff]
      %v2853 = vld [vmem:[#allocation4 + $0x160] sm:$0xff]
      %v2854 = vld [vmem:[#allocation4 + $0x168] sm:$0xff]
      %v2855 = vld [vmem:[#allocation4 + $0x170] sm:$0xff]
      %v2856 = vld [vmem:[#allocation4 + $0x178] sm:$0xff]
      %v2857 = vld [vmem:[%s4] sm:$0xf]
      %v2858 = vld [vmem:[%s4 + $0x4] sm:$0xf]
      %v2859 = vld [vmem:[%s4 + $0x8] sm:$0xf]
      %v2860 = vld [vmem:[%s4 + $0xc] sm:$0xf]
      %v2861 = vld [vmem:[%s4 + $0x10] sm:$0xf]
      %v2862 = vld [vmem:[%s4 + $0x14] sm:$0xf]
      %v2863 = vld [vmem:[%s4 + $0x18] sm:$0xf]
      %v2864 = vld [vmem:[%s4 + $0x1c] sm:$0xf]
      %v2865 = vld [vmem:[%s4 + $0x20] sm:$0xf]
      %v2866 = vld [vmem:[%s4 + $0x24] sm:$0xf]
      %v2867 = vld [vmem:[%s4 + $0x28] sm:$0xf]
      %v2868 = vld [vmem:[%s4 + $0x2c] sm:$0xf]
      %v2869 = vld [vmem:[%s4 + $0x30] sm:$0xf]
      %v2870 = vld [vmem:[%s4 + $0x34] sm:$0xf]
      %v2871 = vld [vmem:[%s4 + $0x38] sm:$0xf]
      %v2872 = vld [vmem:[%s4 + $0x3c] sm:$0xf]
      %v2873 = vld [vmem:[%s4 + $0x40] sm:$0xf]
      %v2874 = vld [vmem:[%s4 + $0x44] sm:$0xf]
      %v2875 = vld [vmem:[%s4 + $0x48] sm:$0xf]
      %v2876 = vld [vmem:[%s4 + $0x4c] sm:$0xf]
      %v2877 = vld [vmem:[%s4 + $0x50] sm:$0xf]
      %v2878 = vld [vmem:[%s4 + $0x54] sm:$0xf]
      %v2879 = vld [vmem:[%s4 + $0x58] sm:$0xf]
      %v2880 = vld [vmem:[%s4 + $0x5c] sm:$0xf]
      %v2881 = vld [vmem:[%s4 + $0x60] sm:$0xf]
      %v2882 = vld [vmem:[%s4 + $0x64] sm:$0xf]
      %v2883 = vld [vmem:[%s4 + $0x68] sm:$0xf]
      %v2884 = vld [vmem:[%s4 + $0x6c] sm:$0xf]
      %v2885 = vld [vmem:[%s4 + $0x70] sm:$0xf]
      %v2886 = vld [vmem:[%s4 + $0x74] sm:$0xf]
      %v2887 = vld [vmem:[%s4 + $0x78] sm:$0xf]
      %v2888 = vld [vmem:[%s4 + $0x7c] sm:$0xf]
      %v2889 = vld [vmem:[%s4 + $0x80] sm:$0xf]
      %v2890 = vld [vmem:[%s4 + $0x84] sm:$0xf]
      %v2891 = vld [vmem:[%s4 + $0x88] sm:$0xf]
      %v2892 = vld [vmem:[%s4 + $0x8c] sm:$0xf]
      %v2929 = vunpack.c.l.b16 %v2857
      %v2930 = vunpack.c.l.b16 %v2858
      %v2931 = vunpack.c.l.b16 %v2859
      %v2932 = vunpack.c.l.b16 %v2860
      %v2933 = vunpack.c.l.b16 %v2861
      %v2934 = vunpack.c.l.b16 %v2862
      %v2935 = vunpack.c.l.b16 %v2863
      %v2936 = vunpack.c.l.b16 %v2864
      %v2937 = vunpack.c.l.b16 %v2865
      %v2938 = vunpack.c.l.b16 %v2866
      %v2939 = vunpack.c.l.b16 %v2867
      %v2940 = vunpack.c.l.b16 %v2868
      %v2941 = vunpack.c.l.b16 %v2869
      %v2942 = vunpack.c.l.b16 %v2870
      %v2943 = vunpack.c.l.b16 %v2871
      %v2944 = vunpack.c.l.b16 %v2872
      %v2945 = vunpack.c.l.b16 %v2873
      %v2946 = vunpack.c.l.b16 %v2874
      %v2947 = vunpack.c.l.b16 %v2875
      %v2948 = vunpack.c.l.b16 %v2876
      %v2949 = vunpack.c.l.b16 %v2877
      %v2950 = vunpack.c.l.b16 %v2878
      %v2951 = vunpack.c.l.b16 %v2879
      %v2952 = vunpack.c.l.b16 %v2880
      %v2953 = vunpack.c.l.b16 %v2881
      %v2954 = vunpack.c.l.b16 %v2882
      %v2955 = vunpack.c.l.b16 %v2883
      %v2956 = vunpack.c.l.b16 %v2884
      %v2957 = vunpack.c.l.b16 %v2885
      %v2958 = vunpack.c.l.b16 %v2886
      %v2959 = vunpack.c.l.b16 %v2887
      %v2960 = vunpack.c.l.b16 %v2888
      %v2961 = vunpack.c.l.b16 %v2889
      %v2962 = vunpack.c.l.b16 %v2890
      %v2963 = vunpack.c.l.b16 %v2891
      %v2964 = vunpack.c.l.b16 %v2892
      %v2965 = vpack.c.b16 %v2930, %v2929
      %v2966 = vpack.c.b16 %v2932, %v2931
      %v2967 = vpack.c.b16 %v2934, %v2933
      %v2968 = vpack.c.b16 %v2936, %v2935
      %v2969 = vpack.c.b16 %v2938, %v2937
      %v2970 = vpack.c.b16 %v2940, %v2939
      %v2971 = vpack.c.b16 %v2942, %v2941
      %v2972 = vpack.c.b16 %v2944, %v2943
      %v2973 = vpack.c.b16 %v2946, %v2945
      %v2974 = vpack.c.b16 %v2948, %v2947
      %v2975 = vpack.c.b16 %v2950, %v2949
      %v2976 = vpack.c.b16 %v2952, %v2951
      %v2977 = vpack.c.b16 %v2954, %v2953
      %v2978 = vpack.c.b16 %v2956, %v2955
      %v2979 = vpack.c.b16 %v2958, %v2957
      %v2980 = vpack.c.b16 %v2960, %v2959
      %v2981 = vpack.c.b16 %v2962, %v2961
      %v2982 = vpack.c.b16 %v2964, %v2963
      %v3002 = vsel %vm280, %v2811, 0
      %v3005 = vsel %vm280, %v2814, 0
      %v3008 = vsel %vm280, %v2817, 0
      %v3011 = vsel %vm280, %v2820, 0
      %v3014 = vsel %vm280, %v2823, 0
      %v3017 = vsel %vm280, %v2826, 0
      %v3020 = vsel %vm280, %v2829, 0
      %v3023 = vsel %vm280, %v2832, 0
      %v3026 = vsel %vm280, %v2835, 0
      %v3029 = vsel %vm280, %v2838, 0
      %v3032 = vsel %vm280, %v2841, 0
      %v3035 = vsel %vm280, %v2844, 0
      %v3038 = vsel %vm280, %v2847, 0
      %v3041 = vsel %vm280, %v2850, 0
      %v3044 = vsel %vm280, %v2853, 0
      %v3047 = vsel %vm280, %v2856, 0
      %3049 = vmatprep.subr.bf16.mxu0 0
      %3050 = vmatpush1.bf16.msra.mxu0 %v2965
      %3051 = vmatprep.subr.bf16.mxu0 0
      %3052 = vmatpush1.bf16.msra.mxu0 %v2966
      %3053 = vmatprep.subr.bf16.mxu0 0
      %3054 = vmatpush1.bf16.msra.mxu0 %v2967
      %3055 = vmatprep.subr.bf16.mxu0 0
      %3056 = vmatpush1.bf16.msra.mxu0 %v2968
      %3057 = vmatprep.subr.bf16.mxu0 0
      %3058 = vmatpush1.bf16.msra.mxu0 %v2969
      %3059 = vmatprep.subr.bf16.mxu0 0
      %3060 = vmatpush1.bf16.msra.mxu0 %v2970
      %3061 = vmatprep.subr.bf16.mxu0 0
      %3062 = vmatpush1.bf16.msra.mxu0 %v2971
      %3063 = vmatprep.subr.bf16.mxu0 0
      %3064 = vmatpush1.bf16.msra.mxu0 %v2972
      %3065 = vmatprep.subr.bf16.mxu0 0
      %3066 = vmatpush1.bf16.msra.mxu0 %v2973
      %3067 = vmatprep.subr.bf16.mxu0 0
      %3068 = vmatpush1.bf16.msra.mxu0 %v2974
      %3069 = vmatprep.subr.bf16.mxu0 0
      %3070 = vmatpush1.bf16.msra.mxu0 %v2975
      %3071 = vmatprep.subr.bf16.mxu0 0
      %3072 = vmatpush1.bf16.msra.mxu0 %v2976
      %3073 = vmatprep.subr.bf16.mxu0 0
      %3074 = vmatpush1.bf16.msra.mxu0 %v2977
      %3075 = vmatprep.subr.bf16.mxu0 0
      %3076 = vmatpush1.bf16.msra.mxu0 %v2978
      %3077 = vmatprep.subr.bf16.mxu0 0
      %3078 = vmatpush1.bf16.msra.mxu0 %v2979
      %3079 = vmatprep.subr.bf16.mxu0 0
      %3080 = vmatpush1.bf16.msra.mxu0 %v2980
      %3081 = vmatprep.mubr.bf16.mxu0 %v2810
      %3082 = vmatmul.mubr.bf16.gmra.mrb[0].mxu0 %v2809
      %v3083 = vpop.f32.mrb[0].mxu0
      %v3084 = vadd.f32 0.0, %v3083
      %v3085 = vpop.f32.mrb[0].mxu0
      %v3086 = vpop.f32.mrb[0].mxu0
      %v3087 = vadd.f32 0.0, %v3086
      %v3088 = vpop.f32.mrb[0].mxu0
      %3089 = vmatprep.mubr.bf16.mxu0 %v2813
      %3090 = vmatmul.mubr.bf16.gmra.mrb[0].mxu0 %v2812
      %v3091 = vpop.f32.mrb[0].mxu0
      %v3092 = vadd.f32 0.0, %v3091
      %v3093 = vpop.f32.mrb[0].mxu0
      %v3094 = vpop.f32.mrb[0].mxu0
      %v3095 = vadd.f32 0.0, %v3094
      %v3096 = vpop.f32.mrb[0].mxu0
      %3097 = vmatprep.mubr.bf16.mxu0 %v2816
      %3098 = vmatmul.mubr.bf16.gmra.mrb[0].mxu0 %v2815
      %v3099 = vpop.f32.mrb[0].mxu0
      %v3100 = vadd.f32 0.0, %v3099
      %v3101 = vpop.f32.mrb[0].mxu0
      %v3102 = vpop.f32.mrb[0].mxu0
      %v3103 = vadd.f32 0.0, %v3102
      %v3104 = vpop.f32.mrb[0].mxu0
      %3105 = vmatprep.mubr.bf16.mxu0 %v2819
      %3106 = vmatmul.mubr.bf16.gmra.mrb[0].mxu0 %v2818
      %v3107 = vpop.f32.mrb[0].mxu0
      %v3108 = vadd.f32 0.0, %v3107
      %v3109 = vpop.f32.mrb[0].mxu0
      %v3110 = vpop.f32.mrb[0].mxu0
      %v3111 = vadd.f32 0.0, %v3110
      %v3112 = vpop.f32.mrb[0].mxu0
      %3113 = vmatprep.mubr.bf16.mxu0 %v2822
      %3114 = vmatmul.mubr.bf16.gmra.mrb[0].mxu0 %v2821
      %v3115 = vpop.f32.mrb[0].mxu0
      %v3116 = vadd.f32 0.0, %v3115
      %v3117 = vpop.f32.mrb[0].mxu0
      %v3118 = vpop.f32.mrb[0].mxu0
      %v3119 = vadd.f32 0.0, %v3118
      %v3120 = vpop.f32.mrb[0].mxu0
      %3121 = vmatprep.mubr.bf16.mxu0 %v2825
      %3122 = vmatmul.mubr.bf16.gmra.mrb[0].mxu0 %v2824
      %v3123 = vpop.f32.mrb[0].mxu0
      %v3124 = vadd.f32 0.0, %v3123
      %v3125 = vpop.f32.mrb[0].mxu0
      %v3126 = vpop.f32.mrb[0].mxu0
      %v3127 = vadd.f32 0.0, %v3126
      %v3128 = vpop.f32.mrb[0].mxu0
      %3129 = vmatprep.mubr.bf16.mxu0 %v2828
      %3130 = vmatmul.mubr.bf16.gmra.mrb[0].mxu0 %v2827
      %v3131 = vpop.f32.mrb[0].mxu0
      %v3132 = vadd.f32 0.0, %v3131
      %v3133 = vpop.f32.mrb[0].mxu0
      %v3134 = vpop.f32.mrb[0].mxu0
      %v3135 = vadd.f32 0.0, %v3134
      %v3136 = vpop.f32.mrb[0].mxu0
      %3137 = vmatprep.mubr.bf16.mxu0 %v2831
      %3138 = vmatmul.mubr.bf16.gmra.mrb[0].mxu0 %v2830
      %v3139 = vpop.f32.mrb[0].mxu0
      %v3140 = vadd.f32 0.0, %v3139
      %v3141 = vpop.f32.mrb[0].mxu0
      %v3142 = vpop.f32.mrb[0].mxu0
      %v3143 = vadd.f32 0.0, %v3142
      %v3144 = vpop.f32.mrb[0].mxu0
      %3145 = vmatprep.mubr.bf16.mxu0 %v2834
      %3146 = vmatmul.mubr.bf16.gmra.mrb[0].mxu0 %v2833
      %v3147 = vpop.f32.mrb[0].mxu0
      %v3148 = vadd.f32 0.0, %v3147
      %v3149 = vpop.f32.mrb[0].mxu0
      %v3150 = vpop.f32.mrb[0].mxu0
      %v3151 = vadd.f32 0.0, %v3150
      %v3152 = vpop.f32.mrb[0].mxu0
      %3153 = vmatprep.mubr.bf16.mxu0 %v2837
      %3154 = vmatmul.mubr.bf16.gmra.mrb[0].mxu0 %v2836
      %v3155 = vpop.f32.mrb[0].mxu0
      %v3156 = vadd.f32 0.0, %v3155
      %v3157 = vpop.f32.mrb[0].mxu0
      %v3158 = vpop.f32.mrb[0].mxu0
      %v3159 = vadd.f32 0.0, %v3158
      %v3160 = vpop.f32.mrb[0].mxu0
      %3161 = vmatprep.mubr.bf16.mxu0 %v2840
      %3162 = vmatmul.mubr.bf16.gmra.mrb[0].mxu0 %v2839
      %v3163 = vpop.f32.mrb[0].mxu0
      %v3164 = vadd.f32 0.0, %v3163
      %v3165 = vpop.f32.mrb[0].mxu0
      %v3166 = vpop.f32.mrb[0].mxu0
      %v3167 = vadd.f32 0.0, %v3166
      %v3168 = vpop.f32.mrb[0].mxu0
      %3169 = vmatprep.mubr.bf16.mxu0 %v2843
      %3170 = vmatmul.mubr.bf16.gmra.mrb[0].mxu0 %v2842
      %v3171 = vpop.f32.mrb[0].mxu0
      %v3172 = vadd.f32 0.0, %v3171
      %v3173 = vpop.f32.mrb[0].mxu0
      %v3174 = vpop.f32.mrb[0].mxu0
      %v3175 = vadd.f32 0.0, %v3174
      %v3176 = vpop.f32.mrb[0].mxu0
      %3177 = vmatprep.mubr.bf16.mxu0 %v2846
      %3178 = vmatmul.mubr.bf16.gmra.mrb[0].mxu0 %v2845
      %v3179 = vpop.f32.mrb[0].mxu0
      %v3180 = vadd.f32 0.0, %v3179
      %v3181 = vpop.f32.mrb[0].mxu0
      %v3182 = vpop.f32.mrb[0].mxu0
      %v3183 = vadd.f32 0.0, %v3182
      %v3184 = vpop.f32.mrb[0].mxu0
      %3185 = vmatprep.mubr.bf16.mxu0 %v2849
      %3186 = vmatmul.mubr.bf16.gmra.mrb[0].mxu0 %v2848
      %v3187 = vpop.f32.mrb[0].mxu0
      %v3188 = vadd.f32 0.0, %v3187
      %v3189 = vpop.f32.mrb[0].mxu0
      %v3190 = vpop.f32.mrb[0].mxu0
      %v3191 = vadd.f32 0.0, %v3190
      %v3192 = vpop.f32.mrb[0].mxu0
      %3193 = vmatprep.mubr.bf16.mxu0 %v2852
      %3194 = vmatmul.mubr.bf16.gmra.mrb[0].mxu0 %v2851
      %v3195 = vpop.f32.mrb[0].mxu0
      %v3196 = vadd.f32 0.0, %v3195
      %v3197 = vpop.f32.mrb[0].mxu0
      %v3198 = vpop.f32.mrb[0].mxu0
      %v3199 = vadd.f32 0.0, %v3198
      %v3200 = vpop.f32.mrb[0].mxu0
      %3201 = vmatprep.mubr.bf16.mxu0 %v2855
      %3202 = vmatmul.mubr.bf16.gmra.mrb[0].mxu0 %v2854
      %v3203 = vpop.f32.mrb[0].mxu0
      %v3204 = vadd.f32 0.0, %v3203
      %v3205 = vpop.f32.mrb[0].mxu0
      %v3206 = vpop.f32.mrb[0].mxu0
      %v3207 = vadd.f32 0.0, %v3206
      %v3208 = vpop.f32.mrb[0].mxu0
      %3209 = vdwg.mxu0
      %3210 = vmatprep.subr.bf16.mxu0 0
      %3211 = vmatpush1.bf16.msra.mxu0 %v2981
      %3212 = vmatprep.subr.bf16.mxu0 0
      %3213 = vmatpush1.bf16.msra.mxu0 %v2982
      %3214 = vmatprep.subr.bf16.mxu0 0
      %3215 = vmatpush1.bf16.msra.mxu0 0
      %3216 = vmatprep.subr.bf16.mxu0 0
      %3217 = vmatpush1.bf16.msra.mxu0 0
      %3218 = vmatprep.subr.bf16.mxu0 0
      %3219 = vmatpush1.bf16.msra.mxu0 0
      %3220 = vmatprep.subr.bf16.mxu0 0
      %3221 = vmatpush1.bf16.msra.mxu0 0
      %3222 = vmatprep.subr.bf16.mxu0 0
      %3223 = vmatpush1.bf16.msra.mxu0 0
      %3224 = vmatprep.subr.bf16.mxu0 0
      %3225 = vmatpush1.bf16.msra.mxu0 0
      %3226 = vmatprep.subr.bf16.mxu0 0
      %3227 = vmatpush1.bf16.msra.mxu0 0
      %3228 = vmatprep.subr.bf16.mxu0 0
      %3229 = vmatpush1.bf16.msra.mxu0 0
      %3230 = vmatprep.subr.bf16.mxu0 0
      %3231 = vmatpush1.bf16.msra.mxu0 0
      %3232 = vmatprep.subr.bf16.mxu0 0
      %3233 = vmatpush1.bf16.msra.mxu0 0
      %3234 = vmatprep.subr.bf16.mxu0 0
      %3235 = vmatpush1.bf16.msra.mxu0 0
      %3236 = vmatprep.subr.bf16.mxu0 0
      %3237 = vmatpush1.bf16.msra.mxu0 0
      %3238 = vmatprep.subr.bf16.mxu0 0
      %3239 = vmatpush1.bf16.msra.mxu0 0
      %3240 = vmatprep.subr.bf16.mxu0 0
      %3241 = vmatpush1.bf16.msra.mxu0 0
      %3242 = vmatprep.mubr.bf16.mxu0 0
      %3243 = vmatmul.mubr.bf16.gmra.mrb[0].mxu0 %v3002
      %v3244 = vpop.f32.mrb[0].mxu0
      %v3245 = vadd.f32 %v3084, %v3244
      %v3246 = vpop.f32.mrb[0].mxu0
      %v3247 = vpop.f32.mrb[0].mxu0
      %v3248 = vadd.f32 %v3087, %v3247
      %v3249 = vpop.f32.mrb[0].mxu0
      %3250 = vmatprep.mubr.bf16.mxu0 0
      %3251 = vmatmul.mubr.bf16.gmra.mrb[0].mxu0 %v3005
      %v3252 = vpop.f32.mrb[0].mxu0
      %v3253 = vadd.f32 %v3092, %v3252
      %v3254 = vpop.f32.mrb[0].mxu0
      %v3255 = vpop.f32.mrb[0].mxu0
      %v3256 = vadd.f32 %v3095, %v3255
      %v3257 = vpop.f32.mrb[0].mxu0
      %3258 = vmatprep.mubr.bf16.mxu0 0
      %3259 = vmatmul.mubr.bf16.gmra.mrb[0].mxu0 %v3008
      %v3260 = vpop.f32.mrb[0].mxu0
      %v3261 = vadd.f32 %v3100, %v3260
      %v3262 = vpop.f32.mrb[0].mxu0
      %v3263 = vpop.f32.mrb[0].mxu0
      %v3264 = vadd.f32 %v3103, %v3263
      %v3265 = vpop.f32.mrb[0].mxu0
      %3266 = vmatprep.mubr.bf16.mxu0 0
      %3267 = vmatmul.mubr.bf16.gmra.mrb[0].mxu0 %v3011
      %v3268 = vpop.f32.mrb[0].mxu0
      %v3269 = vadd.f32 %v3108, %v3268
      %v3270 = vpop.f32.mrb[0].mxu0
      %v3271 = vpop.f32.mrb[0].mxu0
      %v3272 = vadd.f32 %v3111, %v3271
      %v3273 = vpop.f32.mrb[0].mxu0
      %3274 = vmatprep.mubr.bf16.mxu0 0
      %3275 = vmatmul.mubr.bf16.gmra.mrb[0].mxu0 %v3014
      %v3276 = vpop.f32.mrb[0].mxu0
      %v3277 = vadd.f32 %v3116, %v3276
      %v3278 = vpop.f32.mrb[0].mxu0
      %v3279 = vpop.f32.mrb[0].mxu0
      %v3280 = vadd.f32 %v3119, %v3279
      %v3281 = vpop.f32.mrb[0].mxu0
      %3282 = vmatprep.mubr.bf16.mxu0 0
      %3283 = vmatmul.mubr.bf16.gmra.mrb[0].mxu0 %v3017
      %v3284 = vpop.f32.mrb[0].mxu0
      %v3285 = vadd.f32 %v3124, %v3284
      %v3286 = vpop.f32.mrb[0].mxu0
      %v3287 = vpop.f32.mrb[0].mxu0
      %v3288 = vadd.f32 %v3127, %v3287
      %v3289 = vpop.f32.mrb[0].mxu0
      %3290 = vmatprep.mubr.bf16.mxu0 0
      %3291 = vmatmul.mubr.bf16.gmra.mrb[0].mxu0 %v3020
      %v3292 = vpop.f32.mrb[0].mxu0
      %v3293 = vadd.f32 %v3132, %v3292
      %v3294 = vpop.f32.mrb[0].mxu0
      %v3295 = vpop.f32.mrb[0].mxu0
      %v3296 = vadd.f32 %v3135, %v3295
      %v3297 = vpop.f32.mrb[0].mxu0
      %3298 = vmatprep.mubr.bf16.mxu0 0
      %3299 = vmatmul.mubr.bf16.gmra.mrb[0].mxu0 %v3023
      %v3300 = vpop.f32.mrb[0].mxu0
      %v3301 = vadd.f32 %v3140, %v3300
      %v3302 = vpop.f32.mrb[0].mxu0
      %v3303 = vpop.f32.mrb[0].mxu0
      %v3304 = vadd.f32 %v3143, %v3303
      %v3305 = vpop.f32.mrb[0].mxu0
      %3306 = vmatprep.mubr.bf16.mxu0 0
      %3307 = vmatmul.mubr.bf16.gmra.mrb[0].mxu0 %v3026
      %v3308 = vpop.f32.mrb[0].mxu0
      %v3309 = vadd.f32 %v3148, %v3308
      %v3310 = vpop.f32.mrb[0].mxu0
      %v3311 = vpop.f32.mrb[0].mxu0
      %v3312 = vadd.f32 %v3151, %v3311
      %v3313 = vpop.f32.mrb[0].mxu0
      %3314 = vmatprep.mubr.bf16.mxu0 0
      %3315 = vmatmul.mubr.bf16.gmra.mrb[0].mxu0 %v3029
      %v3316 = vpop.f32.mrb[0].mxu0
      %v3317 = vadd.f32 %v3156, %v3316
      %v3318 = vpop.f32.mrb[0].mxu0
      %v3319 = vpop.f32.mrb[0].mxu0
      %v3320 = vadd.f32 %v3159, %v3319
      %v3321 = vpop.f32.mrb[0].mxu0
      %3322 = vmatprep.mubr.bf16.mxu0 0
      %3323 = vmatmul.mubr.bf16.gmra.mrb[0].mxu0 %v3032
      %v3324 = vpop.f32.mrb[0].mxu0
      %v3325 = vadd.f32 %v3164, %v3324
      %v3326 = vpop.f32.mrb[0].mxu0
      %v3327 = vpop.f32.mrb[0].mxu0
      %v3328 = vadd.f32 %v3167, %v3327
      %v3329 = vpop.f32.mrb[0].mxu0
      %3330 = vmatprep.mubr.bf16.mxu0 0
      %3331 = vmatmul.mubr.bf16.gmra.mrb[0].mxu0 %v3035
      %v3332 = vpop.f32.mrb[0].mxu0
      %v3333 = vadd.f32 %v3172, %v3332
      %v3334 = vpop.f32.mrb[0].mxu0
      %v3335 = vpop.f32.mrb[0].mxu0
      %v3336 = vadd.f32 %v3175, %v3335
      %v3337 = vpop.f32.mrb[0].mxu0
      %3338 = vmatprep.mubr.bf16.mxu0 0
      %3339 = vmatmul.mubr.bf16.gmra.mrb[0].mxu0 %v3038
      %v3340 = vpop.f32.mrb[0].mxu0
      %v3341 = vadd.f32 %v3180, %v3340
      %v3342 = vpop.f32.mrb[0].mxu0
      %v3343 = vpop.f32.mrb[0].mxu0
      %v3344 = vadd.f32 %v3183, %v3343
      %v3345 = vpop.f32.mrb[0].mxu0
      %3346 = vmatprep.mubr.bf16.mxu0 0
      %3347 = vmatmul.mubr.bf16.gmra.mrb[0].mxu0 %v3041
      %v3348 = vpop.f32.mrb[0].mxu0
      %v3349 = vadd.f32 %v3188, %v3348
      %v3350 = vpop.f32.mrb[0].mxu0
      %v3351 = vpop.f32.mrb[0].mxu0
      %v3352 = vadd.f32 %v3191, %v3351
      %v3353 = vpop.f32.mrb[0].mxu0
      %3354 = vmatprep.mubr.bf16.mxu0 0
      %3355 = vmatmul.mubr.bf16.gmra.mrb[0].mxu0 %v3044
      %v3356 = vpop.f32.mrb[0].mxu0
      %v3357 = vadd.f32 %v3196, %v3356
      %v3358 = vpop.f32.mrb[0].mxu0
      %v3359 = vpop.f32.mrb[0].mxu0
      %v3360 = vadd.f32 %v3199, %v3359
      %v3361 = vpop.f32.mrb[0].mxu0
      %3362 = vmatprep.mubr.bf16.mxu0 0
      %3363 = vmatmul.mubr.bf16.gmra.mrb[0].mxu0 %v3047
      %v3364 = vpop.f32.mrb[0].mxu0
      %v3365 = vadd.f32 %v3204, %v3364
      %v3366 = vpop.f32.mrb[0].mxu0
      %v3367 = vpop.f32.mrb[0].mxu0
      %v3368 = vadd.f32 %v3207, %v3367
      %v3369 = vpop.f32.mrb[0].mxu0
      %3370 = vdwg.mxu0
      %v3371 = vld [vmem:[%s676 + $0x1] sm:$0xff]
      %v3372 = vld [vmem:[%s676 + $0x9] sm:$0xff]
      %v3373 = vld [vmem:[%s676 + $0x19] sm:$0xff]
      %v3374 = vld [vmem:[%s676 + $0x21] sm:$0xff]
      %v3375 = vld [vmem:[%s676 + $0x31] sm:$0xff]
      %v3376 = vld [vmem:[%s676 + $0x39] sm:$0xff]
      %v3377 = vld [vmem:[%s676 + $0x49] sm:$0xff]
      %v3378 = vld [vmem:[%s676 + $0x51] sm:$0xff]
      %v3379 = vld [vmem:[%s676 + $0x61] sm:$0xff]
      %v3380 = vld [vmem:[%s676 + $0x69] sm:$0xff]
      %v3381 = vld [vmem:[%s676 + $0x79] sm:$0xff]
      %v3382 = vld [vmem:[%s676 + $0x81] sm:$0xff]
      %v3383 = vld [vmem:[%s676 + $0x91] sm:$0xff]
      %v3384 = vld [vmem:[%s676 + $0x99] sm:$0xff]
      %v3385 = vld [vmem:[%s676 + $0xa9] sm:$0xff]
      %v3386 = vld [vmem:[%s676 + $0xb1] sm:$0xff]
      %v3387 = vld [vmem:[%s676 + $0xc1] sm:$0xff]
      %v3388 = vld [vmem:[%s676 + $0xc9] sm:$0xff]
      %v3389 = vld [vmem:[%s676 + $0xd9] sm:$0xff]
      %v3390 = vld [vmem:[%s676 + $0xe1] sm:$0xff]
      %v3391 = vld [vmem:[%s676 + $0xf1] sm:$0xff]
      %v3392 = vld [vmem:[%s676 + $0xf9] sm:$0xff]
      %v3393 = vld [vmem:[%s676 + $0x109] sm:$0xff]
      %v3394 = vld [vmem:[%s676 + $0x111] sm:$0xff]
      %v3395 = vld [vmem:[%s676 + $0x121] sm:$0xff]
      %v3396 = vld [vmem:[%s676 + $0x129] sm:$0xff]
      %v3397 = vld [vmem:[%s676 + $0x139] sm:$0xff]
      %v3398 = vld [vmem:[%s676 + $0x141] sm:$0xff]
      %v3399 = vld [vmem:[%s676 + $0x151] sm:$0xff]
      %v3400 = vld [vmem:[%s676 + $0x159] sm:$0xff]
      %v3401 = vld [vmem:[%s676 + $0x169] sm:$0xff]
      %v3402 = vld [vmem:[%s676 + $0x171] sm:$0xff]
      %v3403 = vld [vmem:[%s5] sm:$0x1]
      %v3405 = vlaneseq
      %v3406 = vshrl.u32 %v3405, 7
      %v3407 = vsub.s32 0, %v3406
      %v3408 = vrot.slane %v3403, %v3407
      %v3410 = vmul.f32 %v3245, %v3408
      %v3411 = vmul.f32 %v3248, %v3408
      %v3412 = vmul.f32 %v3253, %v3408
      %v3413 = vmul.f32 %v3256, %v3408
      %v3414 = vmul.f32 %v3261, %v3408
      %v3415 = vmul.f32 %v3264, %v3408
      %v3416 = vmul.f32 %v3269, %v3408
      %v3417 = vmul.f32 %v3272, %v3408
      %v3418 = vmul.f32 %v3277, %v3408
      %v3419 = vmul.f32 %v3280, %v3408
      %v3420 = vmul.f32 %v3285, %v3408
      %v3421 = vmul.f32 %v3288, %v3408
      %v3422 = vmul.f32 %v3293, %v3408
      %v3423 = vmul.f32 %v3296, %v3408
      %v3424 = vmul.f32 %v3301, %v3408
      %v3425 = vmul.f32 %v3304, %v3408
      %v3426 = vmul.f32 %v3309, %v3408
      %v3427 = vmul.f32 %v3312, %v3408
      %v3428 = vmul.f32 %v3317, %v3408
      %v3429 = vmul.f32 %v3320, %v3408
      %v3430 = vmul.f32 %v3325, %v3408
      %v3431 = vmul.f32 %v3328, %v3408
      %v3432 = vmul.f32 %v3333, %v3408
      %v3433 = vmul.f32 %v3336, %v3408
      %v3434 = vmul.f32 %v3341, %v3408
      %v3435 = vmul.f32 %v3344, %v3408
      %v3436 = vmul.f32 %v3349, %v3408
      %v3437 = vmul.f32 %v3352, %v3408
      %v3438 = vmul.f32 %v3357, %v3408
      %v3439 = vmul.f32 %v3360, %v3408
      %v3440 = vmul.f32 %v3365, %v3408
      %v3441 = vmul.f32 %v3368, %v3408
      %v3442 = vld [vmem:[%s6] sm:$0x1]
      %v3444 = vlaneseq
      %v3445 = vshrl.u32 %v3444, 7
      %v3446 = vsub.s32 0, %v3445
      %v3447 = vrot.slane %v3442, %v3446
      %v3449 = vadd.f32 %v3410, %v3447
      %v3450 = vadd.f32 %v3411, %v3447
      %v3451 = vadd.f32 %v3412, %v3447
      %v3452 = vadd.f32 %v3413, %v3447
      %v3453 = vadd.f32 %v3414, %v3447
      %v3454 = vadd.f32 %v3415, %v3447
      %v3455 = vadd.f32 %v3416, %v3447
      %v3456 = vadd.f32 %v3417, %v3447
      %v3457 = vadd.f32 %v3418, %v3447
      %v3458 = vadd.f32 %v3419, %v3447
      %v3459 = vadd.f32 %v3420, %v3447
      %v3460 = vadd.f32 %v3421, %v3447
      %v3461 = vadd.f32 %v3422, %v3447
      %v3462 = vadd.f32 %v3423, %v3447
      %v3463 = vadd.f32 %v3424, %v3447
      %v3464 = vadd.f32 %v3425, %v3447
      %v3465 = vadd.f32 %v3426, %v3447
      %v3466 = vadd.f32 %v3427, %v3447
      %v3467 = vadd.f32 %v3428, %v3447
      %v3468 = vadd.f32 %v3429, %v3447
      %v3469 = vadd.f32 %v3430, %v3447
      %v3470 = vadd.f32 %v3431, %v3447
      %v3471 = vadd.f32 %v3432, %v3447
      %v3472 = vadd.f32 %v3433, %v3447
      %v3473 = vadd.f32 %v3434, %v3447
      %v3474 = vadd.f32 %v3435, %v3447
      %v3475 = vadd.f32 %v3436, %v3447
      %v3476 = vadd.f32 %v3437, %v3447
      %v3477 = vadd.f32 %v3438, %v3447
      %v3478 = vadd.f32 %v3439, %v3447
      %v3479 = vadd.f32 %v3440, %v3447
      %v3480 = vadd.f32 %v3441, %v3447
      %v3481 = vadd.f32 %v3449, %v3371
      %v3482 = vadd.f32 %v3450, %v3372
      %v3483 = vadd.f32 %v3451, %v3373
      %v3484 = vadd.f32 %v3452, %v3374
      %v3485 = vadd.f32 %v3453, %v3375
      %v3486 = vadd.f32 %v3454, %v3376
      %v3487 = vadd.f32 %v3455, %v3377
      %v3488 = vadd.f32 %v3456, %v3378
      %v3489 = vadd.f32 %v3457, %v3379
      %v3490 = vadd.f32 %v3458, %v3380
      %v3491 = vadd.f32 %v3459, %v3381
      %v3492 = vadd.f32 %v3460, %v3382
      %v3493 = vadd.f32 %v3461, %v3383
      %v3494 = vadd.f32 %v3462, %v3384
      %v3495 = vadd.f32 %v3463, %v3385
      %v3496 = vadd.f32 %v3464, %v3386
      %v3497 = vadd.f32 %v3465, %v3387
      %v3498 = vadd.f32 %v3466, %v3388
      %v3499 = vadd.f32 %v3467, %v3389
      %v3500 = vadd.f32 %v3468, %v3390
      %v3501 = vadd.f32 %v3469, %v3391
      %v3502 = vadd.f32 %v3470, %v3392
      %v3503 = vadd.f32 %v3471, %v3393
      %v3504 = vadd.f32 %v3472, %v3394
      %v3505 = vadd.f32 %v3473, %v3395
      %v3506 = vadd.f32 %v3474, %v3396
      %v3507 = vadd.f32 %v3475, %v3397
      %v3508 = vadd.f32 %v3476, %v3398
      %v3509 = vadd.f32 %v3477, %v3399
      %v3510 = vadd.f32 %v3478, %v3400
      %v3511 = vadd.f32 %v3479, %v3401
      %v3512 = vadd.f32 %v3480, %v3402
      %v3513 = vmax.f32 %v3481, 0.0
      %v3514 = vmax.f32 %v3482, 0.0
      %v3515 = vmax.f32 %v3483, 0.0
      %v3516 = vmax.f32 %v3484, 0.0
      %v3517 = vmax.f32 %v3485, 0.0
      %v3518 = vmax.f32 %v3486, 0.0
      %v3519 = vmax.f32 %v3487, 0.0
      %v3520 = vmax.f32 %v3488, 0.0
      %v3521 = vmax.f32 %v3489, 0.0
      %v3522 = vmax.f32 %v3490, 0.0
      %v3523 = vmax.f32 %v3491, 0.0
      %v3524 = vmax.f32 %v3492, 0.0
      %v3525 = vmax.f32 %v3493, 0.0
      %v3526 = vmax.f32 %v3494, 0.0
      %v3527 = vmax.f32 %v3495, 0.0
      %v3528 = vmax.f32 %v3496, 0.0
      %v3529 = vmax.f32 %v3497, 0.0
      %v3530 = vmax.f32 %v3498, 0.0
      %v3531 = vmax.f32 %v3499, 0.0
      %v3532 = vmax.f32 %v3500, 0.0
      %v3533 = vmax.f32 %v3501, 0.0
      %v3534 = vmax.f32 %v3502, 0.0
      %v3535 = vmax.f32 %v3503, 0.0
      %v3536 = vmax.f32 %v3504, 0.0
      %v3537 = vmax.f32 %v3505, 0.0
      %v3538 = vmax.f32 %v3506, 0.0
      %v3539 = vmax.f32 %v3507, 0.0
      %v3540 = vmax.f32 %v3508, 0.0
      %v3541 = vmax.f32 %v3509, 0.0
      %v3542 = vmax.f32 %v3510, 0.0
      %v3543 = vmax.f32 %v3511, 0.0
      %v3544 = vmax.f32 %v3512, 0.0
      %3545 = vst.msk [vmem:[%s278] sm:$0xff] %vm401, %v3513
      %3546 = vst.msk [vmem:[%s278 + $0x8] sm:$0xff] %vm401, %v3514
      %3547 = vst.msk [vmem:[%s278 + $0x10] sm:$0xff] %vm401, %v3515
      %3548 = vst.msk [vmem:[%s278 + $0x18] sm:$0xff] %vm401, %v3516
      %3549 = vst.msk [vmem:[%s278 + $0x20] sm:$0xff] %vm401, %v3517
      %3550 = vst.msk [vmem:[%s278 + $0x28] sm:$0xff] %vm401, %v3518
      %3551 = vst.msk [vmem:[%s278 + $0x30] sm:$0xff] %vm401, %v3519
      %3552 = vst.msk [vmem:[%s278 + $0x38] sm:$0xff] %vm401, %v3520
      %3553 = vst.msk [vmem:[%s278 + $0x40] sm:$0xff] %vm401, %v3521
      %3554 = vst.msk [vmem:[%s278 + $0x48] sm:$0xff] %vm401, %v3522
      %3555 = vst.msk [vmem:[%s278 + $0x50] sm:$0xff] %vm401, %v3523
      %3556 = vst.msk [vmem:[%s278 + $0x58] sm:$0xff] %vm401, %v3524
      %3557 = vst.msk [vmem:[%s278 + $0x60] sm:$0xff] %vm401, %v3525
      %3558 = vst.msk [vmem:[%s278 + $0x68] sm:$0xff] %vm401, %v3526
      %3559 = vst.msk [vmem:[%s278 + $0x70] sm:$0xff] %vm401, %v3527
      %3560 = vst.msk [vmem:[%s278 + $0x78] sm:$0xff] %vm401, %v3528
      %3561 = vst.msk [vmem:[%s278 + $0x80] sm:$0xff] %vm401, %v3529
      %3562 = vst.msk [vmem:[%s278 + $0x88] sm:$0xff] %vm401, %v3530
      %3563 = vst.msk [vmem:[%s278 + $0x90] sm:$0xff] %vm401, %v3531
      %3564 = vst.msk [vmem:[%s278 + $0x98] sm:$0xff] %vm401, %v3532
      %3565 = vst.msk [vmem:[%s278 + $0xa0] sm:$0xff] %vm401, %v3533
      %3566 = vst.msk [vmem:[%s278 + $0xa8] sm:$0xff] %vm401, %v3534
      %3567 = vst.msk [vmem:[%s278 + $0xb0] sm:$0xff] %vm401, %v3535
      %3568 = vst.msk [vmem:[%s278 + $0xb8] sm:$0xff] %vm401, %v3536
      %3569 = vst.msk [vmem:[%s278 + $0xc0] sm:$0xff] %vm401, %v3537
      %3570 = vst.msk [vmem:[%s278 + $0xc8] sm:$0xff] %vm401, %v3538
      %3571 = vst.msk [vmem:[%s278 + $0xd0] sm:$0xff] %vm401, %v3539
      %3572 = vst.msk [vmem:[%s278 + $0xd8] sm:$0xff] %vm401, %v3540
      %3573 = vst.msk [vmem:[%s278 + $0xe0] sm:$0xff] %vm401, %v3541
      %3574 = vst.msk [vmem:[%s278 + $0xe8] sm:$0xff] %vm401, %v3542
      %3575 = vst.msk [vmem:[%s278 + $0xf0] sm:$0xff] %vm401, %v3543
      %3576 = vst.msk [vmem:[%s278 + $0xf8] sm:$0xff] %vm401, %v3544
      %p3577 = scmp.lt.s32.totalorder %s18, 1
      %s3578 = scalar_select %p3577, %s18, 1
      %s3579 = smul.addr %s3578, 32
      %s3580 = smul.addr %s3579, 8
      %s3581 = scalar_lea.vmem %s7, %s3580
      // Predicated region
      $region49: #{mblock1_forward.1} parent=47 // pred_check
        %p3582 = pneg %p188
      $region50: #{mblock1_forward.1} parent=47 // pred_check_branch
        %3584 = sbr.rel (%p3582) target = $region52
      $region51: #{mblock1_forward.1} parent=47 // pred_region
        _
      $region52: #{mblock1_forward.1} parent=47 // pred_fallthru
        _
    $region48: #{mblock1_forward.1} parent=5 // pred_fallthru
      _
    %p3585 = scmp.le.s32.totalorder 2, %s13
    // Predicated region
    $region53: #{mblock1_forward.1} parent=5 // pred_check
      %p3586 = pneg %p3585
    $region54: #{mblock1_forward.1} parent=5 // pred_check_branch
      %3588 = sbr.rel (%p3586) target = $region56
    $region55: #{mblock1_forward.1} parent=5 // pred_region
      %s3589 = ssub.s32 %s13, 2
      // Predicated region
      $region57: #{mblock1_forward.1} parent=55 // pred_check
        %p3590 = pneg %p194
      $region58: #{mblock1_forward.1} parent=55 // pred_check_branch
        %3592 = sbr.rel (%p3590) target = $region60
      $region59: #{mblock1_forward.1} parent=55 // pred_region
        %p3593 = scmp.lt.s32.totalorder %s19, 1
        %s3594 = scalar_select %p3593, %s19, 1
        %s3595 = smul.addr %s3594, 32
        %s3596 = smul.addr %s3595, 8
        %s3597 = scalar_lea.vmem %s7, %s3596
      $region60: #{mblock1_forward.1} parent=55 // pred_fallthru
        _
    $region56: #{mblock1_forward.1} parent=5 // pred_fallthru
      _
  $region6: #{mblock1_forward.1} parent=0 // loop_footer
    %s17 = sadd.s32 1, %s13
  $region7: #{mblock1_forward.1} parent=0 // loop_footer_branch
    %12 = sbr.rel target = $region3
  $region8: #{mblock1_forward.1} parent=0 // loop_exit
    _

</llo_original>
